<compile_context>
chip_gen: v6e
topology: v6e:2x2x1
jax: 0.10.0
libtpu: 0.0.40
codegen_flags: <defaults>
</compile_context>

<pallas_src>
import functools
import math

import numpy as np
import jax
import jax.numpy as jnp
from jax import lax
from jax.experimental import pallas as pl
from jax.experimental.pallas import tpu as pltpu

BN_EPS = 1e-5
_LANE = 128
_MAX_TILE_ROWS = 4096            # cap on matmul M rows per grid step


def _vmem_config():
    """Generation-aware scoped-VMEM limit and per-step block budget."""
    cap = 64 * 1024 * 1024                      # conservative default (v7x per-TC)
    try:
        info = pltpu.get_tpu_info()
        cap = int(getattr(info, "vmem_capacity_bytes", cap)) or cap
    except Exception:
        pass
    # 128 MiB chips (v5e/v6e) -> 96 MiB limit / 32 MiB per-step budget;
    # 64 MiB chips (v7x)      -> 48 MiB limit / 16 MiB per-step budget.
    limit = max(32 * 1024 * 1024, min((cap * 3) // 4, 96 * 1024 * 1024))
    budget = max(8 * 1024 * 1024, limit // 3)
    return limit, budget


_VMEM_LIMIT, _VMEM_BUDGET = _vmem_config()


def _make_conv_stats_kernel(n_src, taps, th, wo, cin, cout_p):
    """Pass 1: 3x3 conv as one large-K MXU matmul + per-tile channel stats."""
    k = 9 * cin

    def kernel(*refs):
        src_refs = refs[:n_src]
        w_ref = refs[n_src]
        y_ref, sum_ref, sq_ref = refs[n_src + 1:n_src + 4]
        col_ref = refs[n_src + 4]                # VMEM im2col scratch

        # Pack the 9 taps along the contraction axis.  Each tap is a
        # contiguous W-window sliced directly off its (already VMEM-resident)
        # source ref; all offsets are static.
        for src_idx, col0, j in taps:            # static 9-tap unroll
            col_ref[:, :, j * cin:(j + 1) * cin] = (
                src_refs[src_idx][0, :, col0:col0 + wo, :])

        # Single MXU contraction: (TH*Wo, 9*Cin) @ (9*Cin, Cout_p) -> f32.
        acc = jnp.dot(col_ref[...].reshape(th * wo, k), w_ref[...],
                      preferred_element_type=jnp.float32)

        y_ref[...] = acc.reshape(1, th, wo, cout_p).astype(y_ref.dtype)

        # Per-(image, h-tile) partial statistics (no revisits, no init phase).
        sum_ref[...] = jnp.sum(acc, axis=0).reshape(1, 1, 1, cout_p)
        sq_ref[...] = jnp.sum(acc * acc, axis=0).reshape(1, 1, 1, cout_p)

    return kernel


def _bn_relu_kernel(y_ref, scale_ref, shift_ref, o_ref):
    # y: (1, q, Wo, Cout_p) bf16; scale/shift: (1, Cout_p) f32.
    y = y_ref[...].astype(jnp.float32)
    s = scale_ref[...].reshape(1, 1, 1, -1)
    b = shift_ref[...].reshape(1, 1, 1, -1)
    o_ref[...] = jnp.maximum(y * s + b, 0.0)


def _pick_tile_h(ho, wo, cin, cout_p, src_widths, budget):
    """Largest h-tile whose double-buffered working set fits the VMEM budget."""
    k = 9 * cin

    def cost(th):
        rows = th * wo
        src_b = sum(2 * th * w * cin * 2 for w in src_widths)   # bf16, 2 bufs
        y_b = 2 * rows * cout_p * 2                             # bf16 out, 2 bufs
        col_b = rows * max(k, _LANE) * 2                        # im2col scratch
        acc_b = rows * cout_p * 4                               # f32 matmul result
        w_b = 2 * k * cout_p * 2
        return src_b + y_b + col_b + acc_b + w_b + 4 * cout_p * 8

    best = 1
    for th in range(1, ho + 1):
        if th > 1 and th * wo > _MAX_TILE_ROWS:
            break
        if cost(th) > budget:
            break
        best = th
    # Prefer matmul M = TH*Wo to be sublane-aligned (multiple of 8).
    g = 8 // math.gcd(wo, 8)
    if best > g and best % g:
        best -= best % g
    return max(best, 1)


def _pick_tile_h2(ho_pad, wo, cout_p, budget):
    """Pass-2 row tile: largest divisor of Ho_pad that fits the budget."""
    best = 1
    for q in range(1, ho_pad + 1):
        if ho_pad % q:
            continue
        b = 2 * q * wo * cout_p * (2 + 4) + 4 * cout_p * 4
        if b <= budget:
            best = q
    return best


@functools.partial(jax.jit, static_argnames=("stride",))
def basic_conv_forward(x, weight, gamma, beta, *, stride):
    """x: (N, Cin, H, W), weight: (Cout, Cin, 3, 3), gamma/beta: (Cout,)."""
    N, Cin, H, W = x.shape
    Cout = weight.shape[0]
    Ho = (H + 2 - 3) // stride + 1
    Wo = (W + 2 - 3) // stride + 1
    Cout_p = ((Cout + _LANE - 1) // _LANE) * _LANE
    K = 9 * Cin

    # NHWC + zero padding; bf16 feeds the MXU (f32 accumulation in-kernel).
    x_nhwc = jnp.transpose(x, (0, 2, 3, 1)).astype(jnp.bfloat16)
    xp = jnp.pad(x_nhwc, ((0, 0), (1, 1), (1, 1), (0, 0)))

    # Tap sources: one (N, Ho, Wsrc, Cin) array per (kh, kw % stride) so the
    # kernel only needs contiguous W-slices (no HBM im2col materialization).
    sources, src_index, taps = [], {}, []
    for kh in range(3):
        for kw in range(3):
            p = kw % stride
            key = (kh, p)
            if key not in src_index:
                src_index[key] = len(sources)
                sources.append(
                    xp[:, kh:kh + stride * (Ho - 1) + 1:stride, p::stride, :])
            taps.append((src_index[key], kw // stride, kh * 3 + kw))
    taps = tuple(taps)
    src_widths = [int(s.shape[2]) for s in sources]

    # Weight as (9*Cin, Cout_p) bf16: row (kh*3+kw)*Cin + cin matches the
    # in-kernel tap packing order.  Zero-padded output channels give y=0,
    # scale=0, shift=0 (no NaN); they are sliced off at the end.
    w_t = jnp.transpose(weight, (2, 3, 1, 0)).reshape(K, Cout).astype(jnp.bfloat16)
    w_t = jnp.pad(w_t, ((0, 0), (0, Cout_p - Cout)))

    TH = _pick_tile_h(Ho, Wo, Cin, Cout_p, src_widths, _VMEM_BUDGET)
    n_ht = -(-Ho // TH)
    Ho_pad = n_ht * TH
    if Ho_pad != Ho:
        # Zero rows convolve to exactly 0, contributing nothing to sum/sumsq.
        sources = [jnp.pad(s, ((0, 0), (0, Ho_pad - Ho), (0, 0), (0, 0)))
                   for s in sources]

    grid1 = (N, n_ht)
    in_specs = [
        pl.BlockSpec((1, TH, w_src, Cin), lambda n, ht: (n, ht, 0, 0))
        for w_src in src_widths
    ]
    in_specs.append(pl.BlockSpec((K, Cout_p), lambda n, ht: (0, 0)))

    flops1 = 2 * N * Ho_pad * Wo * K * Cout_p
    bytes1 = (sum(int(s.size) for s in sources) * 2 + int(w_t.size) * 2
              + N * Ho_pad * Wo * Cout_p * 2 + 2 * N * n_ht * Cout_p * 4)

    y, ch_sum, ch_sq = pl.pallas_call(
        _make_conv_stats_kernel(len(sources), taps, TH, Wo, Cin, Cout_p),
        out_shape=(
            jax.ShapeDtypeStruct((N, Ho_pad, Wo, Cout_p), jnp.bfloat16),
            jax.ShapeDtypeStruct((N, n_ht, 1, Cout_p), jnp.float32),
            jax.ShapeDtypeStruct((N, n_ht, 1, Cout_p), jnp.float32),
        ),
        grid=grid1,
        in_specs=in_specs,
        out_specs=(
            pl.BlockSpec((1, TH, Wo, Cout_p), lambda n, ht: (n, ht, 0, 0)),
            pl.BlockSpec((1, 1, 1, Cout_p), lambda n, ht: (n, ht, 0, 0)),
            pl.BlockSpec((1, 1, 1, Cout_p), lambda n, ht: (n, ht, 0, 0)),
        ),
        scratch_shapes=[pltpu.VMEM((TH, Wo, K), jnp.bfloat16)],
        compiler_params=pltpu.CompilerParams(
            dimension_semantics=("parallel", "parallel"),
            vmem_limit_bytes=_VMEM_LIMIT),
        cost_estimate=pl.CostEstimate(flops=flops1, transcendentals=0,
                                      bytes_accessed=int(bytes1)),
    )(*sources, w_t)

    # Fold BatchNorm (train-mode batch stats, biased variance) into one
    # per-channel scale/shift.  Padded rows contributed exactly 0, so dividing
    # by the TRUE element count keeps the statistics exact.
    # TODO(synk): E[y^2]-mean^2 in f32 can lose precision when |mean| >> std.
    count = N * Ho * Wo
    mean = jnp.sum(ch_sum, axis=(0, 1, 2)) / count
    ex2 = jnp.sum(ch_sq, axis=(0, 1, 2)) / count
    var = jnp.maximum(ex2 - mean * mean, 0.0)
    gamma_p = jnp.pad(gamma.astype(jnp.float32), (0, Cout_p - Cout))
    beta_p = jnp.pad(beta.astype(jnp.float32), (0, Cout_p - Cout))
    scale = (gamma_p * lax.rsqrt(var + BN_EPS)).reshape(1, Cout_p)
    shift = (beta_p - mean * scale[0]).reshape(1, Cout_p)

    # Pass 2: elementwise y*scale+shift -> ReLU with its own (larger) tiling.
    TQ = _pick_tile_h2(Ho_pad, Wo, Cout_p, _VMEM_BUDGET)
    grid2 = (N, Ho_pad // TQ)
    flops2 = 2 * N * Ho_pad * Wo * Cout_p
    bytes2 = N * Ho_pad * Wo * Cout_p * (2 + 4)

    out_p = pl.pallas_call(
        _bn_relu_kernel,
        out_shape=jax.ShapeDtypeStruct((N, Ho_pad, Wo, Cout_p), jnp.float32),
        grid=grid2,
        in_specs=[
            pl.BlockSpec((1, TQ, Wo, Cout_p), lambda n, hq: (n, hq, 0, 0)),
            pl.BlockSpec((1, Cout_p), lambda n, hq: (0, 0)),
            pl.BlockSpec((1, Cout_p), lambda n, hq: (0, 0)),
        ],
        out_specs=pl.BlockSpec((1, TQ, Wo, Cout_p), lambda n, hq: (n, hq, 0, 0)),
        compiler_params=pltpu.CompilerParams(
            dimension_semantics=("parallel", "parallel"),
            vmem_limit_bytes=_VMEM_LIMIT),
        cost_estimate=pl.CostEstimate(flops=flops2, transcendentals=0,
                                      bytes_accessed=int(bytes2)),
    )(y, scale, shift)

    # Back to the module's NCHW / float32 contract (single trailing XLA op).
    # TODO(synk): BatchNorm2d running_mean/running_var buffer updates are not
    # modeled; forward always uses batch statistics (train() behaviour).
    out = jnp.transpose(out_p[:, :Ho, :, :Cout], (0, 3, 1, 2))
    return out


def _reference(x, weight, gamma, beta, stride):
    # Pure-JAX reference: conv + train-mode BN + ReLU (f32).
    y = jax.lax.conv_general_dilated(
        x.astype(jnp.float32), weight.astype(jnp.float32),
        window_strides=(stride, stride), padding=((1, 1), (1, 1)),
        dimension_numbers=("NCHW", "OIHW", "NCHW"),
        precision=jax.lax.Precision.HIGHEST)
    mean = jnp.mean(y, axis=(0, 2, 3), keepdims=True)
    var = jnp.mean((y - mean) ** 2, axis=(0, 2, 3), keepdims=True)
    y = (y - mean) * jax.lax.rsqrt(var + BN_EPS)
    y = y * gamma.reshape(1, -1, 1, 1) + beta.reshape(1, -1, 1, 1)
    return jnp.maximum(y, 0.0)


if __name__ == "__main__":
    key = jax.random.PRNGKey(0)
    kx, kwt = jax.random.split(key)

    N, Cin, H, W = 2, 4, 16, 16
    Cout = 8

    x = jax.random.normal(kx, (N, Cin, H, W), dtype=jnp.float32)
    weight = jax.random.normal(kwt, (Cout, Cin, 3, 3), dtype=jnp.float32) * 0.1
    gamma = jnp.ones((Cout,), dtype=jnp.float32)    # BatchNorm2d weight default
    beta = jnp.zeros((Cout,), dtype=jnp.float32)    # BatchNorm2d bias default

    for stride in (1, 2):
        out = jax.block_until_ready(
            basic_conv_forward(x, weight, gamma, beta, stride=stride))
        ref = jax.block_until_ready(_reference(x, weight, gamma, beta, stride))
        assert out.shape == ref.shape, (out.shape, ref.shape)
        err = float(np.max(np.abs(np.asarray(out) - np.asarray(ref))))
        # bf16 MXU operands + bf16 conv intermediate vs f32 reference.
        assert np.allclose(np.asarray(out), np.asarray(ref),
                           atol=3e-2, rtol=3e-2), f"stride={stride} max|err|={err}"

    print("KERNEL_OK")
</pallas_src>

<mosaic_0001>
module attributes {stable_mosaic.version = 11 : i64} {
  func.func @kernel(%arg0: i32, %arg1: i32, %arg2: memref<1x16x18x4xbf16, #tpu.memory_space<vmem>>, %arg3: memref<1x16x18x4xbf16, #tpu.memory_space<vmem>>, %arg4: memref<1x16x18x4xbf16, #tpu.memory_space<vmem>>, %arg5: memref<36x128xbf16, #tpu.memory_space<vmem>>, %arg6: memref<1x16x16x128xbf16, #tpu.memory_space<vmem>>, %arg7: memref<1x1x1x128xf32, #tpu.memory_space<vmem>>, %arg8: memref<1x1x1x128xf32, #tpu.memory_space<vmem>>, %arg9: memref<16x16x36xbf16, #tpu.memory_space<vmem>>) attributes {dimension_semantics = [#tpu.dimension_semantics<parallel>, #tpu.dimension_semantics<parallel>], iteration_bounds = array<i64: 2, 1>, scalar_prefetch = 0 : i64, scratch_operands = 1 : i64, tpu.core_type = #tpu.core_type<tc>, window_params = [{transform_indices = @transform_0, window_bounds = array<i64: 1, 16, 18, 4>}, {transform_indices = @transform_1, window_bounds = array<i64: 1, 16, 18, 4>}, {transform_indices = @transform_2, window_bounds = array<i64: 1, 16, 18, 4>}, {pipeline_mode = #tpu.pipeline_mode<synchronous>, transform_indices = @transform_3, window_bounds = array<i64: 36, 128>}, {transform_indices = @transform_4, window_bounds = array<i64: 1, 16, 16, 128>}, {transform_indices = @transform_5, window_bounds = array<i64: 1, 1, 1, 128>}, {transform_indices = @transform_6, window_bounds = array<i64: 1, 1, 1, 128>}]} {
    %c0 = arith.constant 0 : index
    %c0_0 = arith.constant 0 : index
    %c0_1 = arith.constant 0 : index
    %c0_2 = arith.constant 0 : index
    %0 = vector.load %arg2[%c0, %c0_0, %c0_1, %c0_2] : memref<1x16x18x4xbf16, #tpu.memory_space<vmem>>, vector<1x16x16x4xbf16>
    %1 = vector.shape_cast %0 : vector<1x16x16x4xbf16> to vector<16x16x4xbf16>
    %c0_3 = arith.constant 0 : index
    %c0_4 = arith.constant 0 : index
    %c0_5 = arith.constant 0 : index
    %2 = vector.load %arg9[%c0_3, %c0_4, %c0_5] : memref<16x16x36xbf16, #tpu.memory_space<vmem>>, vector<16x16x4xbf16>
    tpu.vector_store %arg9[%c0_3, %c0_4, %c0_5], %1 {strides = array<i32>} : memref<16x16x36xbf16, #tpu.memory_space<vmem>>, vector<16x16x4xbf16>,
    %c0_6 = arith.constant 0 : index
    %c0_7 = arith.constant 0 : index
    %c1 = arith.constant 1 : index
    %c0_8 = arith.constant 0 : index
    %3 = vector.load %arg2[%c0_6, %c0_7, %c1, %c0_8] : memref<1x16x18x4xbf16, #tpu.memory_space<vmem>>, vector<1x16x16x4xbf16>
    %4 = vector.shape_cast %3 : vector<1x16x16x4xbf16> to vector<16x16x4xbf16>
    %c0_9 = arith.constant 0 : index
    %c0_10 = arith.constant 0 : index
    %c4 = arith.constant 4 : index
    %5 = vector.load %arg9[%c0_9, %c0_10, %c4] : memref<16x16x36xbf16, #tpu.memory_space<vmem>>, vector<16x16x4xbf16>
    tpu.vector_store %arg9[%c0_9, %c0_10, %c4], %4 {strides = array<i32>} : memref<16x16x36xbf16, #tpu.memory_space<vmem>>, vector<16x16x4xbf16>,
    %c0_11 = arith.constant 0 : index
    %c0_12 = arith.constant 0 : index
    %c2 = arith.constant 2 : index
    %c0_13 = arith.constant 0 : index
    %6 = vector.load %arg2[%c0_11, %c0_12, %c2, %c0_13] : memref<1x16x18x4xbf16, #tpu.memory_space<vmem>>, vector<1x16x16x4xbf16>
    %7 = vector.shape_cast %6 : vector<1x16x16x4xbf16> to vector<16x16x4xbf16>
    %c0_14 = arith.constant 0 : index
    %c0_15 = arith.constant 0 : index
    %c8 = arith.constant 8 : index
    %8 = vector.load %arg9[%c0_14, %c0_15, %c8] : memref<16x16x36xbf16, #tpu.memory_space<vmem>>, vector<16x16x4xbf16>
    tpu.vector_store %arg9[%c0_14, %c0_15, %c8], %7 {strides = array<i32>} : memref<16x16x36xbf16, #tpu.memory_space<vmem>>, vector<16x16x4xbf16>,
    %c0_16 = arith.constant 0 : index
    %c0_17 = arith.constant 0 : index
    %c0_18 = arith.constant 0 : index
    %c0_19 = arith.constant 0 : index
    %9 = vector.load %arg3[%c0_16, %c0_17, %c0_18, %c0_19] : memref<1x16x18x4xbf16, #tpu.memory_space<vmem>>, vector<1x16x16x4xbf16>
    %10 = vector.shape_cast %9 : vector<1x16x16x4xbf16> to vector<16x16x4xbf16>
    %c0_20 = arith.constant 0 : index
    %c0_21 = arith.constant 0 : index
    %c12 = arith.constant 12 : index
    %11 = vector.load %arg9[%c0_20, %c0_21, %c12] : memref<16x16x36xbf16, #tpu.memory_space<vmem>>, vector<16x16x4xbf16>
    tpu.vector_store %arg9[%c0_20, %c0_21, %c12], %10 {strides = array<i32>} : memref<16x16x36xbf16, #tpu.memory_space<vmem>>, vector<16x16x4xbf16>,
    %c0_22 = arith.constant 0 : index
    %c0_23 = arith.constant 0 : index
    %c1_24 = arith.constant 1 : index
    %c0_25 = arith.constant 0 : index
    %12 = vector.load %arg3[%c0_22, %c0_23, %c1_24, %c0_25] : memref<1x16x18x4xbf16, #tpu.memory_space<vmem>>, vector<1x16x16x4xbf16>
    %13 = vector.shape_cast %12 : vector<1x16x16x4xbf16> to vector<16x16x4xbf16>
    %c0_26 = arith.constant 0 : index
    %c0_27 = arith.constant 0 : index
    %c16 = arith.constant 16 : index
    %14 = vector.load %arg9[%c0_26, %c0_27, %c16] : memref<16x16x36xbf16, #tpu.memory_space<vmem>>, vector<16x16x4xbf16>
    tpu.vector_store %arg9[%c0_26, %c0_27, %c16], %13 {strides = array<i32>} : memref<16x16x36xbf16, #tpu.memory_space<vmem>>, vector<16x16x4xbf16>,
    %c0_28 = arith.constant 0 : index
    %c0_29 = arith.constant 0 : index
    %c2_30 = arith.constant 2 : index
    %c0_31 = arith.constant 0 : index
    %15 = vector.load %arg3[%c0_28, %c0_29, %c2_30, %c0_31] : memref<1x16x18x4xbf16, #tpu.memory_space<vmem>>, vector<1x16x16x4xbf16>
    %16 = vector.shape_cast %15 : vector<1x16x16x4xbf16> to vector<16x16x4xbf16>
    %c0_32 = arith.constant 0 : index
    %c0_33 = arith.constant 0 : index
    %c20 = arith.constant 20 : index
    %17 = vector.load %arg9[%c0_32, %c0_33, %c20] : memref<16x16x36xbf16, #tpu.memory_space<vmem>>, vector<16x16x4xbf16>
    tpu.vector_store %arg9[%c0_32, %c0_33, %c20], %16 {strides = array<i32>} : memref<16x16x36xbf16, #tpu.memory_space<vmem>>, vector<16x16x4xbf16>,
    %c0_34 = arith.constant 0 : index
    %c0_35 = arith.constant 0 : index
    %c0_36 = arith.constant 0 : index
    %c0_37 = arith.constant 0 : index
    %18 = vector.load %arg4[%c0_34, %c0_35, %c0_36, %c0_37] : memref<1x16x18x4xbf16, #tpu.memory_space<vmem>>, vector<1x16x16x4xbf16>
    %19 = vector.shape_cast %18 : vector<1x16x16x4xbf16> to vector<16x16x4xbf16>
    %c0_38 = arith.constant 0 : index
    %c0_39 = arith.constant 0 : index
    %c24 = arith.constant 24 : index
    %20 = vector.load %arg9[%c0_38, %c0_39, %c24] : memref<16x16x36xbf16, #tpu.memory_space<vmem>>, vector<16x16x4xbf16>
    tpu.vector_store %arg9[%c0_38, %c0_39, %c24], %19 {strides = array<i32>} : memref<16x16x36xbf16, #tpu.memory_space<vmem>>, vector<16x16x4xbf16>,
    %c0_40 = arith.constant 0 : index
    %c0_41 = arith.constant 0 : index
    %c1_42 = arith.constant 1 : index
    %c0_43 = arith.constant 0 : index
    %21 = vector.load %arg4[%c0_40, %c0_41, %c1_42, %c0_43] : memref<1x16x18x4xbf16, #tpu.memory_space<vmem>>, vector<1x16x16x4xbf16>
    %22 = vector.shape_cast %21 : vector<1x16x16x4xbf16> to vector<16x16x4xbf16>
    %c0_44 = arith.constant 0 : index
    %c0_45 = arith.constant 0 : index
    %c28 = arith.constant 28 : index
    %23 = vector.load %arg9[%c0_44, %c0_45, %c28] : memref<16x16x36xbf16, #tpu.memory_space<vmem>>, vector<16x16x4xbf16>
    tpu.vector_store %arg9[%c0_44, %c0_45, %c28], %22 {strides = array<i32>} : memref<16x16x36xbf16, #tpu.memory_space<vmem>>, vector<16x16x4xbf16>,
    %c0_46 = arith.constant 0 : index
    %c0_47 = arith.constant 0 : index
    %c2_48 = arith.constant 2 : index
    %c0_49 = arith.constant 0 : index
    %24 = vector.load %arg4[%c0_46, %c0_47, %c2_48, %c0_49] : memref<1x16x18x4xbf16, #tpu.memory_space<vmem>>, vector<1x16x16x4xbf16>
    %25 = vector.shape_cast %24 : vector<1x16x16x4xbf16> to vector<16x16x4xbf16>
    %c0_50 = arith.constant 0 : index
    %c0_51 = arith.constant 0 : index
    %c32 = arith.constant 32 : index
    %26 = vector.load %arg9[%c0_50, %c0_51, %c32] : memref<16x16x36xbf16, #tpu.memory_space<vmem>>, vector<16x16x4xbf16>
    tpu.vector_store %arg9[%c0_50, %c0_51, %c32], %25 {strides = array<i32>} : memref<16x16x36xbf16, #tpu.memory_space<vmem>>, vector<16x16x4xbf16>,
    %c0_52 = arith.constant 0 : index
    %c0_53 = arith.constant 0 : index
    %c0_54 = arith.constant 0 : index
    %27 = vector.load %arg9[%c0_52, %c0_53, %c0_54] : memref<16x16x36xbf16, #tpu.memory_space<vmem>>, vector<16x16x36xbf16>
    %28 = vector.shape_cast %27 : vector<16x16x36xbf16> to vector<256x36xbf16>
    %c0_55 = arith.constant 0 : index
    %c0_56 = arith.constant 0 : index
    %29 = vector.load %arg5[%c0_55, %c0_56] : memref<36x128xbf16, #tpu.memory_space<vmem>>, vector<36x128xbf16>
    %cst = arith.constant dense<0.000000e+00> : vector<256x128xf32>
    %30 = tpu.matmul %28, %29, %cst {dimension_numbers = #tpu.dot_dimension_numbers<[1], [0], [0], [1], [0, 0, 1, 1], [], []>} : vector<256x36xbf16>, vector<36x128xbf16>, vector<256x128xf32> -> vector<256x128xf32>
    %31 = vector.shape_cast %30 : vector<256x128xf32> to vector<1x16x16x128xf32>
    %32 = arith.truncf %31 : vector<1x16x16x128xf32> to vector<1x16x16x128xbf16>
    %c0_57 = arith.constant 0 : index
    %c0_58 = arith.constant 0 : index
    %c0_59 = arith.constant 0 : index
    %c0_60 = arith.constant 0 : index
    %33 = vector.load %arg6[%c0_57, %c0_58, %c0_59, %c0_60] : memref<1x16x16x128xbf16, #tpu.memory_space<vmem>>, vector<1x16x16x128xbf16>
    tpu.vector_store %arg6[%c0_57, %c0_58, %c0_59, %c0_60], %32 {strides = array<i32>} : memref<1x16x16x128xbf16, #tpu.memory_space<vmem>>, vector<1x16x16x128xbf16>,
    %cst_61 = arith.constant dense<0.000000e+00> : vector<128xf32>
    %34 = vector.multi_reduction <add>, %30, %cst_61 [0] : vector<256x128xf32> to vector<128xf32>
    %35 = vector.shape_cast %34 : vector<128xf32> to vector<1x1x1x128xf32>
    %c0_62 = arith.constant 0 : index
    %c0_63 = arith.constant 0 : index
    %c0_64 = arith.constant 0 : index
    %c0_65 = arith.constant 0 : index
    %36 = vector.load %arg7[%c0_62, %c0_63, %c0_64, %c0_65] : memref<1x1x1x128xf32, #tpu.memory_space<vmem>>, vector<1x1x1x128xf32>
    tpu.vector_store %arg7[%c0_62, %c0_63, %c0_64, %c0_65], %35 {strides = array<i32>} : memref<1x1x1x128xf32, #tpu.memory_space<vmem>>, vector<1x1x1x128xf32>,
    %37 = arith.mulf %30, %30 : vector<256x128xf32>
    %cst_66 = arith.constant dense<0.000000e+00> : vector<128xf32>
    %38 = vector.multi_reduction <add>, %37, %cst_66 [0] : vector<256x128xf32> to vector<128xf32>
    %39 = vector.shape_cast %38 : vector<128xf32> to vector<1x1x1x128xf32>
    %c0_67 = arith.constant 0 : index
    %c0_68 = arith.constant 0 : index
    %c0_69 = arith.constant 0 : index
    %c0_70 = arith.constant 0 : index
    %40 = vector.load %arg8[%c0_67, %c0_68, %c0_69, %c0_70] : memref<1x1x1x128xf32, #tpu.memory_space<vmem>>, vector<1x1x1x128xf32>
    tpu.vector_store %arg8[%c0_67, %c0_68, %c0_69, %c0_70], %39 {strides = array<i32>} : memref<1x1x1x128xf32, #tpu.memory_space<vmem>>, vector<1x1x1x128xf32>,
    return
  }
  func.func @transform_0(%arg0: i32, %arg1: i32) -> (i32, i32, i32, i32) {
    %c0_i32 = arith.constant 0 : i32
    %c0_i32_0 = arith.constant 0 : i32
    %c0_i32_1 = arith.constant 0 : i32
    return %arg0, %arg1, %c0_i32, %c0_i32_0 : i32, i32, i32, i32
  }
  func.func @transform_1(%arg0: i32, %arg1: i32) -> (i32, i32, i32, i32) {
    %c0_i32 = arith.constant 0 : i32
    %c0_i32_0 = arith.constant 0 : i32
    %c0_i32_1 = arith.constant 0 : i32
    return %arg0, %arg1, %c0_i32, %c0_i32_0 : i32, i32, i32, i32
  }
  func.func @transform_2(%arg0: i32, %arg1: i32) -> (i32, i32, i32, i32) {
    %c0_i32 = arith.constant 0 : i32
    %c0_i32_0 = arith.constant 0 : i32
    %c0_i32_1 = arith.constant 0 : i32
    return %arg0, %arg1, %c0_i32, %c0_i32_0 : i32, i32, i32, i32
  }
  func.func @transform_3(%arg0: i32, %arg1: i32) -> (i32, i32) {
    %c0_i32 = arith.constant 0 : i32
    %c0_i32_0 = arith.constant 0 : i32
    %c0_i32_1 = arith.constant 0 : i32
    return %c0_i32, %c0_i32_0 : i32, i32
  }
  func.func @transform_4(%arg0: i32, %arg1: i32) -> (i32, i32, i32, i32) {
    %c0_i32 = arith.constant 0 : i32
    %c0_i32_0 = arith.constant 0 : i32
    %c0_i32_1 = arith.constant 0 : i32
    return %arg0, %arg1, %c0_i32, %c0_i32_0 : i32, i32, i32, i32
  }
  func.func @transform_5(%arg0: i32, %arg1: i32) -> (i32, i32, i32, i32) {
    %c0_i32 = arith.constant 0 : i32
    %c0_i32_0 = arith.constant 0 : i32
    %c0_i32_1 = arith.constant 0 : i32
    return %arg0, %arg1, %c0_i32, %c0_i32_0 : i32, i32, i32, i32
  }
  func.func @transform_6(%arg0: i32, %arg1: i32) -> (i32, i32, i32, i32) {
    %c0_i32 = arith.constant 0 : i32
    %c0_i32_0 = arith.constant 0 : i32
    %c0_i32_1 = arith.constant 0 : i32
    return %arg0, %arg1, %c0_i32, %c0_i32_0 : i32, i32, i32, i32
  }
}

module attributes {stable_mosaic.version = 11 : i64} {
  func.func @_bn_relu_kernel(%arg0: i32, %arg1: i32, %arg2: memref<1x16x16x128xbf16, #tpu.memory_space<vmem>>, %arg3: memref<1x128xf32, #tpu.memory_space<vmem>>, %arg4: memref<1x128xf32, #tpu.memory_space<vmem>>, %arg5: memref<1x16x16x128xf32, #tpu.memory_space<vmem>>) attributes {dimension_semantics = [#tpu.dimension_semantics<parallel>, #tpu.dimension_semantics<parallel>], iteration_bounds = array<i64: 2, 1>, scalar_prefetch = 0 : i64, scratch_operands = 0 : i64, tpu.core_type = #tpu.core_type<tc>, window_params = [{transform_indices = @transform_0, window_bounds = array<i64: 1, 16, 16, 128>}, {pipeline_mode = #tpu.pipeline_mode<synchronous>, transform_indices = @transform_1, window_bounds = array<i64: 1, 128>}, {pipeline_mode = #tpu.pipeline_mode<synchronous>, transform_indices = @transform_2, window_bounds = array<i64: 1, 128>}, {transform_indices = @transform_3, window_bounds = array<i64: 1, 16, 16, 128>}]} {
    %c0 = arith.constant 0 : index
    %c0_0 = arith.constant 0 : index
    %c0_1 = arith.constant 0 : index
    %c0_2 = arith.constant 0 : index
    %0 = vector.load %arg2[%c0, %c0_0, %c0_1, %c0_2] : memref<1x16x16x128xbf16, #tpu.memory_space<vmem>>, vector<1x16x16x128xbf16>
    %1 = arith.extf %0 : vector<1x16x16x128xbf16> to vector<1x16x16x128xf32>
    %c0_3 = arith.constant 0 : index
    %c0_4 = arith.constant 0 : index
    %2 = vector.load %arg3[%c0_3, %c0_4] : memref<1x128xf32, #tpu.memory_space<vmem>>, vector<1x128xf32>
    %3 = vector.shape_cast %2 : vector<1x128xf32> to vector<1x1x1x128xf32>
    %c0_5 = arith.constant 0 : index
    %c0_6 = arith.constant 0 : index
    %4 = vector.load %arg4[%c0_5, %c0_6] : memref<1x128xf32, #tpu.memory_space<vmem>>, vector<1x128xf32>
    %5 = vector.shape_cast %4 : vector<1x128xf32> to vector<1x1x1x128xf32>
    %6 = vector.broadcast %3 : vector<1x1x1x128xf32> to vector<1x16x16x128xf32>
    %7 = arith.mulf %1, %6 : vector<1x16x16x128xf32>
    %8 = vector.broadcast %5 : vector<1x1x1x128xf32> to vector<1x16x16x128xf32>
    %9 = arith.addf %7, %8 : vector<1x16x16x128xf32>
    %cst = arith.constant 0.000000e+00 : f32
    %10 = vector.broadcast %cst : f32 to vector<1x16x16x128xf32>
    %11 = arith.maximumf %9, %10 : vector<1x16x16x128xf32>
    %c0_7 = arith.constant 0 : index
    %c0_8 = arith.constant 0 : index
    %c0_9 = arith.constant 0 : index
    %c0_10 = arith.constant 0 : index
    %12 = vector.load %arg5[%c0_7, %c0_8, %c0_9, %c0_10] : memref<1x16x16x128xf32, #tpu.memory_space<vmem>>, vector<1x16x16x128xf32>
    tpu.vector_store %arg5[%c0_7, %c0_8, %c0_9, %c0_10], %11 {strides = array<i32>} : memref<1x16x16x128xf32, #tpu.memory_space<vmem>>, vector<1x16x16x128xf32>,
    return
  }
  func.func @transform_0(%arg0: i32, %arg1: i32) -> (i32, i32, i32, i32) {
    %c0_i32 = arith.constant 0 : i32
    %c0_i32_0 = arith.constant 0 : i32
    %c0_i32_1 = arith.constant 0 : i32
    return %arg0, %arg1, %c0_i32, %c0_i32_0 : i32, i32, i32, i32
  }
  func.func @transform_1(%arg0: i32, %arg1: i32) -> (i32, i32) {
    %c0_i32 = arith.constant 0 : i32
    %c0_i32_0 = arith.constant 0 : i32
    %c0_i32_1 = arith.constant 0 : i32
    return %c0_i32, %c0_i32_0 : i32, i32
  }
  func.func @transform_2(%arg0: i32, %arg1: i32) -> (i32, i32) {
    %c0_i32 = arith.constant 0 : i32
    %c0_i32_0 = arith.constant 0 : i32
    %c0_i32_1 = arith.constant 0 : i32
    return %c0_i32, %c0_i32_0 : i32, i32
  }
  func.func @transform_3(%arg0: i32, %arg1: i32) -> (i32, i32, i32, i32) {
    %c0_i32 = arith.constant 0 : i32
    %c0_i32_0 = arith.constant 0 : i32
    %c0_i32_1 = arith.constant 0 : i32
    return %arg0, %arg1, %c0_i32, %c0_i32_0 : i32, i32, i32, i32
  }
}

</mosaic_0001>

<llo_original>
// kernel: basic_conv_forward.3
$region0: #{basic_conv_forward.3}
  #allocation0 [shape = 'u32[]', space=smem, size = 0x4, offset = 0x4, fixed_abs, tag = 'smem constant byte address 0x4 - core index']
  #allocation1 [shape = 'u32[144,128]{1,0:T(1,128)}', space=vmem, size = 0x12000, scoped, tag = 'internal scratch']
  %s0 = inlined_call_operand.vmem [shape: bf16[2,16,16,128], index: 0, kind: input, shape index: {}]
  %s1 = inlined_call_operand.vmem [shape: f32[1,128], index: 1, kind: input, shape index: {}]
  %s2 = inlined_call_operand.vmem [shape: f32[1,128], index: 2, kind: input, shape index: {}]
  %s3 = inlined_call_operand.vmem [shape: f32[2,16,16,128], index: 3, kind: output, shape index: {}]
  %s4 = sld [smem:[#allocation0]]
  $region45: #{basic_conv_forward.3} parent=0
    _
  %s6 = ssub.s32 1, %s4
  %s7 = scalar_select 0, %s6, %s4
  loop: start=0, step=1, limit=4
  $region2: #{basic_conv_forward.3} parent=0 // loop_pre_header
    _
  $region3: #{basic_conv_forward.3} parent=0 // loop_header
    %s9 = sphi 0, %s13
    %p10 = scmp.ge.s32.totalorder %s9, 4
    %s16 = sphi 0, %s28
    %s17 = sphi 0, %s24
    %s18 = sphi 0, %s16
    %s19 = sphi 0, %s17
    %s20 = sphi 0, %s18
    %s21 = sphi 0, %s19
    %s33 = sphi 0, %s35
    %s36 = sphi 0, %s33
    %s37 = sphi 0, %s36
    %s53 = sphi 0, %s37
    %s57 = sphi 0, %s57
    %s59 = sphi 0, %s57
    %s60 = sphi 0, %s59
    %s74 = sphi 0, %s60
    %s78 = sphi 0, %s78
    %s80 = sphi 0, %s78
    %s81 = sphi 0, %s80
    %s95 = sphi 0, %s81
    %s103 = sphi 0, %s105
    %s106 = sphi 0, %s103
    %s107 = sphi 0, %s106
    %s123 = sphi 0, %s107
  $region4: #{basic_conv_forward.3} parent=0 // loop_header_branch
    %12 = sbr.rel (%p10) target = $region8
  $region5: #{basic_conv_forward.3} parent=0 // loop_body
    %s14 = ssub.s32 %s9, 1
    %s15 = ssub.s32 %s9, 2
    %s22 = sadd.s32 1, %s17
    %p23 = scmp.ge.s32.totalorder %s22, 1
    %s24 = scalar_select %p23, 0, %s22
    %s25 = sadd.s32 1, %s16
    %s26 = scalar_select %p23, %s25, %s16
    %p27 = scmp.ge.s32.totalorder %s26, 2
    %s28 = scalar_select %p27, 0, %s26
    %s29 = ssub.s32 %s16, %s28
    %s30 = ssub.s32 %s17, %s24
    %s31 = sor.u32 %s29, %s30
    %p32 = scmp.eq.s32.totalorder %s31, 0
    %s34 = sadd.s32 %s33, 1
    %s35 = scalar_select %p32, %s33, %s34
    %p38 = pneg %p32
    %p39 = scmp.eq.s32.totalorder %s9, 1
    %p40 = por %p38, %p39
    %p41 = scmp.ne.s32.totalorder %s33, %s36
    %p42 = scmp.eq.s32.totalorder %s9, 0
    %p43 = por %p41, %p42
    %p44 = scmp.ne.s32.totalorder %s33, %s36
    %p45 = scmp.eq.s32.totalorder %s14, 1
    %p46 = por %p44, %p45
    %p47 = scmp.ne.s32.totalorder %s36, %s37
    %p48 = scmp.eq.s32.totalorder %s14, 0
    %p49 = por %p47, %p48
    %p50 = scmp.ne.s32.totalorder %s36, %s37
    %p51 = scmp.eq.s32.totalorder %s15, 1
    %p52 = por %p50, %p51
    %p54 = scmp.ne.s32.totalorder %s37, %s53
    %p55 = scmp.eq.s32.totalorder %s15, 0
    %p56 = por %p54, %p55
    %s58 = sadd.s32 %s57, 1
    %p61 = scmp.eq.s32.totalorder %s9, 1
    %p62 = scmp.ne.s32.totalorder %s57, %s59
    %p63 = scmp.eq.s32.totalorder %s9, 0
    %p64 = por %p62, %p63
    %p65 = scmp.ne.s32.totalorder %s57, %s59
    %p66 = scmp.eq.s32.totalorder %s14, 1
    %p67 = por %p65, %p66
    %p68 = scmp.ne.s32.totalorder %s59, %s60
    %p69 = scmp.eq.s32.totalorder %s14, 0
    %p70 = por %p68, %p69
    %p71 = scmp.ne.s32.totalorder %s59, %s60
    %p72 = scmp.eq.s32.totalorder %s15, 1
    %p73 = por %p71, %p72
    %p75 = scmp.ne.s32.totalorder %s60, %s74
    %p76 = scmp.eq.s32.totalorder %s15, 0
    %p77 = por %p75, %p76
    %s79 = sadd.s32 %s78, 1
    %p82 = scmp.eq.s32.totalorder %s9, 1
    %p83 = scmp.ne.s32.totalorder %s78, %s80
    %p84 = scmp.eq.s32.totalorder %s9, 0
    %p85 = por %p83, %p84
    %p86 = scmp.ne.s32.totalorder %s78, %s80
    %p87 = scmp.eq.s32.totalorder %s14, 1
    %p88 = por %p86, %p87
    %p89 = scmp.ne.s32.totalorder %s80, %s81
    %p90 = scmp.eq.s32.totalorder %s14, 0
    %p91 = por %p89, %p90
    %p92 = scmp.ne.s32.totalorder %s80, %s81
    %p93 = scmp.eq.s32.totalorder %s15, 1
    %p94 = por %p92, %p93
    %p96 = scmp.ne.s32.totalorder %s81, %s95
    %p97 = scmp.eq.s32.totalorder %s15, 0
    %p98 = por %p96, %p97
    %s99 = ssub.s32 %s16, %s28
    %s100 = ssub.s32 %s17, %s24
    %s101 = sor.u32 %s99, %s100
    %p102 = scmp.eq.s32.totalorder %s101, 0
    %s104 = sadd.s32 %s103, 1
    %s105 = scalar_select %p102, %s103, %s104
    %p108 = pneg %p102
    %p109 = scmp.eq.s32.totalorder %s9, 1
    %p110 = por %p108, %p109
    %p111 = scmp.ne.s32.totalorder %s103, %s106
    %p112 = scmp.eq.s32.totalorder %s9, 0
    %p113 = por %p111, %p112
    %p114 = scmp.ne.s32.totalorder %s103, %s106
    %p115 = scmp.eq.s32.totalorder %s14, 1
    %p116 = por %p114, %p115
    %p117 = scmp.ne.s32.totalorder %s106, %s107
    %p118 = scmp.eq.s32.totalorder %s14, 0
    %p119 = por %p117, %p118
    %p120 = scmp.ne.s32.totalorder %s106, %s107
    %p121 = scmp.eq.s32.totalorder %s15, 1
    %p122 = por %p120, %p121
    %p124 = scmp.ne.s32.totalorder %s107, %s123
    %p125 = scmp.eq.s32.totalorder %s15, 0
    %p126 = por %p124, %p125
    %p127 = scmp.le.s32.totalorder 1, %s9
    %p128 = scmp.lt.s32.totalorder %s9, 3
    %p129 = pnand %p127, %p128
    %p130 = pneg %p129
    // Predicated region
    $region9: #{basic_conv_forward.3} parent=5 // pred_check
      _
    $region10: #{basic_conv_forward.3} parent=5 // pred_check_branch
      %132 = sbr.rel (%p129) target = $region12
    $region11: #{basic_conv_forward.3} parent=5 // pred_region
      %s133 = ssub.s32 %s9, 1
      // Predicated region
      $region13: #{basic_conv_forward.3} parent=11 // pred_check
        %p134 = pneg %p70
      $region14: #{basic_conv_forward.3} parent=11 // pred_check_branch
        %136 = sbr.rel (%p134) target = $region16
      $region15: #{basic_conv_forward.3} parent=11 // pred_region
        _
      $region16: #{basic_conv_forward.3} parent=11 // pred_fallthru
        _
      // Predicated region
      $region17: #{basic_conv_forward.3} parent=11 // pred_check
        %p137 = pneg %p91
      $region18: #{basic_conv_forward.3} parent=11 // pred_check_branch
        %139 = sbr.rel (%p137) target = $region20
      $region19: #{basic_conv_forward.3} parent=11 // pred_region
        _
      $region20: #{basic_conv_forward.3} parent=11 // pred_fallthru
        _
    $region12: #{basic_conv_forward.3} parent=5 // pred_fallthru
      _
    %p140 = scmp.lt.s32.totalorder %s9, 2
    // Predicated region
    $region21: #{basic_conv_forward.3} parent=5 // pred_check
      %p141 = pneg %p140
    $region22: #{basic_conv_forward.3} parent=5 // pred_check_branch
      %143 = sbr.rel (%p141) target = $region24
    $region23: #{basic_conv_forward.3} parent=5 // pred_region
      // Predicated region
      $region25: #{basic_conv_forward.3} parent=23 // pred_check
        %p144 = pneg %p43
      $region26: #{basic_conv_forward.3} parent=23 // pred_check_branch
        %146 = sbr.rel (%p144) target = $region28
      $region27: #{basic_conv_forward.3} parent=23 // pred_region
        %s147 = smul.u32 16, %s17
        %p148 = scmp.lt.s32.totalorder %s16, 1
        %s149 = scalar_select %p148, %s16, 1
        %p150 = scmp.lt.s32.totalorder %s147, 15
        %s151 = scalar_select %p150, %s147, 15
        %s152 = smul.addr %s151, 2
        %s153 = smul.addr %s149, 32
        %s154 = sadd.s32 %s152, %s153
        %s155 = smul.addr %s154, 4
        %s156 = scalar_lea.vmem %s0, %s155
        %s157 = smul.u32 16, %s17
      $region28: #{basic_conv_forward.3} parent=23 // pred_fallthru
        _
    $region24: #{basic_conv_forward.3} parent=5 // pred_fallthru
      _
    %p158 = scmp.le.s32.totalorder 1, %s9
    %p159 = scmp.lt.s32.totalorder %s9, 3
    %p160 = pnand %p158, %p159
    %p161 = pneg %p160
    // Predicated region
    $region29: #{basic_conv_forward.3} parent=5 // pred_check
      _
    $region30: #{basic_conv_forward.3} parent=5 // pred_check_branch
      %163 = sbr.rel (%p160) target = $region32
    $region31: #{basic_conv_forward.3} parent=5 // pred_region
      %s164 = ssub.s32 %s9, 1
      %s165 = smul.u32 16, %s19
      %p166 = scmp.lt.s32.totalorder %s18, 1
      %s167 = scalar_select %p166, %s18, 1
      %p168 = scmp.lt.s32.totalorder %s165, 15
      %s169 = scalar_select %p168, %s165, 15
      %s170 = smul.addr %s169, 2
      %s171 = smul.addr %s167, 32
      %s172 = sadd.s32 %s170, %s171
      %s173 = smul.addr %s172, 4
      %s174 = scalar_lea.vmem %s0, %s173
      %p175 = pneg %p49
      %p176 = pneg %p46
      %p177 = pneg %p70
      %p178 = pneg %p67
      %p179 = pneg %p91
      %p180 = pneg %p88
      %p181 = pneg %p119
      %p182 = pneg %p116
      %s183 = smul.u32 16, %s19
      %p184 = scmp.lt.s32.totalorder %s18, 1
      %s185 = scalar_select %p184, %s18, 1
      %p186 = scmp.lt.s32.totalorder %s183, 15
      %s187 = scalar_select %p186, %s183, 15
      %s188 = smul.addr %s187, 2
      %s189 = smul.addr %s185, 32
      %s190 = sadd.s32 %s188, %s189
      %s191 = smul.addr %s190, 8
      %s192 = scalar_lea.vmem %s3, %s191
      %s193 = smul.u32 16, %s19
      %p194 = scmp.lt.s32.totalorder %s18, 1
      %s195 = scalar_select %p194, %s18, 1
      %p196 = scmp.lt.s32.totalorder %s193, 15
      %s197 = scalar_select %p196, %s193, 15
      %s198 = smul.addr %s197, 2
      %s199 = smul.addr %s195, 32
      %s200 = sadd.s32 %s198, %s199
      %s201 = smul.addr %s200, 4
      %s202 = scalar_lea.vmem %s0, %s201
      %s203 = smul.u32 16, %s19
      %s204 = smul.u32 16, %s19
      %p205 = scmp.lt.s32.totalorder %s18, 1
      %s206 = scalar_select %p205, %s18, 1
      %p207 = scmp.lt.s32.totalorder %s204, 15
      %s208 = scalar_select %p207, %s204, 15
      %s209 = smul.addr %s208, 2
      %s210 = smul.addr %s206, 32
      %s211 = sadd.s32 %s209, %s210
      %s212 = smul.addr %s211, 8
      %s213 = scalar_lea.vmem %s3, %s212
      %s214 = smul.u32 16, %s19
      %v215 = vld [vmem:[%s202] sm:$0xf]
      %v216 = vld [vmem:[%s202 + $0x4] sm:$0xf]
      %v217 = vld [vmem:[%s202 + $0x8] sm:$0xf]
      %v218 = vld [vmem:[%s202 + $0xc] sm:$0xf]
      %v219 = vld [vmem:[%s202 + $0x10] sm:$0xf]
      %v220 = vld [vmem:[%s202 + $0x14] sm:$0xf]
      %v221 = vld [vmem:[%s202 + $0x18] sm:$0xf]
      %v222 = vld [vmem:[%s202 + $0x1c] sm:$0xf]
      %v223 = vld [vmem:[%s202 + $0x20] sm:$0xf]
      %v224 = vld [vmem:[%s202 + $0x24] sm:$0xf]
      %v225 = vld [vmem:[%s202 + $0x28] sm:$0xf]
      %v226 = vld [vmem:[%s202 + $0x2c] sm:$0xf]
      %v227 = vld [vmem:[%s202 + $0x30] sm:$0xf]
      %v228 = vld [vmem:[%s202 + $0x34] sm:$0xf]
      %v229 = vld [vmem:[%s202 + $0x38] sm:$0xf]
      %v230 = vld [vmem:[%s202 + $0x3c] sm:$0xf]
      %v231 = vld [vmem:[%s202 + $0x40] sm:$0xf]
      %v232 = vld [vmem:[%s202 + $0x44] sm:$0xf]
      %v233 = vld [vmem:[%s202 + $0x48] sm:$0xf]
      %v234 = vld [vmem:[%s202 + $0x4c] sm:$0xf]
      %v235 = vld [vmem:[%s202 + $0x50] sm:$0xf]
      %v236 = vld [vmem:[%s202 + $0x54] sm:$0xf]
      %v237 = vld [vmem:[%s202 + $0x58] sm:$0xf]
      %v238 = vld [vmem:[%s202 + $0x5c] sm:$0xf]
      %v239 = vld [vmem:[%s202 + $0x60] sm:$0xf]
      %v240 = vld [vmem:[%s202 + $0x64] sm:$0xf]
      %v241 = vld [vmem:[%s202 + $0x68] sm:$0xf]
      %v242 = vld [vmem:[%s202 + $0x6c] sm:$0xf]
      %v243 = vld [vmem:[%s202 + $0x70] sm:$0xf]
      %v244 = vld [vmem:[%s202 + $0x74] sm:$0xf]
      %v245 = vld [vmem:[%s202 + $0x78] sm:$0xf]
      %v246 = vld [vmem:[%s202 + $0x7c] sm:$0xf]
      %v247 = vunpack.c.l.bf16 %v215
      %v248 = vunpack.c.l.bf16 %v216
      %v249 = vunpack.c.l.bf16 %v217
      %v250 = vunpack.c.l.bf16 %v218
      %v251 = vunpack.c.l.bf16 %v219
      %v252 = vunpack.c.l.bf16 %v220
      %v253 = vunpack.c.l.bf16 %v221
      %v254 = vunpack.c.l.bf16 %v222
      %v255 = vunpack.c.l.bf16 %v223
      %v256 = vunpack.c.l.bf16 %v224
      %v257 = vunpack.c.l.bf16 %v225
      %v258 = vunpack.c.l.bf16 %v226
      %v259 = vunpack.c.l.bf16 %v227
      %v260 = vunpack.c.l.bf16 %v228
      %v261 = vunpack.c.l.bf16 %v229
      %v262 = vunpack.c.l.bf16 %v230
      %v263 = vunpack.c.l.bf16 %v231
      %v264 = vunpack.c.l.bf16 %v232
      %v265 = vunpack.c.l.bf16 %v233
      %v266 = vunpack.c.l.bf16 %v234
      %v267 = vunpack.c.l.bf16 %v235
      %v268 = vunpack.c.l.bf16 %v236
      %v269 = vunpack.c.l.bf16 %v237
      %v270 = vunpack.c.l.bf16 %v238
      %v271 = vunpack.c.l.bf16 %v239
      %v272 = vunpack.c.l.bf16 %v240
      %v273 = vunpack.c.l.bf16 %v241
      %v274 = vunpack.c.l.bf16 %v242
      %v275 = vunpack.c.l.bf16 %v243
      %v276 = vunpack.c.l.bf16 %v244
      %v277 = vunpack.c.l.bf16 %v245
      %v278 = vunpack.c.l.bf16 %v246
      %v279 = vld [vmem:[%s1] sm:$0x1]
      %v280 = vld [vmem:[%s2] sm:$0x1]
      %v282 = vlaneseq
      %v283 = vshrl.u32 %v282, 7
      %v284 = vsub.s32 0, %v283
      %v285 = vrot.slane %v279, %v284
      %v287 = vmul.f32 %v247, %v285
      %v288 = vmul.f32 %v248, %v285
      %v289 = vmul.f32 %v249, %v285
      %v290 = vmul.f32 %v250, %v285
      %v291 = vmul.f32 %v251, %v285
      %v292 = vmul.f32 %v252, %v285
      %v293 = vmul.f32 %v253, %v285
      %v294 = vmul.f32 %v254, %v285
      %v295 = vmul.f32 %v255, %v285
      %v296 = vmul.f32 %v256, %v285
      %v297 = vmul.f32 %v257, %v285
      %v298 = vmul.f32 %v258, %v285
      %v299 = vmul.f32 %v259, %v285
      %v300 = vmul.f32 %v260, %v285
      %v301 = vmul.f32 %v261, %v285
      %v302 = vmul.f32 %v262, %v285
      %v303 = vmul.f32 %v263, %v285
      %v304 = vmul.f32 %v264, %v285
      %v305 = vmul.f32 %v265, %v285
      %v306 = vmul.f32 %v266, %v285
      %v307 = vmul.f32 %v267, %v285
      %v308 = vmul.f32 %v268, %v285
      %v309 = vmul.f32 %v269, %v285
      %v310 = vmul.f32 %v270, %v285
      %v311 = vmul.f32 %v271, %v285
      %v312 = vmul.f32 %v272, %v285
      %v313 = vmul.f32 %v273, %v285
      %v314 = vmul.f32 %v274, %v285
      %v315 = vmul.f32 %v275, %v285
      %v316 = vmul.f32 %v276, %v285
      %v317 = vmul.f32 %v277, %v285
      %v318 = vmul.f32 %v278, %v285
      %v320 = vlaneseq
      %v321 = vshrl.u32 %v320, 7
      %v322 = vsub.s32 0, %v321
      %v323 = vrot.slane %v280, %v322
      %v325 = vadd.f32 %v287, %v323
      %v326 = vadd.f32 %v288, %v323
      %v327 = vadd.f32 %v289, %v323
      %v328 = vadd.f32 %v290, %v323
      %v329 = vadd.f32 %v291, %v323
      %v330 = vadd.f32 %v292, %v323
      %v331 = vadd.f32 %v293, %v323
      %v332 = vadd.f32 %v294, %v323
      %v333 = vadd.f32 %v295, %v323
      %v334 = vadd.f32 %v296, %v323
      %v335 = vadd.f32 %v297, %v323
      %v336 = vadd.f32 %v298, %v323
      %v337 = vadd.f32 %v299, %v323
      %v338 = vadd.f32 %v300, %v323
      %v339 = vadd.f32 %v301, %v323
      %v340 = vadd.f32 %v302, %v323
      %v341 = vadd.f32 %v303, %v323
      %v342 = vadd.f32 %v304, %v323
      %v343 = vadd.f32 %v305, %v323
      %v344 = vadd.f32 %v306, %v323
      %v345 = vadd.f32 %v307, %v323
      %v346 = vadd.f32 %v308, %v323
      %v347 = vadd.f32 %v309, %v323
      %v348 = vadd.f32 %v310, %v323
      %v349 = vadd.f32 %v311, %v323
      %v350 = vadd.f32 %v312, %v323
      %v351 = vadd.f32 %v313, %v323
      %v352 = vadd.f32 %v314, %v323
      %v353 = vadd.f32 %v315, %v323
      %v354 = vadd.f32 %v316, %v323
      %v355 = vadd.f32 %v317, %v323
      %v356 = vadd.f32 %v318, %v323
      %v357 = vmax.f32 %v325, 0.0
      %v358 = vmax.f32 %v326, 0.0
      %v359 = vmax.f32 %v327, 0.0
      %v360 = vmax.f32 %v328, 0.0
      %v361 = vmax.f32 %v329, 0.0
      %v362 = vmax.f32 %v330, 0.0
      %v363 = vmax.f32 %v331, 0.0
      %v364 = vmax.f32 %v332, 0.0
      %v365 = vmax.f32 %v333, 0.0
      %v366 = vmax.f32 %v334, 0.0
      %v367 = vmax.f32 %v335, 0.0
      %v368 = vmax.f32 %v336, 0.0
      %v369 = vmax.f32 %v337, 0.0
      %v370 = vmax.f32 %v338, 0.0
      %v371 = vmax.f32 %v339, 0.0
      %v372 = vmax.f32 %v340, 0.0
      %v373 = vmax.f32 %v341, 0.0
      %v374 = vmax.f32 %v342, 0.0
      %v375 = vmax.f32 %v343, 0.0
      %v376 = vmax.f32 %v344, 0.0
      %v377 = vmax.f32 %v345, 0.0
      %v378 = vmax.f32 %v346, 0.0
      %v379 = vmax.f32 %v347, 0.0
      %v380 = vmax.f32 %v348, 0.0
      %v381 = vmax.f32 %v349, 0.0
      %v382 = vmax.f32 %v350, 0.0
      %v383 = vmax.f32 %v351, 0.0
      %v384 = vmax.f32 %v352, 0.0
      %v385 = vmax.f32 %v353, 0.0
      %v386 = vmax.f32 %v354, 0.0
      %v387 = vmax.f32 %v355, 0.0
      %v388 = vmax.f32 %v356, 0.0
      %389 = vst [vmem:[%s213] sm:$0xff] %v357
      %390 = vst [vmem:[%s213 + $0x8] sm:$0xff] %v358
      %391 = vst [vmem:[%s213 + $0x10] sm:$0xff] %v359
      %392 = vst [vmem:[%s213 + $0x18] sm:$0xff] %v360
      %393 = vst [vmem:[%s213 + $0x20] sm:$0xff] %v361
      %394 = vst [vmem:[%s213 + $0x28] sm:$0xff] %v362
      %395 = vst [vmem:[%s213 + $0x30] sm:$0xff] %v363
      %396 = vst [vmem:[%s213 + $0x38] sm:$0xff] %v364
      %397 = vst [vmem:[%s213 + $0x40] sm:$0xff] %v365
      %398 = vst [vmem:[%s213 + $0x48] sm:$0xff] %v366
      %399 = vst [vmem:[%s213 + $0x50] sm:$0xff] %v367
      %400 = vst [vmem:[%s213 + $0x58] sm:$0xff] %v368
      %401 = vst [vmem:[%s213 + $0x60] sm:$0xff] %v369
      %402 = vst [vmem:[%s213 + $0x68] sm:$0xff] %v370
      %403 = vst [vmem:[%s213 + $0x70] sm:$0xff] %v371
      %404 = vst [vmem:[%s213 + $0x78] sm:$0xff] %v372
      %405 = vst [vmem:[%s213 + $0x80] sm:$0xff] %v373
      %406 = vst [vmem:[%s213 + $0x88] sm:$0xff] %v374
      %407 = vst [vmem:[%s213 + $0x90] sm:$0xff] %v375
      %408 = vst [vmem:[%s213 + $0x98] sm:$0xff] %v376
      %409 = vst [vmem:[%s213 + $0xa0] sm:$0xff] %v377
      %410 = vst [vmem:[%s213 + $0xa8] sm:$0xff] %v378
      %411 = vst [vmem:[%s213 + $0xb0] sm:$0xff] %v379
      %412 = vst [vmem:[%s213 + $0xb8] sm:$0xff] %v380
      %413 = vst [vmem:[%s213 + $0xc0] sm:$0xff] %v381
      %414 = vst [vmem:[%s213 + $0xc8] sm:$0xff] %v382
      %415 = vst [vmem:[%s213 + $0xd0] sm:$0xff] %v383
      %416 = vst [vmem:[%s213 + $0xd8] sm:$0xff] %v384
      %417 = vst [vmem:[%s213 + $0xe0] sm:$0xff] %v385
      %418 = vst [vmem:[%s213 + $0xe8] sm:$0xff] %v386
      %419 = vst [vmem:[%s213 + $0xf0] sm:$0xff] %v387
      %420 = vst [vmem:[%s213 + $0xf8] sm:$0xff] %v388
      %s421 = smul.u32 16, %s19
      %p422 = scmp.lt.s32.totalorder %s18, 1
      %s423 = scalar_select %p422, %s18, 1
      %p424 = scmp.lt.s32.totalorder %s421, 15
      %s425 = scalar_select %p424, %s421, 15
      %s426 = smul.addr %s425, 2
      %s427 = smul.addr %s423, 32
      %s428 = sadd.s32 %s426, %s427
      %s429 = smul.addr %s428, 8
      %s430 = scalar_lea.vmem %s3, %s429
      // Predicated region
      $region33: #{basic_conv_forward.3} parent=31 // pred_check
        %p431 = pneg %p116
      $region34: #{basic_conv_forward.3} parent=31 // pred_check_branch
        %433 = sbr.rel (%p431) target = $region36
      $region35: #{basic_conv_forward.3} parent=31 // pred_region
        %s434 = smul.u32 16, %s19
      $region36: #{basic_conv_forward.3} parent=31 // pred_fallthru
        _
    $region32: #{basic_conv_forward.3} parent=5 // pred_fallthru
      _
    %p435 = scmp.le.s32.totalorder 2, %s9
    // Predicated region
    $region37: #{basic_conv_forward.3} parent=5 // pred_check
      %p436 = pneg %p435
    $region38: #{basic_conv_forward.3} parent=5 // pred_check_branch
      %438 = sbr.rel (%p436) target = $region40
    $region39: #{basic_conv_forward.3} parent=5 // pred_region
      %s439 = ssub.s32 %s9, 2
      // Predicated region
      $region41: #{basic_conv_forward.3} parent=39 // pred_check
        %p440 = pneg %p122
      $region42: #{basic_conv_forward.3} parent=39 // pred_check_branch
        %442 = sbr.rel (%p440) target = $region44
      $region43: #{basic_conv_forward.3} parent=39 // pred_region
        %s443 = smul.u32 16, %s21
        %p444 = scmp.lt.s32.totalorder %s20, 1
        %s445 = scalar_select %p444, %s20, 1
        %p446 = scmp.lt.s32.totalorder %s443, 15
        %s447 = scalar_select %p446, %s443, 15
        %s448 = smul.addr %s447, 2
        %s449 = smul.addr %s445, 32
        %s450 = sadd.s32 %s448, %s449
        %s451 = smul.addr %s450, 8
        %s452 = scalar_lea.vmem %s3, %s451
      $region44: #{basic_conv_forward.3} parent=39 // pred_fallthru
        _
    $region40: #{basic_conv_forward.3} parent=5 // pred_fallthru
      _
  $region6: #{basic_conv_forward.3} parent=0 // loop_footer
    %s13 = sadd.s32 1, %s9
  $region7: #{basic_conv_forward.3} parent=0 // loop_footer_branch
    %8 = sbr.rel target = $region3
  $region8: #{basic_conv_forward.3} parent=0 // loop_exit
    _

// kernel: basic_conv_forward.2
$region0: #{basic_conv_forward.2}
  #allocation0 [shape = 'u32[]', space=smem, size = 0x4, offset = 0x4, fixed_abs, tag = 'smem constant byte address 0x4 - core index']
  #allocation1 [shape = 'u32[144,128]{1,0:T(1,128)}', space=vmem, size = 0x12000, scoped, tag = 'internal scratch']
  #allocation2 [shape = 'bf16[16,16,36]{2,1,0:T(8,128)(2,1)}', space=vmem, size = 0x10000, scoped, tag = 'scratch operand']
  %s0 = inlined_call_operand.vmem [shape: bf16[2,16,18,4], index: 0, kind: input, shape index: {}]
  %s1 = inlined_call_operand.vmem [shape: bf16[2,16,18,4], index: 1, kind: input, shape index: {}]
  %s2 = inlined_call_operand.vmem [shape: bf16[2,16,18,4], index: 2, kind: input, shape index: {}]
  %s3 = inlined_call_operand.vmem [shape: bf16[36,128], index: 3, kind: input, shape index: {}]
  %s4 = inlined_call_operand.vmem [shape: bf16[2,16,16,128], index: 4, kind: output, shape index: {0}]
  %s5 = inlined_call_operand.vmem [shape: f32[2,1,1,128], index: 5, kind: output, shape index: {1}]
  %s6 = inlined_call_operand.vmem [shape: f32[2,1,1,128], index: 6, kind: output, shape index: {2}]
  %7 = xla_tuple %s4, %s5, %s6
  %s8 = sld [smem:[#allocation0]]
  $region65: #{basic_conv_forward.2} parent=0
    _
  %s10 = ssub.s32 1, %s8
  %s11 = scalar_select 0, %s10, %s8
  loop: start=0, step=1, limit=4
  $region2: #{basic_conv_forward.2} parent=0 // loop_pre_header
    _
  $region3: #{basic_conv_forward.2} parent=0 // loop_header
    %s13 = sphi 0, %s17
    %p14 = scmp.ge.s32.totalorder %s13, 4
    %s20 = sphi 0, %s32
    %s21 = sphi 0, %s28
    %s22 = sphi 0, %s20
    %s23 = sphi 0, %s21
    %s24 = sphi 0, %s22
    %s25 = sphi 0, %s23
    %s37 = sphi 0, %s39
    %s40 = sphi 0, %s37
    %s41 = sphi 0, %s40
    %s57 = sphi 0, %s41
    %s65 = sphi 0, %s67
    %s68 = sphi 0, %s65
    %s69 = sphi 0, %s68
    %s85 = sphi 0, %s69
    %s93 = sphi 0, %s95
    %s96 = sphi 0, %s93
    %s97 = sphi 0, %s96
    %s113 = sphi 0, %s97
    %s117 = sphi 0, %s117
    %s119 = sphi 0, %s117
    %s120 = sphi 0, %s119
    %s134 = sphi 0, %s120
    %s142 = sphi 0, %s144
    %s145 = sphi 0, %s142
    %s146 = sphi 0, %s145
    %s162 = sphi 0, %s146
    %s170 = sphi 0, %s172
    %s173 = sphi 0, %s170
    %s174 = sphi 0, %s173
    %s190 = sphi 0, %s174
    %s198 = sphi 0, %s200
    %s201 = sphi 0, %s198
    %s202 = sphi 0, %s201
    %s218 = sphi 0, %s202
  $region4: #{basic_conv_forward.2} parent=0 // loop_header_branch
    %16 = sbr.rel (%p14) target = $region8
  $region5: #{basic_conv_forward.2} parent=0 // loop_body
    %s18 = ssub.s32 %s13, 1
    %s19 = ssub.s32 %s13, 2
    %s26 = sadd.s32 1, %s21
    %p27 = scmp.ge.s32.totalorder %s26, 1
    %s28 = scalar_select %p27, 0, %s26
    %s29 = sadd.s32 1, %s20
    %s30 = scalar_select %p27, %s29, %s20
    %p31 = scmp.ge.s32.totalorder %s30, 2
    %s32 = scalar_select %p31, 0, %s30
    %s33 = ssub.s32 %s20, %s32
    %s34 = ssub.s32 %s21, %s28
    %s35 = sor.u32 %s33, %s34
    %p36 = scmp.eq.s32.totalorder %s35, 0
    %s38 = sadd.s32 %s37, 1
    %s39 = scalar_select %p36, %s37, %s38
    %p42 = pneg %p36
    %p43 = scmp.eq.s32.totalorder %s13, 1
    %p44 = por %p42, %p43
    %p45 = scmp.ne.s32.totalorder %s37, %s40
    %p46 = scmp.eq.s32.totalorder %s13, 0
    %p47 = por %p45, %p46
    %p48 = scmp.ne.s32.totalorder %s37, %s40
    %p49 = scmp.eq.s32.totalorder %s18, 1
    %p50 = por %p48, %p49
    %p51 = scmp.ne.s32.totalorder %s40, %s41
    %p52 = scmp.eq.s32.totalorder %s18, 0
    %p53 = por %p51, %p52
    %p54 = scmp.ne.s32.totalorder %s40, %s41
    %p55 = scmp.eq.s32.totalorder %s19, 1
    %p56 = por %p54, %p55
    %p58 = scmp.ne.s32.totalorder %s41, %s57
    %p59 = scmp.eq.s32.totalorder %s19, 0
    %p60 = por %p58, %p59
    %s61 = ssub.s32 %s20, %s32
    %s62 = ssub.s32 %s21, %s28
    %s63 = sor.u32 %s61, %s62
    %p64 = scmp.eq.s32.totalorder %s63, 0
    %s66 = sadd.s32 %s65, 1
    %s67 = scalar_select %p64, %s65, %s66
    %p70 = pneg %p64
    %p71 = scmp.eq.s32.totalorder %s13, 1
    %p72 = por %p70, %p71
    %p73 = scmp.ne.s32.totalorder %s65, %s68
    %p74 = scmp.eq.s32.totalorder %s13, 0
    %p75 = por %p73, %p74
    %p76 = scmp.ne.s32.totalorder %s65, %s68
    %p77 = scmp.eq.s32.totalorder %s18, 1
    %p78 = por %p76, %p77
    %p79 = scmp.ne.s32.totalorder %s68, %s69
    %p80 = scmp.eq.s32.totalorder %s18, 0
    %p81 = por %p79, %p80
    %p82 = scmp.ne.s32.totalorder %s68, %s69
    %p83 = scmp.eq.s32.totalorder %s19, 1
    %p84 = por %p82, %p83
    %p86 = scmp.ne.s32.totalorder %s69, %s85
    %p87 = scmp.eq.s32.totalorder %s19, 0
    %p88 = por %p86, %p87
    %s89 = ssub.s32 %s20, %s32
    %s90 = ssub.s32 %s21, %s28
    %s91 = sor.u32 %s89, %s90
    %p92 = scmp.eq.s32.totalorder %s91, 0
    %s94 = sadd.s32 %s93, 1
    %s95 = scalar_select %p92, %s93, %s94
    %p98 = pneg %p92
    %p99 = scmp.eq.s32.totalorder %s13, 1
    %p100 = por %p98, %p99
    %p101 = scmp.ne.s32.totalorder %s93, %s96
    %p102 = scmp.eq.s32.totalorder %s13, 0
    %p103 = por %p101, %p102
    %p104 = scmp.ne.s32.totalorder %s93, %s96
    %p105 = scmp.eq.s32.totalorder %s18, 1
    %p106 = por %p104, %p105
    %p107 = scmp.ne.s32.totalorder %s96, %s97
    %p108 = scmp.eq.s32.totalorder %s18, 0
    %p109 = por %p107, %p108
    %p110 = scmp.ne.s32.totalorder %s96, %s97
    %p111 = scmp.eq.s32.totalorder %s19, 1
    %p112 = por %p110, %p111
    %p114 = scmp.ne.s32.totalorder %s97, %s113
    %p115 = scmp.eq.s32.totalorder %s19, 0
    %p116 = por %p114, %p115
    %s118 = sadd.s32 %s117, 1
    %p121 = scmp.eq.s32.totalorder %s13, 1
    %p122 = scmp.ne.s32.totalorder %s117, %s119
    %p123 = scmp.eq.s32.totalorder %s13, 0
    %p124 = por %p122, %p123
    %p125 = scmp.ne.s32.totalorder %s117, %s119
    %p126 = scmp.eq.s32.totalorder %s18, 1
    %p127 = por %p125, %p126
    %p128 = scmp.ne.s32.totalorder %s119, %s120
    %p129 = scmp.eq.s32.totalorder %s18, 0
    %p130 = por %p128, %p129
    %p131 = scmp.ne.s32.totalorder %s119, %s120
    %p132 = scmp.eq.s32.totalorder %s19, 1
    %p133 = por %p131, %p132
    %p135 = scmp.ne.s32.totalorder %s120, %s134
    %p136 = scmp.eq.s32.totalorder %s19, 0
    %p137 = por %p135, %p136
    %s138 = ssub.s32 %s20, %s32
    %s139 = ssub.s32 %s21, %s28
    %s140 = sor.u32 %s138, %s139
    %p141 = scmp.eq.s32.totalorder %s140, 0
    %s143 = sadd.s32 %s142, 1
    %s144 = scalar_select %p141, %s142, %s143
    %p147 = pneg %p141
    %p148 = scmp.eq.s32.totalorder %s13, 1
    %p149 = por %p147, %p148
    %p150 = scmp.ne.s32.totalorder %s142, %s145
    %p151 = scmp.eq.s32.totalorder %s13, 0
    %p152 = por %p150, %p151
    %p153 = scmp.ne.s32.totalorder %s142, %s145
    %p154 = scmp.eq.s32.totalorder %s18, 1
    %p155 = por %p153, %p154
    %p156 = scmp.ne.s32.totalorder %s145, %s146
    %p157 = scmp.eq.s32.totalorder %s18, 0
    %p158 = por %p156, %p157
    %p159 = scmp.ne.s32.totalorder %s145, %s146
    %p160 = scmp.eq.s32.totalorder %s19, 1
    %p161 = por %p159, %p160
    %p163 = scmp.ne.s32.totalorder %s146, %s162
    %p164 = scmp.eq.s32.totalorder %s19, 0
    %p165 = por %p163, %p164
    %s166 = ssub.s32 %s20, %s32
    %s167 = ssub.s32 %s21, %s28
    %s168 = sor.u32 %s166, %s167
    %p169 = scmp.eq.s32.totalorder %s168, 0
    %s171 = sadd.s32 %s170, 1
    %s172 = scalar_select %p169, %s170, %s171
    %p175 = pneg %p169
    %p176 = scmp.eq.s32.totalorder %s13, 1
    %p177 = por %p175, %p176
    %p178 = scmp.ne.s32.totalorder %s170, %s173
    %p179 = scmp.eq.s32.totalorder %s13, 0
    %p180 = por %p178, %p179
    %p181 = scmp.ne.s32.totalorder %s170, %s173
    %p182 = scmp.eq.s32.totalorder %s18, 1
    %p183 = por %p181, %p182
    %p184 = scmp.ne.s32.totalorder %s173, %s174
    %p185 = scmp.eq.s32.totalorder %s18, 0
    %p186 = por %p184, %p185
    %p187 = scmp.ne.s32.totalorder %s173, %s174
    %p188 = scmp.eq.s32.totalorder %s19, 1
    %p189 = por %p187, %p188
    %p191 = scmp.ne.s32.totalorder %s174, %s190
    %p192 = scmp.eq.s32.totalorder %s19, 0
    %p193 = por %p191, %p192
    %s194 = ssub.s32 %s20, %s32
    %s195 = ssub.s32 %s21, %s28
    %s196 = sor.u32 %s194, %s195
    %p197 = scmp.eq.s32.totalorder %s196, 0
    %s199 = sadd.s32 %s198, 1
    %s200 = scalar_select %p197, %s198, %s199
    %p203 = pneg %p197
    %p204 = scmp.eq.s32.totalorder %s13, 1
    %p205 = por %p203, %p204
    %p206 = scmp.ne.s32.totalorder %s198, %s201
    %p207 = scmp.eq.s32.totalorder %s13, 0
    %p208 = por %p206, %p207
    %p209 = scmp.ne.s32.totalorder %s198, %s201
    %p210 = scmp.eq.s32.totalorder %s18, 1
    %p211 = por %p209, %p210
    %p212 = scmp.ne.s32.totalorder %s201, %s202
    %p213 = scmp.eq.s32.totalorder %s18, 0
    %p214 = por %p212, %p213
    %p215 = scmp.ne.s32.totalorder %s201, %s202
    %p216 = scmp.eq.s32.totalorder %s19, 1
    %p217 = por %p215, %p216
    %p219 = scmp.ne.s32.totalorder %s202, %s218
    %p220 = scmp.eq.s32.totalorder %s19, 0
    %p221 = por %p219, %p220
    %p222 = scmp.le.s32.totalorder 1, %s13
    %p223 = scmp.lt.s32.totalorder %s13, 3
    %p224 = pnand %p222, %p223
    %p225 = pneg %p224
    // Predicated region
    $region9: #{basic_conv_forward.2} parent=5 // pred_check
      _
    $region10: #{basic_conv_forward.2} parent=5 // pred_check_branch
      %227 = sbr.rel (%p224) target = $region12
    $region11: #{basic_conv_forward.2} parent=5 // pred_region
      %s228 = ssub.s32 %s13, 1
      // Predicated region
      $region13: #{basic_conv_forward.2} parent=11 // pred_check
        %p229 = pneg %p130
      $region14: #{basic_conv_forward.2} parent=11 // pred_check_branch
        %231 = sbr.rel (%p229) target = $region16
      $region15: #{basic_conv_forward.2} parent=11 // pred_region
        _
      $region16: #{basic_conv_forward.2} parent=11 // pred_fallthru
        _
    $region12: #{basic_conv_forward.2} parent=5 // pred_fallthru
      _
    %p232 = scmp.lt.s32.totalorder %s13, 2
    // Predicated region
    $region17: #{basic_conv_forward.2} parent=5 // pred_check
      %p233 = pneg %p232
    $region18: #{basic_conv_forward.2} parent=5 // pred_check_branch
      %235 = sbr.rel (%p233) target = $region20
    $region19: #{basic_conv_forward.2} parent=5 // pred_region
      // Predicated region
      $region21: #{basic_conv_forward.2} parent=19 // pred_check
        %p236 = pneg %p47
      $region22: #{basic_conv_forward.2} parent=19 // pred_check_branch
        %238 = sbr.rel (%p236) target = $region24
      $region23: #{basic_conv_forward.2} parent=19 // pred_region
        %s239 = smul.u32 16, %s21
        %p240 = scmp.lt.s32.totalorder %s20, 1
        %s241 = scalar_select %p240, %s20, 1
        %p242 = scmp.lt.s32.totalorder %s239, 15
        %s243 = scalar_select %p242, %s239, 15
        %s244 = smul.addr %s243, 3
        %s245 = smul.addr %s241, 48
        %s246 = sadd.s32 %s244, %s245
        %s247 = smul.addr %s246, 4
        %s248 = scalar_lea.vmem %s0, %s247
        %s249 = smul.u32 16, %s21
      $region24: #{basic_conv_forward.2} parent=19 // pred_fallthru
        _
      // Predicated region
      $region25: #{basic_conv_forward.2} parent=19 // pred_check
        %p250 = pneg %p75
      $region26: #{basic_conv_forward.2} parent=19 // pred_check_branch
        %252 = sbr.rel (%p250) target = $region28
      $region27: #{basic_conv_forward.2} parent=19 // pred_region
        %s253 = smul.u32 16, %s21
        %p254 = scmp.lt.s32.totalorder %s20, 1
        %s255 = scalar_select %p254, %s20, 1
        %p256 = scmp.lt.s32.totalorder %s253, 15
        %s257 = scalar_select %p256, %s253, 15
        %s258 = smul.addr %s257, 3
        %s259 = smul.addr %s255, 48
        %s260 = sadd.s32 %s258, %s259
        %s261 = smul.addr %s260, 4
        %s262 = scalar_lea.vmem %s1, %s261
        %s263 = smul.u32 16, %s21
      $region28: #{basic_conv_forward.2} parent=19 // pred_fallthru
        _
      // Predicated region
      $region29: #{basic_conv_forward.2} parent=19 // pred_check
        %p264 = pneg %p103
      $region30: #{basic_conv_forward.2} parent=19 // pred_check_branch
        %266 = sbr.rel (%p264) target = $region32
      $region31: #{basic_conv_forward.2} parent=19 // pred_region
        %s267 = smul.u32 16, %s21
        %p268 = scmp.lt.s32.totalorder %s20, 1
        %s269 = scalar_select %p268, %s20, 1
        %p270 = scmp.lt.s32.totalorder %s267, 15
        %s271 = scalar_select %p270, %s267, 15
        %s272 = smul.addr %s271, 3
        %s273 = smul.addr %s269, 48
        %s274 = sadd.s32 %s272, %s273
        %s275 = smul.addr %s274, 4
        %s276 = scalar_lea.vmem %s2, %s275
        %s277 = smul.u32 16, %s21
      $region32: #{basic_conv_forward.2} parent=19 // pred_fallthru
        _
    $region20: #{basic_conv_forward.2} parent=5 // pred_fallthru
      _
    %p278 = scmp.le.s32.totalorder 1, %s13
    %p279 = scmp.lt.s32.totalorder %s13, 3
    %p280 = pnand %p278, %p279
    %p281 = pneg %p280
    // Predicated region
    $region33: #{basic_conv_forward.2} parent=5 // pred_check
      _
    $region34: #{basic_conv_forward.2} parent=5 // pred_check_branch
      %283 = sbr.rel (%p280) target = $region36
    $region35: #{basic_conv_forward.2} parent=5 // pred_region
      %s284 = ssub.s32 %s13, 1
      %s285 = smul.u32 16, %s23
      %p286 = scmp.lt.s32.totalorder %s22, 1
      %s287 = scalar_select %p286, %s22, 1
      %p288 = scmp.lt.s32.totalorder %s285, 15
      %s289 = scalar_select %p288, %s285, 15
      %s290 = smul.addr %s289, 3
      %s291 = smul.addr %s287, 48
      %s292 = sadd.s32 %s290, %s291
      %s293 = smul.addr %s292, 4
      %s294 = scalar_lea.vmem %s0, %s293
      %p295 = pneg %p53
      %p296 = pneg %p50
      %s297 = smul.u32 16, %s23
      %p298 = scmp.lt.s32.totalorder %s22, 1
      %s299 = scalar_select %p298, %s22, 1
      %p300 = scmp.lt.s32.totalorder %s297, 15
      %s301 = scalar_select %p300, %s297, 15
      %s302 = smul.addr %s301, 3
      %s303 = smul.addr %s299, 48
      %s304 = sadd.s32 %s302, %s303
      %s305 = smul.addr %s304, 4
      %s306 = scalar_lea.vmem %s1, %s305
      %p307 = pneg %p81
      %p308 = pneg %p78
      %s309 = smul.u32 16, %s23
      %p310 = scmp.lt.s32.totalorder %s22, 1
      %s311 = scalar_select %p310, %s22, 1
      %p312 = scmp.lt.s32.totalorder %s309, 15
      %s313 = scalar_select %p312, %s309, 15
      %s314 = smul.addr %s313, 3
      %s315 = smul.addr %s311, 48
      %s316 = sadd.s32 %s314, %s315
      %s317 = smul.addr %s316, 4
      %s318 = scalar_lea.vmem %s2, %s317
      %p319 = pneg %p109
      %p320 = pneg %p106
      %p321 = pneg %p130
      %p322 = pneg %p127
      %p323 = pneg %p158
      %p324 = pneg %p155
      %s325 = smul.u32 16, %s23
      %p326 = scmp.lt.s32.totalorder %s22, 1
      %s327 = scalar_select %p326, %s22, 1
      %p328 = scmp.lt.s32.totalorder %s325, 15
      %s329 = scalar_select %p328, %s325, 15
      %s330 = smul.addr %s329, 2
      %s331 = smul.addr %s327, 32
      %s332 = sadd.s32 %s330, %s331
      %s333 = smul.addr %s332, 4
      %s334 = scalar_lea.vmem %s4, %s333
      %p335 = pneg %p186
      %p336 = pneg %p183
      %p337 = scmp.lt.s32.totalorder %s22, 1
      %s338 = scalar_select %p337, %s22, 1
      %p339 = scmp.lt.s32.totalorder %s23, 0
      %s340 = scalar_select %p339, %s23, 0
      %s341 = sadd.s32 %s340, %s338
      %s342 = scalar_lea.vmem %s5, %s341
      %p343 = pneg %p214
      %p344 = pneg %p211
      %p345 = scmp.lt.s32.totalorder %s22, 1
      %s346 = scalar_select %p345, %s22, 1
      %p347 = scmp.lt.s32.totalorder %s23, 0
      %s348 = scalar_select %p347, %s23, 0
      %s349 = sadd.s32 %s348, %s346
      %s350 = scalar_lea.vmem %s6, %s349
      %s351 = smul.u32 16, %s23
      %p352 = scmp.lt.s32.totalorder %s22, 1
      %s353 = scalar_select %p352, %s22, 1
      %p354 = scmp.lt.s32.totalorder %s351, 15
      %s355 = scalar_select %p354, %s351, 15
      %s356 = smul.addr %s355, 3
      %s357 = smul.addr %s353, 48
      %s358 = sadd.s32 %s356, %s357
      %s359 = smul.addr %s358, 4
      %s360 = scalar_lea.vmem %s0, %s359
      %s361 = smul.u32 16, %s23
      %s362 = smul.u32 16, %s23
      %p363 = scmp.lt.s32.totalorder %s22, 1
      %s364 = scalar_select %p363, %s22, 1
      %p365 = scmp.lt.s32.totalorder %s362, 15
      %s366 = scalar_select %p365, %s362, 15
      %s367 = smul.addr %s366, 3
      %s368 = smul.addr %s364, 48
      %s369 = sadd.s32 %s367, %s368
      %s370 = smul.addr %s369, 4
      %s371 = scalar_lea.vmem %s1, %s370
      %s372 = smul.u32 16, %s23
      %s373 = smul.u32 16, %s23
      %p374 = scmp.lt.s32.totalorder %s22, 1
      %s375 = scalar_select %p374, %s22, 1
      %p376 = scmp.lt.s32.totalorder %s373, 15
      %s377 = scalar_select %p376, %s373, 15
      %s378 = smul.addr %s377, 3
      %s379 = smul.addr %s375, 48
      %s380 = sadd.s32 %s378, %s379
      %s381 = smul.addr %s380, 4
      %s382 = scalar_lea.vmem %s2, %s381
      %s383 = smul.u32 16, %s23
      %s384 = smul.u32 16, %s23
      %p385 = scmp.lt.s32.totalorder %s22, 1
      %s386 = scalar_select %p385, %s22, 1
      %p387 = scmp.lt.s32.totalorder %s384, 15
      %s388 = scalar_select %p387, %s384, 15
      %s389 = smul.addr %s388, 2
      %s390 = smul.addr %s386, 32
      %s391 = sadd.s32 %s389, %s390
      %s392 = smul.addr %s391, 4
      %s393 = scalar_lea.vmem %s4, %s392
      %s394 = smul.u32 16, %s23
      %p395 = scmp.lt.s32.totalorder %s22, 1
      %s396 = scalar_select %p395, %s22, 1
      %p397 = scmp.lt.s32.totalorder %s23, 0
      %s398 = scalar_select %p397, %s23, 0
      %s399 = sadd.s32 %s398, %s396
      %s400 = scalar_lea.vmem %s5, %s399
      %p401 = scmp.lt.s32.totalorder %s22, 1
      %s402 = scalar_select %p401, %s22, 1
      %p403 = scmp.lt.s32.totalorder %s23, 0
      %s404 = scalar_select %p403, %s23, 0
      %s405 = sadd.s32 %s404, %s402
      %s406 = scalar_lea.vmem %s6, %s405
      %v408 = vld [vmem:[%s360] sm:$0xf]
      %v409 = vld [vmem:[%s360 + $0x4] sm:$0xf]
      %v410 = vld [vmem:[%s360 + $0xc] sm:$0xf]
      %v411 = vld [vmem:[%s360 + $0x10] sm:$0xf]
      %v412 = vld [vmem:[%s360 + $0x18] sm:$0xf]
      %v413 = vld [vmem:[%s360 + $0x1c] sm:$0xf]
      %v414 = vld [vmem:[%s360 + $0x24] sm:$0xf]
      %v415 = vld [vmem:[%s360 + $0x28] sm:$0xf]
      %v416 = vld [vmem:[%s360 + $0x30] sm:$0xf]
      %v417 = vld [vmem:[%s360 + $0x34] sm:$0xf]
      %v418 = vld [vmem:[%s360 + $0x3c] sm:$0xf]
      %v419 = vld [vmem:[%s360 + $0x40] sm:$0xf]
      %v420 = vld [vmem:[%s360 + $0x48] sm:$0xf]
      %v421 = vld [vmem:[%s360 + $0x4c] sm:$0xf]
      %v422 = vld [vmem:[%s360 + $0x54] sm:$0xf]
      %v423 = vld [vmem:[%s360 + $0x58] sm:$0xf]
      %v424 = vld [vmem:[%s360 + $0x60] sm:$0xf]
      %v425 = vld [vmem:[%s360 + $0x64] sm:$0xf]
      %v426 = vld [vmem:[%s360 + $0x6c] sm:$0xf]
      %v427 = vld [vmem:[%s360 + $0x70] sm:$0xf]
      %v428 = vld [vmem:[%s360 + $0x78] sm:$0xf]
      %v429 = vld [vmem:[%s360 + $0x7c] sm:$0xf]
      %v430 = vld [vmem:[%s360 + $0x84] sm:$0xf]
      %v431 = vld [vmem:[%s360 + $0x88] sm:$0xf]
      %v432 = vld [vmem:[%s360 + $0x90] sm:$0xf]
      %v433 = vld [vmem:[%s360 + $0x94] sm:$0xf]
      %v434 = vld [vmem:[%s360 + $0x9c] sm:$0xf]
      %v435 = vld [vmem:[%s360 + $0xa0] sm:$0xf]
      %v436 = vld [vmem:[%s360 + $0xa8] sm:$0xf]
      %v437 = vld [vmem:[%s360 + $0xac] sm:$0xf]
      %v438 = vld [vmem:[%s360 + $0xb4] sm:$0xf]
      %v439 = vld [vmem:[%s360 + $0xb8] sm:$0xf]
      %vm440 = vcmask 27648
      %441 = vst.msk [vmem:[#allocation2] sm:$0xf] %vm440, %v408
      %442 = vst.msk [vmem:[#allocation2 + $0x4] sm:$0xf] %vm440, %v409
      %443 = vst.msk [vmem:[#allocation2 + $0x8] sm:$0xf] %vm440, %v410
      %444 = vst.msk [vmem:[#allocation2 + $0xc] sm:$0xf] %vm440, %v411
      %445 = vst.msk [vmem:[#allocation2 + $0x10] sm:$0xf] %vm440, %v412
      %446 = vst.msk [vmem:[#allocation2 + $0x14] sm:$0xf] %vm440, %v413
      %447 = vst.msk [vmem:[#allocation2 + $0x18] sm:$0xf] %vm440, %v414
      %448 = vst.msk [vmem:[#allocation2 + $0x1c] sm:$0xf] %vm440, %v415
      %449 = vst.msk [vmem:[#allocation2 + $0x20] sm:$0xf] %vm440, %v416
      %450 = vst.msk [vmem:[#allocation2 + $0x24] sm:$0xf] %vm440, %v417
      %451 = vst.msk [vmem:[#allocation2 + $0x28] sm:$0xf] %vm440, %v418
      %452 = vst.msk [vmem:[#allocation2 + $0x2c] sm:$0xf] %vm440, %v419
      %453 = vst.msk [vmem:[#allocation2 + $0x30] sm:$0xf] %vm440, %v420
      %454 = vst.msk [vmem:[#allocation2 + $0x34] sm:$0xf] %vm440, %v421
      %455 = vst.msk [vmem:[#allocation2 + $0x38] sm:$0xf] %vm440, %v422
      %456 = vst.msk [vmem:[#allocation2 + $0x3c] sm:$0xf] %vm440, %v423
      %457 = vst.msk [vmem:[#allocation2 + $0x40] sm:$0xf] %vm440, %v424
      %458 = vst.msk [vmem:[#allocation2 + $0x44] sm:$0xf] %vm440, %v425
      %459 = vst.msk [vmem:[#allocation2 + $0x48] sm:$0xf] %vm440, %v426
      %460 = vst.msk [vmem:[#allocation2 + $0x4c] sm:$0xf] %vm440, %v427
      %461 = vst.msk [vmem:[#allocation2 + $0x50] sm:$0xf] %vm440, %v428
      %462 = vst.msk [vmem:[#allocation2 + $0x54] sm:$0xf] %vm440, %v429
      %463 = vst.msk [vmem:[#allocation2 + $0x58] sm:$0xf] %vm440, %v430
      %464 = vst.msk [vmem:[#allocation2 + $0x5c] sm:$0xf] %vm440, %v431
      %465 = vst.msk [vmem:[#allocation2 + $0x60] sm:$0xf] %vm440, %v432
      %466 = vst.msk [vmem:[#allocation2 + $0x64] sm:$0xf] %vm440, %v433
      %467 = vst.msk [vmem:[#allocation2 + $0x68] sm:$0xf] %vm440, %v434
      %468 = vst.msk [vmem:[#allocation2 + $0x6c] sm:$0xf] %vm440, %v435
      %469 = vst.msk [vmem:[#allocation2 + $0x70] sm:$0xf] %vm440, %v436
      %470 = vst.msk [vmem:[#allocation2 + $0x74] sm:$0xf] %vm440, %v437
      %471 = vst.msk [vmem:[#allocation2 + $0x78] sm:$0xf] %vm440, %v438
      %472 = vst.msk [vmem:[#allocation2 + $0x7c] sm:$0xf] %vm440, %v439
      %v473 = vld [vmem:[%s360] sm:$0xf]
      %v474 = vld [vmem:[%s360 + $0x4] sm:$0xf]
      %v475 = vld [vmem:[%s360 + $0x8] sm:$0x1]
      %v476 = vld [vmem:[%s360 + $0xc] sm:$0xf]
      %v477 = vld [vmem:[%s360 + $0x10] sm:$0xf]
      %v478 = vld [vmem:[%s360 + $0x14] sm:$0x1]
      %v479 = vld [vmem:[%s360 + $0x18] sm:$0xf]
      %v480 = vld [vmem:[%s360 + $0x1c] sm:$0xf]
      %v481 = vld [vmem:[%s360 + $0x20] sm:$0x1]
      %v482 = vld [vmem:[%s360 + $0x24] sm:$0xf]
      %v483 = vld [vmem:[%s360 + $0x28] sm:$0xf]
      %v484 = vld [vmem:[%s360 + $0x2c] sm:$0x1]
      %v485 = vld [vmem:[%s360 + $0x30] sm:$0xf]
      %v486 = vld [vmem:[%s360 + $0x34] sm:$0xf]
      %v487 = vld [vmem:[%s360 + $0x38] sm:$0x1]
      %v488 = vld [vmem:[%s360 + $0x3c] sm:$0xf]
      %v489 = vld [vmem:[%s360 + $0x40] sm:$0xf]
      %v490 = vld [vmem:[%s360 + $0x44] sm:$0x1]
      %v491 = vld [vmem:[%s360 + $0x48] sm:$0xf]
      %v492 = vld [vmem:[%s360 + $0x4c] sm:$0xf]
      %v493 = vld [vmem:[%s360 + $0x50] sm:$0x1]
      %v494 = vld [vmem:[%s360 + $0x54] sm:$0xf]
      %v495 = vld [vmem:[%s360 + $0x58] sm:$0xf]
      %v496 = vld [vmem:[%s360 + $0x5c] sm:$0x1]
      %v497 = vld [vmem:[%s360 + $0x60] sm:$0xf]
      %v498 = vld [vmem:[%s360 + $0x64] sm:$0xf]
      %v499 = vld [vmem:[%s360 + $0x68] sm:$0x1]
      %v500 = vld [vmem:[%s360 + $0x6c] sm:$0xf]
      %v501 = vld [vmem:[%s360 + $0x70] sm:$0xf]
      %v502 = vld [vmem:[%s360 + $0x74] sm:$0x1]
      %v503 = vld [vmem:[%s360 + $0x78] sm:$0xf]
      %v504 = vld [vmem:[%s360 + $0x7c] sm:$0xf]
      %v505 = vld [vmem:[%s360 + $0x80] sm:$0x1]
      %v506 = vld [vmem:[%s360 + $0x84] sm:$0xf]
      %v507 = vld [vmem:[%s360 + $0x88] sm:$0xf]
      %v508 = vld [vmem:[%s360 + $0x8c] sm:$0x1]
      %v509 = vld [vmem:[%s360 + $0x90] sm:$0xf]
      %v510 = vld [vmem:[%s360 + $0x94] sm:$0xf]
      %v511 = vld [vmem:[%s360 + $0x98] sm:$0x1]
      %v512 = vld [vmem:[%s360 + $0x9c] sm:$0xf]
      %v513 = vld [vmem:[%s360 + $0xa0] sm:$0xf]
      %v514 = vld [vmem:[%s360 + $0xa4] sm:$0x1]
      %v515 = vld [vmem:[%s360 + $0xa8] sm:$0xf]
      %v516 = vld [vmem:[%s360 + $0xac] sm:$0xf]
      %v517 = vld [vmem:[%s360 + $0xb0] sm:$0x1]
      %v518 = vld [vmem:[%s360 + $0xb4] sm:$0xf]
      %v519 = vld [vmem:[%s360 + $0xb8] sm:$0xf]
      %v520 = vld [vmem:[%s360 + $0xbc] sm:$0x1]
      %vm521 = vsmask.f32 3328
      %vm522 = vsmask.f32 7440
      %vm523 = vmor %vm521, %vm522
      %v525 = vshrl.u32 %v473, 16
      %v527 = vrot.slane %v525, 4
      %v528 = vshll.u32 %v473, 16
      %v530 = vrot.slane %v528, 5
      %v531 = vor.u32 %v527, %v530
      %v532 = vrot.slane %v531, 4
      %v534 = vshll.u32 %v474, 16
      %v536 = vrot.slane %v534, 5
      %v537 = vsel %vm523, %v532, %v536
      %v538 = vshrl.u32 %v474, 16
      %v540 = vrot.slane %v538, 4
      %v541 = vor.u32 %v540, %v536
      %v542 = vrot.slane %v541, 4
      %v544 = vshll.u32 %v475, 16
      %v546 = vrot.slane %v544, 5
      %v547 = vsel %vm523, %v542, %v546
      %v549 = vshrl.u32 %v476, 16
      %v551 = vrot.slane %v549, 4
      %v552 = vshll.u32 %v476, 16
      %v554 = vrot.slane %v552, 5
      %v555 = vor.u32 %v551, %v554
      %v556 = vrot.slane %v555, 4
      %v558 = vshll.u32 %v477, 16
      %v560 = vrot.slane %v558, 5
      %v561 = vsel %vm523, %v556, %v560
      %v562 = vshrl.u32 %v477, 16
      %v564 = vrot.slane %v562, 4
      %v565 = vor.u32 %v564, %v560
      %v566 = vrot.slane %v565, 4
      %v568 = vshll.u32 %v478, 16
      %v570 = vrot.slane %v568, 5
      %v571 = vsel %vm523, %v566, %v570
      %v573 = vshrl.u32 %v479, 16
      %v575 = vrot.slane %v573, 4
      %v576 = vshll.u32 %v479, 16
      %v578 = vrot.slane %v576, 5
      %v579 = vor.u32 %v575, %v578
      %v580 = vrot.slane %v579, 4
      %v582 = vshll.u32 %v480, 16
      %v584 = vrot.slane %v582, 5
      %v585 = vsel %vm523, %v580, %v584
      %v586 = vshrl.u32 %v480, 16
      %v588 = vrot.slane %v586, 4
      %v589 = vor.u32 %v588, %v584
      %v590 = vrot.slane %v589, 4
      %v592 = vshll.u32 %v481, 16
      %v594 = vrot.slane %v592, 5
      %v595 = vsel %vm523, %v590, %v594
      %v597 = vshrl.u32 %v482, 16
      %v599 = vrot.slane %v597, 4
      %v600 = vshll.u32 %v482, 16
      %v602 = vrot.slane %v600, 5
      %v603 = vor.u32 %v599, %v602
      %v604 = vrot.slane %v603, 4
      %v606 = vshll.u32 %v483, 16
      %v608 = vrot.slane %v606, 5
      %v609 = vsel %vm523, %v604, %v608
      %v610 = vshrl.u32 %v483, 16
      %v612 = vrot.slane %v610, 4
      %v613 = vor.u32 %v612, %v608
      %v614 = vrot.slane %v613, 4
      %v616 = vshll.u32 %v484, 16
      %v618 = vrot.slane %v616, 5
      %v619 = vsel %vm523, %v614, %v618
      %v621 = vshrl.u32 %v485, 16
      %v623 = vrot.slane %v621, 4
      %v624 = vshll.u32 %v485, 16
      %v626 = vrot.slane %v624, 5
      %v627 = vor.u32 %v623, %v626
      %v628 = vrot.slane %v627, 4
      %v630 = vshll.u32 %v486, 16
      %v632 = vrot.slane %v630, 5
      %v633 = vsel %vm523, %v628, %v632
      %v634 = vshrl.u32 %v486, 16
      %v636 = vrot.slane %v634, 4
      %v637 = vor.u32 %v636, %v632
      %v638 = vrot.slane %v637, 4
      %v640 = vshll.u32 %v487, 16
      %v642 = vrot.slane %v640, 5
      %v643 = vsel %vm523, %v638, %v642
      %v645 = vshrl.u32 %v488, 16
      %v647 = vrot.slane %v645, 4
      %v648 = vshll.u32 %v488, 16
      %v650 = vrot.slane %v648, 5
      %v651 = vor.u32 %v647, %v650
      %v652 = vrot.slane %v651, 4
      %v654 = vshll.u32 %v489, 16
      %v656 = vrot.slane %v654, 5
      %v657 = vsel %vm523, %v652, %v656
      %v658 = vshrl.u32 %v489, 16
      %v660 = vrot.slane %v658, 4
      %v661 = vor.u32 %v660, %v656
      %v662 = vrot.slane %v661, 4
      %v664 = vshll.u32 %v490, 16
      %v666 = vrot.slane %v664, 5
      %v667 = vsel %vm523, %v662, %v666
      %v669 = vshrl.u32 %v491, 16
      %v671 = vrot.slane %v669, 4
      %v672 = vshll.u32 %v491, 16
      %v674 = vrot.slane %v672, 5
      %v675 = vor.u32 %v671, %v674
      %v676 = vrot.slane %v675, 4
      %v678 = vshll.u32 %v492, 16
      %v680 = vrot.slane %v678, 5
      %v681 = vsel %vm523, %v676, %v680
      %v682 = vshrl.u32 %v492, 16
      %v684 = vrot.slane %v682, 4
      %v685 = vor.u32 %v684, %v680
      %v686 = vrot.slane %v685, 4
      %v688 = vshll.u32 %v493, 16
      %v690 = vrot.slane %v688, 5
      %v691 = vsel %vm523, %v686, %v690
      %v693 = vshrl.u32 %v494, 16
      %v695 = vrot.slane %v693, 4
      %v696 = vshll.u32 %v494, 16
      %v698 = vrot.slane %v696, 5
      %v699 = vor.u32 %v695, %v698
      %v700 = vrot.slane %v699, 4
      %v702 = vshll.u32 %v495, 16
      %v704 = vrot.slane %v702, 5
      %v705 = vsel %vm523, %v700, %v704
      %v706 = vshrl.u32 %v495, 16
      %v708 = vrot.slane %v706, 4
      %v709 = vor.u32 %v708, %v704
      %v710 = vrot.slane %v709, 4
      %v712 = vshll.u32 %v496, 16
      %v714 = vrot.slane %v712, 5
      %v715 = vsel %vm523, %v710, %v714
      %v717 = vshrl.u32 %v497, 16
      %v719 = vrot.slane %v717, 4
      %v720 = vshll.u32 %v497, 16
      %v722 = vrot.slane %v720, 5
      %v723 = vor.u32 %v719, %v722
      %v724 = vrot.slane %v723, 4
      %v726 = vshll.u32 %v498, 16
      %v728 = vrot.slane %v726, 5
      %v729 = vsel %vm523, %v724, %v728
      %v730 = vshrl.u32 %v498, 16
      %v732 = vrot.slane %v730, 4
      %v733 = vor.u32 %v732, %v728
      %v734 = vrot.slane %v733, 4
      %v736 = vshll.u32 %v499, 16
      %v738 = vrot.slane %v736, 5
      %v739 = vsel %vm523, %v734, %v738
      %v741 = vshrl.u32 %v500, 16
      %v743 = vrot.slane %v741, 4
      %v744 = vshll.u32 %v500, 16
      %v746 = vrot.slane %v744, 5
      %v747 = vor.u32 %v743, %v746
      %v748 = vrot.slane %v747, 4
      %v750 = vshll.u32 %v501, 16
      %v752 = vrot.slane %v750, 5
      %v753 = vsel %vm523, %v748, %v752
      %v754 = vshrl.u32 %v501, 16
      %v756 = vrot.slane %v754, 4
      %v757 = vor.u32 %v756, %v752
      %v758 = vrot.slane %v757, 4
      %v760 = vshll.u32 %v502, 16
      %v762 = vrot.slane %v760, 5
      %v763 = vsel %vm523, %v758, %v762
      %v765 = vshrl.u32 %v503, 16
      %v767 = vrot.slane %v765, 4
      %v768 = vshll.u32 %v503, 16
      %v770 = vrot.slane %v768, 5
      %v771 = vor.u32 %v767, %v770
      %v772 = vrot.slane %v771, 4
      %v774 = vshll.u32 %v504, 16
      %v776 = vrot.slane %v774, 5
      %v777 = vsel %vm523, %v772, %v776
      %v778 = vshrl.u32 %v504, 16
      %v780 = vrot.slane %v778, 4
      %v781 = vor.u32 %v780, %v776
      %v782 = vrot.slane %v781, 4
      %v784 = vshll.u32 %v505, 16
      %v786 = vrot.slane %v784, 5
      %v787 = vsel %vm523, %v782, %v786
      %v789 = vshrl.u32 %v506, 16
      %v791 = vrot.slane %v789, 4
      %v792 = vshll.u32 %v506, 16
      %v794 = vrot.slane %v792, 5
      %v795 = vor.u32 %v791, %v794
      %v796 = vrot.slane %v795, 4
      %v798 = vshll.u32 %v507, 16
      %v800 = vrot.slane %v798, 5
      %v801 = vsel %vm523, %v796, %v800
      %v802 = vshrl.u32 %v507, 16
      %v804 = vrot.slane %v802, 4
      %v805 = vor.u32 %v804, %v800
      %v806 = vrot.slane %v805, 4
      %v808 = vshll.u32 %v508, 16
      %v810 = vrot.slane %v808, 5
      %v811 = vsel %vm523, %v806, %v810
      %v813 = vshrl.u32 %v509, 16
      %v815 = vrot.slane %v813, 4
      %v816 = vshll.u32 %v509, 16
      %v818 = vrot.slane %v816, 5
      %v819 = vor.u32 %v815, %v818
      %v820 = vrot.slane %v819, 4
      %v822 = vshll.u32 %v510, 16
      %v824 = vrot.slane %v822, 5
      %v825 = vsel %vm523, %v820, %v824
      %v826 = vshrl.u32 %v510, 16
      %v828 = vrot.slane %v826, 4
      %v829 = vor.u32 %v828, %v824
      %v830 = vrot.slane %v829, 4
      %v832 = vshll.u32 %v511, 16
      %v834 = vrot.slane %v832, 5
      %v835 = vsel %vm523, %v830, %v834
      %v837 = vshrl.u32 %v512, 16
      %v839 = vrot.slane %v837, 4
      %v840 = vshll.u32 %v512, 16
      %v842 = vrot.slane %v840, 5
      %v843 = vor.u32 %v839, %v842
      %v844 = vrot.slane %v843, 4
      %v846 = vshll.u32 %v513, 16
      %v848 = vrot.slane %v846, 5
      %v849 = vsel %vm523, %v844, %v848
      %v850 = vshrl.u32 %v513, 16
      %v852 = vrot.slane %v850, 4
      %v853 = vor.u32 %v852, %v848
      %v854 = vrot.slane %v853, 4
      %v856 = vshll.u32 %v514, 16
      %v858 = vrot.slane %v856, 5
      %v859 = vsel %vm523, %v854, %v858
      %v861 = vshrl.u32 %v515, 16
      %v863 = vrot.slane %v861, 4
      %v864 = vshll.u32 %v515, 16
      %v866 = vrot.slane %v864, 5
      %v867 = vor.u32 %v863, %v866
      %v868 = vrot.slane %v867, 4
      %v870 = vshll.u32 %v516, 16
      %v872 = vrot.slane %v870, 5
      %v873 = vsel %vm523, %v868, %v872
      %v874 = vshrl.u32 %v516, 16
      %v876 = vrot.slane %v874, 4
      %v877 = vor.u32 %v876, %v872
      %v878 = vrot.slane %v877, 4
      %v880 = vshll.u32 %v517, 16
      %v882 = vrot.slane %v880, 5
      %v883 = vsel %vm523, %v878, %v882
      %v885 = vshrl.u32 %v518, 16
      %v887 = vrot.slane %v885, 4
      %v888 = vshll.u32 %v518, 16
      %v890 = vrot.slane %v888, 5
      %v891 = vor.u32 %v887, %v890
      %v892 = vrot.slane %v891, 4
      %v894 = vshll.u32 %v519, 16
      %v896 = vrot.slane %v894, 5
      %v897 = vsel %vm523, %v892, %v896
      %v898 = vshrl.u32 %v519, 16
      %v900 = vrot.slane %v898, 4
      %v901 = vor.u32 %v900, %v896
      %v902 = vrot.slane %v901, 4
      %v904 = vshll.u32 %v520, 16
      %v906 = vrot.slane %v904, 5
      %v907 = vsel %vm523, %v902, %v906
      %908 = vrot.lane.b32.xlu0 %v537, 4
      %v909 = vpop.permute.xlu0 %908
      %910 = vrot.lane.b32.xlu0 %v547, 4
      %v911 = vpop.permute.xlu0 %910
      %912 = vrot.lane.b32.xlu0 %v561, 4
      %v913 = vpop.permute.xlu0 %912
      %914 = vrot.lane.b32.xlu0 %v571, 4
      %v915 = vpop.permute.xlu0 %914
      %916 = vrot.lane.b32.xlu0 %v585, 4
      %v917 = vpop.permute.xlu0 %916
      %918 = vrot.lane.b32.xlu0 %v595, 4
      %v919 = vpop.permute.xlu0 %918
      %920 = vrot.lane.b32.xlu0 %v609, 4
      %v921 = vpop.permute.xlu0 %920
      %922 = vrot.lane.b32.xlu0 %v619, 4
      %v923 = vpop.permute.xlu0 %922
      %924 = vrot.lane.b32.xlu0 %v633, 4
      %v925 = vpop.permute.xlu0 %924
      %926 = vrot.lane.b32.xlu0 %v643, 4
      %v927 = vpop.permute.xlu0 %926
      %928 = vrot.lane.b32.xlu0 %v657, 4
      %v929 = vpop.permute.xlu0 %928
      %930 = vrot.lane.b32.xlu0 %v667, 4
      %v931 = vpop.permute.xlu0 %930
      %932 = vrot.lane.b32.xlu0 %v681, 4
      %v933 = vpop.permute.xlu0 %932
      %934 = vrot.lane.b32.xlu0 %v691, 4
      %v935 = vpop.permute.xlu0 %934
      %936 = vrot.lane.b32.xlu0 %v705, 4
      %v937 = vpop.permute.xlu0 %936
      %938 = vrot.lane.b32.xlu0 %v715, 4
      %v939 = vpop.permute.xlu0 %938
      %940 = vrot.lane.b32.xlu0 %v729, 4
      %v941 = vpop.permute.xlu0 %940
      %942 = vrot.lane.b32.xlu0 %v739, 4
      %v943 = vpop.permute.xlu0 %942
      %944 = vrot.lane.b32.xlu0 %v753, 4
      %v945 = vpop.permute.xlu0 %944
      %946 = vrot.lane.b32.xlu0 %v763, 4
      %v947 = vpop.permute.xlu0 %946
      %948 = vrot.lane.b32.xlu0 %v777, 4
      %v949 = vpop.permute.xlu0 %948
      %950 = vrot.lane.b32.xlu0 %v787, 4
      %v951 = vpop.permute.xlu0 %950
      %952 = vrot.lane.b32.xlu0 %v801, 4
      %v953 = vpop.permute.xlu0 %952
      %954 = vrot.lane.b32.xlu0 %v811, 4
      %v955 = vpop.permute.xlu0 %954
      %956 = vrot.lane.b32.xlu0 %v825, 4
      %v957 = vpop.permute.xlu0 %956
      %958 = vrot.lane.b32.xlu0 %v835, 4
      %v959 = vpop.permute.xlu0 %958
      %960 = vrot.lane.b32.xlu0 %v849, 4
      %v961 = vpop.permute.xlu0 %960
      %962 = vrot.lane.b32.xlu0 %v859, 4
      %v963 = vpop.permute.xlu0 %962
      %964 = vrot.lane.b32.xlu0 %v873, 4
      %v965 = vpop.permute.xlu0 %964
      %966 = vrot.lane.b32.xlu0 %v883, 4
      %v967 = vpop.permute.xlu0 %966
      %968 = vrot.lane.b32.xlu0 %v897, 4
      %v969 = vpop.permute.xlu0 %968
      %970 = vrot.lane.b32.xlu0 %v907, 4
      %v971 = vpop.permute.xlu0 %970
      %vm1004 = vcmask 60448
      %1005 = vst.msk [vmem:[#allocation2] sm:$0xf] %vm1004, %v909
      %1006 = vst.msk [vmem:[#allocation2 + $0x4] sm:$0xf] %vm1004, %v911
      %1007 = vst.msk [vmem:[#allocation2 + $0x8] sm:$0xf] %vm1004, %v913
      %1008 = vst.msk [vmem:[#allocation2 + $0xc] sm:$0xf] %vm1004, %v915
      %1009 = vst.msk [vmem:[#allocation2 + $0x10] sm:$0xf] %vm1004, %v917
      %1010 = vst.msk [vmem:[#allocation2 + $0x14] sm:$0xf] %vm1004, %v919
      %1011 = vst.msk [vmem:[#allocation2 + $0x18] sm:$0xf] %vm1004, %v921
      %1012 = vst.msk [vmem:[#allocation2 + $0x1c] sm:$0xf] %vm1004, %v923
      %1013 = vst.msk [vmem:[#allocation2 + $0x20] sm:$0xf] %vm1004, %v925
      %1014 = vst.msk [vmem:[#allocation2 + $0x24] sm:$0xf] %vm1004, %v927
      %1015 = vst.msk [vmem:[#allocation2 + $0x28] sm:$0xf] %vm1004, %v929
      %1016 = vst.msk [vmem:[#allocation2 + $0x2c] sm:$0xf] %vm1004, %v931
      %1017 = vst.msk [vmem:[#allocation2 + $0x30] sm:$0xf] %vm1004, %v933
      %1018 = vst.msk [vmem:[#allocation2 + $0x34] sm:$0xf] %vm1004, %v935
      %1019 = vst.msk [vmem:[#allocation2 + $0x38] sm:$0xf] %vm1004, %v937
      %1020 = vst.msk [vmem:[#allocation2 + $0x3c] sm:$0xf] %vm1004, %v939
      %1021 = vst.msk [vmem:[#allocation2 + $0x40] sm:$0xf] %vm1004, %v941
      %1022 = vst.msk [vmem:[#allocation2 + $0x44] sm:$0xf] %vm1004, %v943
      %1023 = vst.msk [vmem:[#allocation2 + $0x48] sm:$0xf] %vm1004, %v945
      %1024 = vst.msk [vmem:[#allocation2 + $0x4c] sm:$0xf] %vm1004, %v947
      %1025 = vst.msk [vmem:[#allocation2 + $0x50] sm:$0xf] %vm1004, %v949
      %1026 = vst.msk [vmem:[#allocation2 + $0x54] sm:$0xf] %vm1004, %v951
      %1027 = vst.msk [vmem:[#allocation2 + $0x58] sm:$0xf] %vm1004, %v953
      %1028 = vst.msk [vmem:[#allocation2 + $0x5c] sm:$0xf] %vm1004, %v955
      %1029 = vst.msk [vmem:[#allocation2 + $0x60] sm:$0xf] %vm1004, %v957
      %1030 = vst.msk [vmem:[#allocation2 + $0x64] sm:$0xf] %vm1004, %v959
      %1031 = vst.msk [vmem:[#allocation2 + $0x68] sm:$0xf] %vm1004, %v961
      %1032 = vst.msk [vmem:[#allocation2 + $0x6c] sm:$0xf] %vm1004, %v963
      %1033 = vst.msk [vmem:[#allocation2 + $0x70] sm:$0xf] %vm1004, %v965
      %1034 = vst.msk [vmem:[#allocation2 + $0x74] sm:$0xf] %vm1004, %v967
      %1035 = vst.msk [vmem:[#allocation2 + $0x78] sm:$0xf] %vm1004, %v969
      %1036 = vst.msk [vmem:[#allocation2 + $0x7c] sm:$0xf] %vm1004, %v971
      %v1037 = vld [vmem:[%s360] sm:$0xe]
      %v1038 = vld [vmem:[%s360 + $0x4] sm:$0xf]
      %v1039 = vld [vmem:[%s360 + $0x8] sm:$0x1]
      %v1040 = vld [vmem:[%s360 + $0xc] sm:$0xe]
      %v1041 = vld [vmem:[%s360 + $0x10] sm:$0xf]
      %v1042 = vld [vmem:[%s360 + $0x14] sm:$0x1]
      %v1043 = vld [vmem:[%s360 + $0x18] sm:$0xe]
      %v1044 = vld [vmem:[%s360 + $0x1c] sm:$0xf]
      %v1045 = vld [vmem:[%s360 + $0x20] sm:$0x1]
      %v1046 = vld [vmem:[%s360 + $0x24] sm:$0xe]
      %v1047 = vld [vmem:[%s360 + $0x28] sm:$0xf]
      %v1048 = vld [vmem:[%s360 + $0x2c] sm:$0x1]
      %v1049 = vld [vmem:[%s360 + $0x30] sm:$0xe]
      %v1050 = vld [vmem:[%s360 + $0x34] sm:$0xf]
      %v1051 = vld [vmem:[%s360 + $0x38] sm:$0x1]
      %v1052 = vld [vmem:[%s360 + $0x3c] sm:$0xe]
      %v1053 = vld [vmem:[%s360 + $0x40] sm:$0xf]
      %v1054 = vld [vmem:[%s360 + $0x44] sm:$0x1]
      %v1055 = vld [vmem:[%s360 + $0x48] sm:$0xe]
      %v1056 = vld [vmem:[%s360 + $0x4c] sm:$0xf]
      %v1057 = vld [vmem:[%s360 + $0x50] sm:$0x1]
      %v1058 = vld [vmem:[%s360 + $0x54] sm:$0xe]
      %v1059 = vld [vmem:[%s360 + $0x58] sm:$0xf]
      %v1060 = vld [vmem:[%s360 + $0x5c] sm:$0x1]
      %v1061 = vld [vmem:[%s360 + $0x60] sm:$0xe]
      %v1062 = vld [vmem:[%s360 + $0x64] sm:$0xf]
      %v1063 = vld [vmem:[%s360 + $0x68] sm:$0x1]
      %v1064 = vld [vmem:[%s360 + $0x6c] sm:$0xe]
      %v1065 = vld [vmem:[%s360 + $0x70] sm:$0xf]
      %v1066 = vld [vmem:[%s360 + $0x74] sm:$0x1]
      %v1067 = vld [vmem:[%s360 + $0x78] sm:$0xe]
      %v1068 = vld [vmem:[%s360 + $0x7c] sm:$0xf]
      %v1069 = vld [vmem:[%s360 + $0x80] sm:$0x1]
      %v1070 = vld [vmem:[%s360 + $0x84] sm:$0xe]
      %v1071 = vld [vmem:[%s360 + $0x88] sm:$0xf]
      %v1072 = vld [vmem:[%s360 + $0x8c] sm:$0x1]
      %v1073 = vld [vmem:[%s360 + $0x90] sm:$0xe]
      %v1074 = vld [vmem:[%s360 + $0x94] sm:$0xf]
      %v1075 = vld [vmem:[%s360 + $0x98] sm:$0x1]
      %v1076 = vld [vmem:[%s360 + $0x9c] sm:$0xe]
      %v1077 = vld [vmem:[%s360 + $0xa0] sm:$0xf]
      %v1078 = vld [vmem:[%s360 + $0xa4] sm:$0x1]
      %v1079 = vld [vmem:[%s360 + $0xa8] sm:$0xe]
      %v1080 = vld [vmem:[%s360 + $0xac] sm:$0xf]
      %v1081 = vld [vmem:[%s360 + $0xb0] sm:$0x1]
      %v1082 = vld [vmem:[%s360 + $0xb4] sm:$0xe]
      %v1083 = vld [vmem:[%s360 + $0xb8] sm:$0xf]
      %v1084 = vld [vmem:[%s360 + $0xbc] sm:$0x1]
      %vm1133 = vcmask 1042432
      %vm1134 = vcmask 1046532
      %vm1135 = vmor %vm1133, %vm1134
      %v1136 = vrot.slane %v1037, 5
      %v1137 = vrot.slane %v1136, 4
      %v1138 = vrot.slane %v1038, 5
      %v1139 = vsel %vm1135, %v1137, %v1138
      %v1140 = vrot.slane %v1138, 4
      %v1141 = vrot.slane %v1039, 5
      %v1142 = vsel %vm1135, %v1140, %v1141
      %v1143 = vrot.slane %v1040, 5
      %v1144 = vrot.slane %v1143, 4
      %v1145 = vrot.slane %v1041, 5
      %v1146 = vsel %vm1135, %v1144, %v1145
      %v1147 = vrot.slane %v1145, 4
      %v1148 = vrot.slane %v1042, 5
      %v1149 = vsel %vm1135, %v1147, %v1148
      %v1150 = vrot.slane %v1043, 5
      %v1151 = vrot.slane %v1150, 4
      %v1152 = vrot.slane %v1044, 5
      %v1153 = vsel %vm1135, %v1151, %v1152
      %v1154 = vrot.slane %v1152, 4
      %v1155 = vrot.slane %v1045, 5
      %v1156 = vsel %vm1135, %v1154, %v1155
      %v1157 = vrot.slane %v1046, 5
      %v1158 = vrot.slane %v1157, 4
      %v1159 = vrot.slane %v1047, 5
      %v1160 = vsel %vm1135, %v1158, %v1159
      %v1161 = vrot.slane %v1159, 4
      %v1162 = vrot.slane %v1048, 5
      %v1163 = vsel %vm1135, %v1161, %v1162
      %v1164 = vrot.slane %v1049, 5
      %v1165 = vrot.slane %v1164, 4
      %v1166 = vrot.slane %v1050, 5
      %v1167 = vsel %vm1135, %v1165, %v1166
      %v1168 = vrot.slane %v1166, 4
      %v1169 = vrot.slane %v1051, 5
      %v1170 = vsel %vm1135, %v1168, %v1169
      %v1171 = vrot.slane %v1052, 5
      %v1172 = vrot.slane %v1171, 4
      %v1173 = vrot.slane %v1053, 5
      %v1174 = vsel %vm1135, %v1172, %v1173
      %v1175 = vrot.slane %v1173, 4
      %v1176 = vrot.slane %v1054, 5
      %v1177 = vsel %vm1135, %v1175, %v1176
      %v1178 = vrot.slane %v1055, 5
      %v1179 = vrot.slane %v1178, 4
      %v1180 = vrot.slane %v1056, 5
      %v1181 = vsel %vm1135, %v1179, %v1180
      %v1182 = vrot.slane %v1180, 4
      %v1183 = vrot.slane %v1057, 5
      %v1184 = vsel %vm1135, %v1182, %v1183
      %v1185 = vrot.slane %v1058, 5
      %v1186 = vrot.slane %v1185, 4
      %v1187 = vrot.slane %v1059, 5
      %v1188 = vsel %vm1135, %v1186, %v1187
      %v1189 = vrot.slane %v1187, 4
      %v1190 = vrot.slane %v1060, 5
      %v1191 = vsel %vm1135, %v1189, %v1190
      %v1192 = vrot.slane %v1061, 5
      %v1193 = vrot.slane %v1192, 4
      %v1194 = vrot.slane %v1062, 5
      %v1195 = vsel %vm1135, %v1193, %v1194
      %v1196 = vrot.slane %v1194, 4
      %v1197 = vrot.slane %v1063, 5
      %v1198 = vsel %vm1135, %v1196, %v1197
      %v1199 = vrot.slane %v1064, 5
      %v1200 = vrot.slane %v1199, 4
      %v1201 = vrot.slane %v1065, 5
      %v1202 = vsel %vm1135, %v1200, %v1201
      %v1203 = vrot.slane %v1201, 4
      %v1204 = vrot.slane %v1066, 5
      %v1205 = vsel %vm1135, %v1203, %v1204
      %v1206 = vrot.slane %v1067, 5
      %v1207 = vrot.slane %v1206, 4
      %v1208 = vrot.slane %v1068, 5
      %v1209 = vsel %vm1135, %v1207, %v1208
      %v1210 = vrot.slane %v1208, 4
      %v1211 = vrot.slane %v1069, 5
      %v1212 = vsel %vm1135, %v1210, %v1211
      %v1213 = vrot.slane %v1070, 5
      %v1214 = vrot.slane %v1213, 4
      %v1215 = vrot.slane %v1071, 5
      %v1216 = vsel %vm1135, %v1214, %v1215
      %v1217 = vrot.slane %v1215, 4
      %v1218 = vrot.slane %v1072, 5
      %v1219 = vsel %vm1135, %v1217, %v1218
      %v1220 = vrot.slane %v1073, 5
      %v1221 = vrot.slane %v1220, 4
      %v1222 = vrot.slane %v1074, 5
      %v1223 = vsel %vm1135, %v1221, %v1222
      %v1224 = vrot.slane %v1222, 4
      %v1225 = vrot.slane %v1075, 5
      %v1226 = vsel %vm1135, %v1224, %v1225
      %v1227 = vrot.slane %v1076, 5
      %v1228 = vrot.slane %v1227, 4
      %v1229 = vrot.slane %v1077, 5
      %v1230 = vsel %vm1135, %v1228, %v1229
      %v1231 = vrot.slane %v1229, 4
      %v1232 = vrot.slane %v1078, 5
      %v1233 = vsel %vm1135, %v1231, %v1232
      %v1234 = vrot.slane %v1079, 5
      %v1235 = vrot.slane %v1234, 4
      %v1236 = vrot.slane %v1080, 5
      %v1237 = vsel %vm1135, %v1235, %v1236
      %v1238 = vrot.slane %v1236, 4
      %v1239 = vrot.slane %v1081, 5
      %v1240 = vsel %vm1135, %v1238, %v1239
      %v1241 = vrot.slane %v1082, 5
      %v1242 = vrot.slane %v1241, 4
      %v1243 = vrot.slane %v1083, 5
      %v1244 = vsel %vm1135, %v1242, %v1243
      %v1245 = vrot.slane %v1243, 4
      %v1246 = vrot.slane %v1084, 5
      %v1247 = vsel %vm1135, %v1245, %v1246
      %1248 = vrot.lane.b32.xlu0 %v1139, 8
      %v1249 = vpop.permute.xlu0 %1248
      %1250 = vrot.lane.b32.xlu0 %v1142, 8
      %v1251 = vpop.permute.xlu0 %1250
      %1252 = vrot.lane.b32.xlu0 %v1146, 8
      %v1253 = vpop.permute.xlu0 %1252
      %1254 = vrot.lane.b32.xlu0 %v1149, 8
      %v1255 = vpop.permute.xlu0 %1254
      %1256 = vrot.lane.b32.xlu0 %v1153, 8
      %v1257 = vpop.permute.xlu0 %1256
      %1258 = vrot.lane.b32.xlu0 %v1156, 8
      %v1259 = vpop.permute.xlu0 %1258
      %1260 = vrot.lane.b32.xlu0 %v1160, 8
      %v1261 = vpop.permute.xlu0 %1260
      %1262 = vrot.lane.b32.xlu0 %v1163, 8
      %v1263 = vpop.permute.xlu0 %1262
      %1264 = vrot.lane.b32.xlu0 %v1167, 8
      %v1265 = vpop.permute.xlu0 %1264
      %1266 = vrot.lane.b32.xlu0 %v1170, 8
      %v1267 = vpop.permute.xlu0 %1266
      %1268 = vrot.lane.b32.xlu0 %v1174, 8
      %v1269 = vpop.permute.xlu0 %1268
      %1270 = vrot.lane.b32.xlu0 %v1177, 8
      %v1271 = vpop.permute.xlu0 %1270
      %1272 = vrot.lane.b32.xlu0 %v1181, 8
      %v1273 = vpop.permute.xlu0 %1272
      %1274 = vrot.lane.b32.xlu0 %v1184, 8
      %v1275 = vpop.permute.xlu0 %1274
      %1276 = vrot.lane.b32.xlu0 %v1188, 8
      %v1277 = vpop.permute.xlu0 %1276
      %1278 = vrot.lane.b32.xlu0 %v1191, 8
      %v1279 = vpop.permute.xlu0 %1278
      %1280 = vrot.lane.b32.xlu0 %v1195, 8
      %v1281 = vpop.permute.xlu0 %1280
      %1282 = vrot.lane.b32.xlu0 %v1198, 8
      %v1283 = vpop.permute.xlu0 %1282
      %1284 = vrot.lane.b32.xlu0 %v1202, 8
      %v1285 = vpop.permute.xlu0 %1284
      %1286 = vrot.lane.b32.xlu0 %v1205, 8
      %v1287 = vpop.permute.xlu0 %1286
      %1288 = vrot.lane.b32.xlu0 %v1209, 8
      %v1289 = vpop.permute.xlu0 %1288
      %1290 = vrot.lane.b32.xlu0 %v1212, 8
      %v1291 = vpop.permute.xlu0 %1290
      %1292 = vrot.lane.b32.xlu0 %v1216, 8
      %v1293 = vpop.permute.xlu0 %1292
      %1294 = vrot.lane.b32.xlu0 %v1219, 8
      %v1295 = vpop.permute.xlu0 %1294
      %1296 = vrot.lane.b32.xlu0 %v1223, 8
      %v1297 = vpop.permute.xlu0 %1296
      %1298 = vrot.lane.b32.xlu0 %v1226, 8
      %v1299 = vpop.permute.xlu0 %1298
      %1300 = vrot.lane.b32.xlu0 %v1230, 8
      %v1301 = vpop.permute.xlu0 %1300
      %1302 = vrot.lane.b32.xlu0 %v1233, 8
      %v1303 = vpop.permute.xlu0 %1302
      %1304 = vrot.lane.b32.xlu0 %v1237, 8
      %v1305 = vpop.permute.xlu0 %1304
      %1306 = vrot.lane.b32.xlu0 %v1240, 8
      %v1307 = vpop.permute.xlu0 %1306
      %1308 = vrot.lane.b32.xlu0 %v1244, 8
      %v1309 = vpop.permute.xlu0 %1308
      %1310 = vrot.lane.b32.xlu0 %v1247, 8
      %v1311 = vpop.permute.xlu0 %1310
      %vm1344 = vcmask 93248
      %1345 = vst.msk [vmem:[#allocation2] sm:$0xf] %vm1344, %v1249
      %1346 = vst.msk [vmem:[#allocation2 + $0x4] sm:$0xf] %vm1344, %v1251
      %1347 = vst.msk [vmem:[#allocation2 + $0x8] sm:$0xf] %vm1344, %v1253
      %1348 = vst.msk [vmem:[#allocation2 + $0xc] sm:$0xf] %vm1344, %v1255
      %1349 = vst.msk [vmem:[#allocation2 + $0x10] sm:$0xf] %vm1344, %v1257
      %1350 = vst.msk [vmem:[#allocation2 + $0x14] sm:$0xf] %vm1344, %v1259
      %1351 = vst.msk [vmem:[#allocation2 + $0x18] sm:$0xf] %vm1344, %v1261
      %1352 = vst.msk [vmem:[#allocation2 + $0x1c] sm:$0xf] %vm1344, %v1263
      %1353 = vst.msk [vmem:[#allocation2 + $0x20] sm:$0xf] %vm1344, %v1265
      %1354 = vst.msk [vmem:[#allocation2 + $0x24] sm:$0xf] %vm1344, %v1267
      %1355 = vst.msk [vmem:[#allocation2 + $0x28] sm:$0xf] %vm1344, %v1269
      %1356 = vst.msk [vmem:[#allocation2 + $0x2c] sm:$0xf] %vm1344, %v1271
      %1357 = vst.msk [vmem:[#allocation2 + $0x30] sm:$0xf] %vm1344, %v1273
      %1358 = vst.msk [vmem:[#allocation2 + $0x34] sm:$0xf] %vm1344, %v1275
      %1359 = vst.msk [vmem:[#allocation2 + $0x38] sm:$0xf] %vm1344, %v1277
      %1360 = vst.msk [vmem:[#allocation2 + $0x3c] sm:$0xf] %vm1344, %v1279
      %1361 = vst.msk [vmem:[#allocation2 + $0x40] sm:$0xf] %vm1344, %v1281
      %1362 = vst.msk [vmem:[#allocation2 + $0x44] sm:$0xf] %vm1344, %v1283
      %1363 = vst.msk [vmem:[#allocation2 + $0x48] sm:$0xf] %vm1344, %v1285
      %1364 = vst.msk [vmem:[#allocation2 + $0x4c] sm:$0xf] %vm1344, %v1287
      %1365 = vst.msk [vmem:[#allocation2 + $0x50] sm:$0xf] %vm1344, %v1289
      %1366 = vst.msk [vmem:[#allocation2 + $0x54] sm:$0xf] %vm1344, %v1291
      %1367 = vst.msk [vmem:[#allocation2 + $0x58] sm:$0xf] %vm1344, %v1293
      %1368 = vst.msk [vmem:[#allocation2 + $0x5c] sm:$0xf] %vm1344, %v1295
      %1369 = vst.msk [vmem:[#allocation2 + $0x60] sm:$0xf] %vm1344, %v1297
      %1370 = vst.msk [vmem:[#allocation2 + $0x64] sm:$0xf] %vm1344, %v1299
      %1371 = vst.msk [vmem:[#allocation2 + $0x68] sm:$0xf] %vm1344, %v1301
      %1372 = vst.msk [vmem:[#allocation2 + $0x6c] sm:$0xf] %vm1344, %v1303
      %1373 = vst.msk [vmem:[#allocation2 + $0x70] sm:$0xf] %vm1344, %v1305
      %1374 = vst.msk [vmem:[#allocation2 + $0x74] sm:$0xf] %vm1344, %v1307
      %1375 = vst.msk [vmem:[#allocation2 + $0x78] sm:$0xf] %vm1344, %v1309
      %1376 = vst.msk [vmem:[#allocation2 + $0x7c] sm:$0xf] %vm1344, %v1311
      %v1377 = vld [vmem:[%s371] sm:$0xf]
      %v1378 = vld [vmem:[%s371 + $0x4] sm:$0xf]
      %v1379 = vld [vmem:[%s371 + $0xc] sm:$0xf]
      %v1380 = vld [vmem:[%s371 + $0x10] sm:$0xf]
      %v1381 = vld [vmem:[%s371 + $0x18] sm:$0xf]
      %v1382 = vld [vmem:[%s371 + $0x1c] sm:$0xf]
      %v1383 = vld [vmem:[%s371 + $0x24] sm:$0xf]
      %v1384 = vld [vmem:[%s371 + $0x28] sm:$0xf]
      %v1385 = vld [vmem:[%s371 + $0x30] sm:$0xf]
      %v1386 = vld [vmem:[%s371 + $0x34] sm:$0xf]
      %v1387 = vld [vmem:[%s371 + $0x3c] sm:$0xf]
      %v1388 = vld [vmem:[%s371 + $0x40] sm:$0xf]
      %v1389 = vld [vmem:[%s371 + $0x48] sm:$0xf]
      %v1390 = vld [vmem:[%s371 + $0x4c] sm:$0xf]
      %v1391 = vld [vmem:[%s371 + $0x54] sm:$0xf]
      %v1392 = vld [vmem:[%s371 + $0x58] sm:$0xf]
      %v1393 = vld [vmem:[%s371 + $0x60] sm:$0xf]
      %v1394 = vld [vmem:[%s371 + $0x64] sm:$0xf]
      %v1395 = vld [vmem:[%s371 + $0x6c] sm:$0xf]
      %v1396 = vld [vmem:[%s371 + $0x70] sm:$0xf]
      %v1397 = vld [vmem:[%s371 + $0x78] sm:$0xf]
      %v1398 = vld [vmem:[%s371 + $0x7c] sm:$0xf]
      %v1399 = vld [vmem:[%s371 + $0x84] sm:$0xf]
      %v1400 = vld [vmem:[%s371 + $0x88] sm:$0xf]
      %v1401 = vld [vmem:[%s371 + $0x90] sm:$0xf]
      %v1402 = vld [vmem:[%s371 + $0x94] sm:$0xf]
      %v1403 = vld [vmem:[%s371 + $0x9c] sm:$0xf]
      %v1404 = vld [vmem:[%s371 + $0xa0] sm:$0xf]
      %v1405 = vld [vmem:[%s371 + $0xa8] sm:$0xf]
      %v1406 = vld [vmem:[%s371 + $0xac] sm:$0xf]
      %v1407 = vld [vmem:[%s371 + $0xb4] sm:$0xf]
      %v1408 = vld [vmem:[%s371 + $0xb8] sm:$0xf]
      %1441 = vrot.lane.b32.xlu0 %v1377, 12
      %v1442 = vpop.permute.xlu0 %1441
      %1443 = vrot.lane.b32.xlu0 %v1378, 12
      %v1444 = vpop.permute.xlu0 %1443
      %1445 = vrot.lane.b32.xlu0 %v1379, 12
      %v1446 = vpop.permute.xlu0 %1445
      %1447 = vrot.lane.b32.xlu0 %v1380, 12
      %v1448 = vpop.permute.xlu0 %1447
      %1449 = vrot.lane.b32.xlu0 %v1381, 12
      %v1450 = vpop.permute.xlu0 %1449
      %1451 = vrot.lane.b32.xlu0 %v1382, 12
      %v1452 = vpop.permute.xlu0 %1451
      %1453 = vrot.lane.b32.xlu0 %v1383, 12
      %v1454 = vpop.permute.xlu0 %1453
      %1455 = vrot.lane.b32.xlu0 %v1384, 12
      %v1456 = vpop.permute.xlu0 %1455
      %1457 = vrot.lane.b32.xlu0 %v1385, 12
      %v1458 = vpop.permute.xlu0 %1457
      %1459 = vrot.lane.b32.xlu0 %v1386, 12
      %v1460 = vpop.permute.xlu0 %1459
      %1461 = vrot.lane.b32.xlu0 %v1387, 12
      %v1462 = vpop.permute.xlu0 %1461
      %1463 = vrot.lane.b32.xlu0 %v1388, 12
      %v1464 = vpop.permute.xlu0 %1463
      %1465 = vrot.lane.b32.xlu0 %v1389, 12
      %v1466 = vpop.permute.xlu0 %1465
      %1467 = vrot.lane.b32.xlu0 %v1390, 12
      %v1468 = vpop.permute.xlu0 %1467
      %1469 = vrot.lane.b32.xlu0 %v1391, 12
      %v1470 = vpop.permute.xlu0 %1469
      %1471 = vrot.lane.b32.xlu0 %v1392, 12
      %v1472 = vpop.permute.xlu0 %1471
      %1473 = vrot.lane.b32.xlu0 %v1393, 12
      %v1474 = vpop.permute.xlu0 %1473
      %1475 = vrot.lane.b32.xlu0 %v1394, 12
      %v1476 = vpop.permute.xlu0 %1475
      %1477 = vrot.lane.b32.xlu0 %v1395, 12
      %v1478 = vpop.permute.xlu0 %1477
      %1479 = vrot.lane.b32.xlu0 %v1396, 12
      %v1480 = vpop.permute.xlu0 %1479
      %1481 = vrot.lane.b32.xlu0 %v1397, 12
      %v1482 = vpop.permute.xlu0 %1481
      %1483 = vrot.lane.b32.xlu0 %v1398, 12
      %v1484 = vpop.permute.xlu0 %1483
      %1485 = vrot.lane.b32.xlu0 %v1399, 12
      %v1486 = vpop.permute.xlu0 %1485
      %1487 = vrot.lane.b32.xlu0 %v1400, 12
      %v1488 = vpop.permute.xlu0 %1487
      %1489 = vrot.lane.b32.xlu0 %v1401, 12
      %v1490 = vpop.permute.xlu0 %1489
      %1491 = vrot.lane.b32.xlu0 %v1402, 12
      %v1492 = vpop.permute.xlu0 %1491
      %1493 = vrot.lane.b32.xlu0 %v1403, 12
      %v1494 = vpop.permute.xlu0 %1493
      %1495 = vrot.lane.b32.xlu0 %v1404, 12
      %v1496 = vpop.permute.xlu0 %1495
      %1497 = vrot.lane.b32.xlu0 %v1405, 12
      %v1498 = vpop.permute.xlu0 %1497
      %1499 = vrot.lane.b32.xlu0 %v1406, 12
      %v1500 = vpop.permute.xlu0 %1499
      %1501 = vrot.lane.b32.xlu0 %v1407, 12
      %v1502 = vpop.permute.xlu0 %1501
      %1503 = vrot.lane.b32.xlu0 %v1408, 12
      %v1504 = vpop.permute.xlu0 %1503
      %vm1537 = vcmask 126048
      %1538 = vst.msk [vmem:[#allocation2] sm:$0xf] %vm1537, %v1442
      %1539 = vst.msk [vmem:[#allocation2 + $0x4] sm:$0xf] %vm1537, %v1444
      %1540 = vst.msk [vmem:[#allocation2 + $0x8] sm:$0xf] %vm1537, %v1446
      %1541 = vst.msk [vmem:[#allocation2 + $0xc] sm:$0xf] %vm1537, %v1448
      %1542 = vst.msk [vmem:[#allocation2 + $0x10] sm:$0xf] %vm1537, %v1450
      %1543 = vst.msk [vmem:[#allocation2 + $0x14] sm:$0xf] %vm1537, %v1452
      %1544 = vst.msk [vmem:[#allocation2 + $0x18] sm:$0xf] %vm1537, %v1454
      %1545 = vst.msk [vmem:[#allocation2 + $0x1c] sm:$0xf] %vm1537, %v1456
      %1546 = vst.msk [vmem:[#allocation2 + $0x20] sm:$0xf] %vm1537, %v1458
      %1547 = vst.msk [vmem:[#allocation2 + $0x24] sm:$0xf] %vm1537, %v1460
      %1548 = vst.msk [vmem:[#allocation2 + $0x28] sm:$0xf] %vm1537, %v1462
      %1549 = vst.msk [vmem:[#allocation2 + $0x2c] sm:$0xf] %vm1537, %v1464
      %1550 = vst.msk [vmem:[#allocation2 + $0x30] sm:$0xf] %vm1537, %v1466
      %1551 = vst.msk [vmem:[#allocation2 + $0x34] sm:$0xf] %vm1537, %v1468
      %1552 = vst.msk [vmem:[#allocation2 + $0x38] sm:$0xf] %vm1537, %v1470
      %1553 = vst.msk [vmem:[#allocation2 + $0x3c] sm:$0xf] %vm1537, %v1472
      %1554 = vst.msk [vmem:[#allocation2 + $0x40] sm:$0xf] %vm1537, %v1474
      %1555 = vst.msk [vmem:[#allocation2 + $0x44] sm:$0xf] %vm1537, %v1476
      %1556 = vst.msk [vmem:[#allocation2 + $0x48] sm:$0xf] %vm1537, %v1478
      %1557 = vst.msk [vmem:[#allocation2 + $0x4c] sm:$0xf] %vm1537, %v1480
      %1558 = vst.msk [vmem:[#allocation2 + $0x50] sm:$0xf] %vm1537, %v1482
      %1559 = vst.msk [vmem:[#allocation2 + $0x54] sm:$0xf] %vm1537, %v1484
      %1560 = vst.msk [vmem:[#allocation2 + $0x58] sm:$0xf] %vm1537, %v1486
      %1561 = vst.msk [vmem:[#allocation2 + $0x5c] sm:$0xf] %vm1537, %v1488
      %1562 = vst.msk [vmem:[#allocation2 + $0x60] sm:$0xf] %vm1537, %v1490
      %1563 = vst.msk [vmem:[#allocation2 + $0x64] sm:$0xf] %vm1537, %v1492
      %1564 = vst.msk [vmem:[#allocation2 + $0x68] sm:$0xf] %vm1537, %v1494
      %1565 = vst.msk [vmem:[#allocation2 + $0x6c] sm:$0xf] %vm1537, %v1496
      %1566 = vst.msk [vmem:[#allocation2 + $0x70] sm:$0xf] %vm1537, %v1498
      %1567 = vst.msk [vmem:[#allocation2 + $0x74] sm:$0xf] %vm1537, %v1500
      %1568 = vst.msk [vmem:[#allocation2 + $0x78] sm:$0xf] %vm1537, %v1502
      %1569 = vst.msk [vmem:[#allocation2 + $0x7c] sm:$0xf] %vm1537, %v1504
      %v1570 = vld [vmem:[%s371] sm:$0xf]
      %v1571 = vld [vmem:[%s371 + $0x4] sm:$0xf]
      %v1572 = vld [vmem:[%s371 + $0x8] sm:$0x1]
      %v1573 = vld [vmem:[%s371 + $0xc] sm:$0xf]
      %v1574 = vld [vmem:[%s371 + $0x10] sm:$0xf]
      %v1575 = vld [vmem:[%s371 + $0x14] sm:$0x1]
      %v1576 = vld [vmem:[%s371 + $0x18] sm:$0xf]
      %v1577 = vld [vmem:[%s371 + $0x1c] sm:$0xf]
      %v1578 = vld [vmem:[%s371 + $0x20] sm:$0x1]
      %v1579 = vld [vmem:[%s371 + $0x24] sm:$0xf]
      %v1580 = vld [vmem:[%s371 + $0x28] sm:$0xf]
      %v1581 = vld [vmem:[%s371 + $0x2c] sm:$0x1]
      %v1582 = vld [vmem:[%s371 + $0x30] sm:$0xf]
      %v1583 = vld [vmem:[%s371 + $0x34] sm:$0xf]
      %v1584 = vld [vmem:[%s371 + $0x38] sm:$0x1]
      %v1585 = vld [vmem:[%s371 + $0x3c] sm:$0xf]
      %v1586 = vld [vmem:[%s371 + $0x40] sm:$0xf]
      %v1587 = vld [vmem:[%s371 + $0x44] sm:$0x1]
      %v1588 = vld [vmem:[%s371 + $0x48] sm:$0xf]
      %v1589 = vld [vmem:[%s371 + $0x4c] sm:$0xf]
      %v1590 = vld [vmem:[%s371 + $0x50] sm:$0x1]
      %v1591 = vld [vmem:[%s371 + $0x54] sm:$0xf]
      %v1592 = vld [vmem:[%s371 + $0x58] sm:$0xf]
      %v1593 = vld [vmem:[%s371 + $0x5c] sm:$0x1]
      %v1594 = vld [vmem:[%s371 + $0x60] sm:$0xf]
      %v1595 = vld [vmem:[%s371 + $0x64] sm:$0xf]
      %v1596 = vld [vmem:[%s371 + $0x68] sm:$0x1]
      %v1597 = vld [vmem:[%s371 + $0x6c] sm:$0xf]
      %v1598 = vld [vmem:[%s371 + $0x70] sm:$0xf]
      %v1599 = vld [vmem:[%s371 + $0x74] sm:$0x1]
      %v1600 = vld [vmem:[%s371 + $0x78] sm:$0xf]
      %v1601 = vld [vmem:[%s371 + $0x7c] sm:$0xf]
      %v1602 = vld [vmem:[%s371 + $0x80] sm:$0x1]
      %v1603 = vld [vmem:[%s371 + $0x84] sm:$0xf]
      %v1604 = vld [vmem:[%s371 + $0x88] sm:$0xf]
      %v1605 = vld [vmem:[%s371 + $0x8c] sm:$0x1]
      %v1606 = vld [vmem:[%s371 + $0x90] sm:$0xf]
      %v1607 = vld [vmem:[%s371 + $0x94] sm:$0xf]
      %v1608 = vld [vmem:[%s371 + $0x98] sm:$0x1]
      %v1609 = vld [vmem:[%s371 + $0x9c] sm:$0xf]
      %v1610 = vld [vmem:[%s371 + $0xa0] sm:$0xf]
      %v1611 = vld [vmem:[%s371 + $0xa4] sm:$0x1]
      %v1612 = vld [vmem:[%s371 + $0xa8] sm:$0xf]
      %v1613 = vld [vmem:[%s371 + $0xac] sm:$0xf]
      %v1614 = vld [vmem:[%s371 + $0xb0] sm:$0x1]
      %v1615 = vld [vmem:[%s371 + $0xb4] sm:$0xf]
      %v1616 = vld [vmem:[%s371 + $0xb8] sm:$0xf]
      %v1617 = vld [vmem:[%s371 + $0xbc] sm:$0x1]
      %v1619 = vshrl.u32 %v1570, 16
      %v1621 = vrot.slane %v1619, 4
      %v1622 = vshll.u32 %v1570, 16
      %v1624 = vrot.slane %v1622, 5
      %v1625 = vor.u32 %v1621, %v1624
      %v1626 = vrot.slane %v1625, 4
      %v1628 = vshll.u32 %v1571, 16
      %v1630 = vrot.slane %v1628, 5
      %v1631 = vsel %vm523, %v1626, %v1630
      %v1632 = vshrl.u32 %v1571, 16
      %v1634 = vrot.slane %v1632, 4
      %v1635 = vor.u32 %v1634, %v1630
      %v1636 = vrot.slane %v1635, 4
      %v1638 = vshll.u32 %v1572, 16
      %v1640 = vrot.slane %v1638, 5
      %v1641 = vsel %vm523, %v1636, %v1640
      %v1643 = vshrl.u32 %v1573, 16
      %v1645 = vrot.slane %v1643, 4
      %v1646 = vshll.u32 %v1573, 16
      %v1648 = vrot.slane %v1646, 5
      %v1649 = vor.u32 %v1645, %v1648
      %v1650 = vrot.slane %v1649, 4
      %v1652 = vshll.u32 %v1574, 16
      %v1654 = vrot.slane %v1652, 5
      %v1655 = vsel %vm523, %v1650, %v1654
      %v1656 = vshrl.u32 %v1574, 16
      %v1658 = vrot.slane %v1656, 4
      %v1659 = vor.u32 %v1658, %v1654
      %v1660 = vrot.slane %v1659, 4
      %v1662 = vshll.u32 %v1575, 16
      %v1664 = vrot.slane %v1662, 5
      %v1665 = vsel %vm523, %v1660, %v1664
      %v1667 = vshrl.u32 %v1576, 16
      %v1669 = vrot.slane %v1667, 4
      %v1670 = vshll.u32 %v1576, 16
      %v1672 = vrot.slane %v1670, 5
      %v1673 = vor.u32 %v1669, %v1672
      %v1674 = vrot.slane %v1673, 4
      %v1676 = vshll.u32 %v1577, 16
      %v1678 = vrot.slane %v1676, 5
      %v1679 = vsel %vm523, %v1674, %v1678
      %v1680 = vshrl.u32 %v1577, 16
      %v1682 = vrot.slane %v1680, 4
      %v1683 = vor.u32 %v1682, %v1678
      %v1684 = vrot.slane %v1683, 4
      %v1686 = vshll.u32 %v1578, 16
      %v1688 = vrot.slane %v1686, 5
      %v1689 = vsel %vm523, %v1684, %v1688
      %v1691 = vshrl.u32 %v1579, 16
      %v1693 = vrot.slane %v1691, 4
      %v1694 = vshll.u32 %v1579, 16
      %v1696 = vrot.slane %v1694, 5
      %v1697 = vor.u32 %v1693, %v1696
      %v1698 = vrot.slane %v1697, 4
      %v1700 = vshll.u32 %v1580, 16
      %v1702 = vrot.slane %v1700, 5
      %v1703 = vsel %vm523, %v1698, %v1702
      %v1704 = vshrl.u32 %v1580, 16
      %v1706 = vrot.slane %v1704, 4
      %v1707 = vor.u32 %v1706, %v1702
      %v1708 = vrot.slane %v1707, 4
      %v1710 = vshll.u32 %v1581, 16
      %v1712 = vrot.slane %v1710, 5
      %v1713 = vsel %vm523, %v1708, %v1712
      %v1715 = vshrl.u32 %v1582, 16
      %v1717 = vrot.slane %v1715, 4
      %v1718 = vshll.u32 %v1582, 16
      %v1720 = vrot.slane %v1718, 5
      %v1721 = vor.u32 %v1717, %v1720
      %v1722 = vrot.slane %v1721, 4
      %v1724 = vshll.u32 %v1583, 16
      %v1726 = vrot.slane %v1724, 5
      %v1727 = vsel %vm523, %v1722, %v1726
      %v1728 = vshrl.u32 %v1583, 16
      %v1730 = vrot.slane %v1728, 4
      %v1731 = vor.u32 %v1730, %v1726
      %v1732 = vrot.slane %v1731, 4
      %v1734 = vshll.u32 %v1584, 16
      %v1736 = vrot.slane %v1734, 5
      %v1737 = vsel %vm523, %v1732, %v1736
      %v1739 = vshrl.u32 %v1585, 16
      %v1741 = vrot.slane %v1739, 4
      %v1742 = vshll.u32 %v1585, 16
      %v1744 = vrot.slane %v1742, 5
      %v1745 = vor.u32 %v1741, %v1744
      %v1746 = vrot.slane %v1745, 4
      %v1748 = vshll.u32 %v1586, 16
      %v1750 = vrot.slane %v1748, 5
      %v1751 = vsel %vm523, %v1746, %v1750
      %v1752 = vshrl.u32 %v1586, 16
      %v1754 = vrot.slane %v1752, 4
      %v1755 = vor.u32 %v1754, %v1750
      %v1756 = vrot.slane %v1755, 4
      %v1758 = vshll.u32 %v1587, 16
      %v1760 = vrot.slane %v1758, 5
      %v1761 = vsel %vm523, %v1756, %v1760
      %v1763 = vshrl.u32 %v1588, 16
      %v1765 = vrot.slane %v1763, 4
      %v1766 = vshll.u32 %v1588, 16
      %v1768 = vrot.slane %v1766, 5
      %v1769 = vor.u32 %v1765, %v1768
      %v1770 = vrot.slane %v1769, 4
      %v1772 = vshll.u32 %v1589, 16
      %v1774 = vrot.slane %v1772, 5
      %v1775 = vsel %vm523, %v1770, %v1774
      %v1776 = vshrl.u32 %v1589, 16
      %v1778 = vrot.slane %v1776, 4
      %v1779 = vor.u32 %v1778, %v1774
      %v1780 = vrot.slane %v1779, 4
      %v1782 = vshll.u32 %v1590, 16
      %v1784 = vrot.slane %v1782, 5
      %v1785 = vsel %vm523, %v1780, %v1784
      %v1787 = vshrl.u32 %v1591, 16
      %v1789 = vrot.slane %v1787, 4
      %v1790 = vshll.u32 %v1591, 16
      %v1792 = vrot.slane %v1790, 5
      %v1793 = vor.u32 %v1789, %v1792
      %v1794 = vrot.slane %v1793, 4
      %v1796 = vshll.u32 %v1592, 16
      %v1798 = vrot.slane %v1796, 5
      %v1799 = vsel %vm523, %v1794, %v1798
      %v1800 = vshrl.u32 %v1592, 16
      %v1802 = vrot.slane %v1800, 4
      %v1803 = vor.u32 %v1802, %v1798
      %v1804 = vrot.slane %v1803, 4
      %v1806 = vshll.u32 %v1593, 16
      %v1808 = vrot.slane %v1806, 5
      %v1809 = vsel %vm523, %v1804, %v1808
      %v1811 = vshrl.u32 %v1594, 16
      %v1813 = vrot.slane %v1811, 4
      %v1814 = vshll.u32 %v1594, 16
      %v1816 = vrot.slane %v1814, 5
      %v1817 = vor.u32 %v1813, %v1816
      %v1818 = vrot.slane %v1817, 4
      %v1820 = vshll.u32 %v1595, 16
      %v1822 = vrot.slane %v1820, 5
      %v1823 = vsel %vm523, %v1818, %v1822
      %v1824 = vshrl.u32 %v1595, 16
      %v1826 = vrot.slane %v1824, 4
      %v1827 = vor.u32 %v1826, %v1822
      %v1828 = vrot.slane %v1827, 4
      %v1830 = vshll.u32 %v1596, 16
      %v1832 = vrot.slane %v1830, 5
      %v1833 = vsel %vm523, %v1828, %v1832
      %v1835 = vshrl.u32 %v1597, 16
      %v1837 = vrot.slane %v1835, 4
      %v1838 = vshll.u32 %v1597, 16
      %v1840 = vrot.slane %v1838, 5
      %v1841 = vor.u32 %v1837, %v1840
      %v1842 = vrot.slane %v1841, 4
      %v1844 = vshll.u32 %v1598, 16
      %v1846 = vrot.slane %v1844, 5
      %v1847 = vsel %vm523, %v1842, %v1846
      %v1848 = vshrl.u32 %v1598, 16
      %v1850 = vrot.slane %v1848, 4
      %v1851 = vor.u32 %v1850, %v1846
      %v1852 = vrot.slane %v1851, 4
      %v1854 = vshll.u32 %v1599, 16
      %v1856 = vrot.slane %v1854, 5
      %v1857 = vsel %vm523, %v1852, %v1856
      %v1859 = vshrl.u32 %v1600, 16
      %v1861 = vrot.slane %v1859, 4
      %v1862 = vshll.u32 %v1600, 16
      %v1864 = vrot.slane %v1862, 5
      %v1865 = vor.u32 %v1861, %v1864
      %v1866 = vrot.slane %v1865, 4
      %v1868 = vshll.u32 %v1601, 16
      %v1870 = vrot.slane %v1868, 5
      %v1871 = vsel %vm523, %v1866, %v1870
      %v1872 = vshrl.u32 %v1601, 16
      %v1874 = vrot.slane %v1872, 4
      %v1875 = vor.u32 %v1874, %v1870
      %v1876 = vrot.slane %v1875, 4
      %v1878 = vshll.u32 %v1602, 16
      %v1880 = vrot.slane %v1878, 5
      %v1881 = vsel %vm523, %v1876, %v1880
      %v1883 = vshrl.u32 %v1603, 16
      %v1885 = vrot.slane %v1883, 4
      %v1886 = vshll.u32 %v1603, 16
      %v1888 = vrot.slane %v1886, 5
      %v1889 = vor.u32 %v1885, %v1888
      %v1890 = vrot.slane %v1889, 4
      %v1892 = vshll.u32 %v1604, 16
      %v1894 = vrot.slane %v1892, 5
      %v1895 = vsel %vm523, %v1890, %v1894
      %v1896 = vshrl.u32 %v1604, 16
      %v1898 = vrot.slane %v1896, 4
      %v1899 = vor.u32 %v1898, %v1894
      %v1900 = vrot.slane %v1899, 4
      %v1902 = vshll.u32 %v1605, 16
      %v1904 = vrot.slane %v1902, 5
      %v1905 = vsel %vm523, %v1900, %v1904
      %v1907 = vshrl.u32 %v1606, 16
      %v1909 = vrot.slane %v1907, 4
      %v1910 = vshll.u32 %v1606, 16
      %v1912 = vrot.slane %v1910, 5
      %v1913 = vor.u32 %v1909, %v1912
      %v1914 = vrot.slane %v1913, 4
      %v1916 = vshll.u32 %v1607, 16
      %v1918 = vrot.slane %v1916, 5
      %v1919 = vsel %vm523, %v1914, %v1918
      %v1920 = vshrl.u32 %v1607, 16
      %v1922 = vrot.slane %v1920, 4
      %v1923 = vor.u32 %v1922, %v1918
      %v1924 = vrot.slane %v1923, 4
      %v1926 = vshll.u32 %v1608, 16
      %v1928 = vrot.slane %v1926, 5
      %v1929 = vsel %vm523, %v1924, %v1928
      %v1931 = vshrl.u32 %v1609, 16
      %v1933 = vrot.slane %v1931, 4
      %v1934 = vshll.u32 %v1609, 16
      %v1936 = vrot.slane %v1934, 5
      %v1937 = vor.u32 %v1933, %v1936
      %v1938 = vrot.slane %v1937, 4
      %v1940 = vshll.u32 %v1610, 16
      %v1942 = vrot.slane %v1940, 5
      %v1943 = vsel %vm523, %v1938, %v1942
      %v1944 = vshrl.u32 %v1610, 16
      %v1946 = vrot.slane %v1944, 4
      %v1947 = vor.u32 %v1946, %v1942
      %v1948 = vrot.slane %v1947, 4
      %v1950 = vshll.u32 %v1611, 16
      %v1952 = vrot.slane %v1950, 5
      %v1953 = vsel %vm523, %v1948, %v1952
      %v1955 = vshrl.u32 %v1612, 16
      %v1957 = vrot.slane %v1955, 4
      %v1958 = vshll.u32 %v1612, 16
      %v1960 = vrot.slane %v1958, 5
      %v1961 = vor.u32 %v1957, %v1960
      %v1962 = vrot.slane %v1961, 4
      %v1964 = vshll.u32 %v1613, 16
      %v1966 = vrot.slane %v1964, 5
      %v1967 = vsel %vm523, %v1962, %v1966
      %v1968 = vshrl.u32 %v1613, 16
      %v1970 = vrot.slane %v1968, 4
      %v1971 = vor.u32 %v1970, %v1966
      %v1972 = vrot.slane %v1971, 4
      %v1974 = vshll.u32 %v1614, 16
      %v1976 = vrot.slane %v1974, 5
      %v1977 = vsel %vm523, %v1972, %v1976
      %v1979 = vshrl.u32 %v1615, 16
      %v1981 = vrot.slane %v1979, 4
      %v1982 = vshll.u32 %v1615, 16
      %v1984 = vrot.slane %v1982, 5
      %v1985 = vor.u32 %v1981, %v1984
      %v1986 = vrot.slane %v1985, 4
      %v1988 = vshll.u32 %v1616, 16
      %v1990 = vrot.slane %v1988, 5
      %v1991 = vsel %vm523, %v1986, %v1990
      %v1992 = vshrl.u32 %v1616, 16
      %v1994 = vrot.slane %v1992, 4
      %v1995 = vor.u32 %v1994, %v1990
      %v1996 = vrot.slane %v1995, 4
      %v1998 = vshll.u32 %v1617, 16
      %v2000 = vrot.slane %v1998, 5
      %v2001 = vsel %vm523, %v1996, %v2000
      %2002 = vrot.lane.b32.xlu0 %v1631, 16
      %v2003 = vpop.permute.xlu0 %2002
      %2004 = vrot.lane.b32.xlu0 %v1641, 16
      %v2005 = vpop.permute.xlu0 %2004
      %2006 = vrot.lane.b32.xlu0 %v1655, 16
      %v2007 = vpop.permute.xlu0 %2006
      %2008 = vrot.lane.b32.xlu0 %v1665, 16
      %v2009 = vpop.permute.xlu0 %2008
      %2010 = vrot.lane.b32.xlu0 %v1679, 16
      %v2011 = vpop.permute.xlu0 %2010
      %2012 = vrot.lane.b32.xlu0 %v1689, 16
      %v2013 = vpop.permute.xlu0 %2012
      %2014 = vrot.lane.b32.xlu0 %v1703, 16
      %v2015 = vpop.permute.xlu0 %2014
      %2016 = vrot.lane.b32.xlu0 %v1713, 16
      %v2017 = vpop.permute.xlu0 %2016
      %2018 = vrot.lane.b32.xlu0 %v1727, 16
      %v2019 = vpop.permute.xlu0 %2018
      %2020 = vrot.lane.b32.xlu0 %v1737, 16
      %v2021 = vpop.permute.xlu0 %2020
      %2022 = vrot.lane.b32.xlu0 %v1751, 16
      %v2023 = vpop.permute.xlu0 %2022
      %2024 = vrot.lane.b32.xlu0 %v1761, 16
      %v2025 = vpop.permute.xlu0 %2024
      %2026 = vrot.lane.b32.xlu0 %v1775, 16
      %v2027 = vpop.permute.xlu0 %2026
      %2028 = vrot.lane.b32.xlu0 %v1785, 16
      %v2029 = vpop.permute.xlu0 %2028
      %2030 = vrot.lane.b32.xlu0 %v1799, 16
      %v2031 = vpop.permute.xlu0 %2030
      %2032 = vrot.lane.b32.xlu0 %v1809, 16
      %v2033 = vpop.permute.xlu0 %2032
      %2034 = vrot.lane.b32.xlu0 %v1823, 16
      %v2035 = vpop.permute.xlu0 %2034
      %2036 = vrot.lane.b32.xlu0 %v1833, 16
      %v2037 = vpop.permute.xlu0 %2036
      %2038 = vrot.lane.b32.xlu0 %v1847, 16
      %v2039 = vpop.permute.xlu0 %2038
      %2040 = vrot.lane.b32.xlu0 %v1857, 16
      %v2041 = vpop.permute.xlu0 %2040
      %2042 = vrot.lane.b32.xlu0 %v1871, 16
      %v2043 = vpop.permute.xlu0 %2042
      %2044 = vrot.lane.b32.xlu0 %v1881, 16
      %v2045 = vpop.permute.xlu0 %2044
      %2046 = vrot.lane.b32.xlu0 %v1895, 16
      %v2047 = vpop.permute.xlu0 %2046
      %2048 = vrot.lane.b32.xlu0 %v1905, 16
      %v2049 = vpop.permute.xlu0 %2048
      %2050 = vrot.lane.b32.xlu0 %v1919, 16
      %v2051 = vpop.permute.xlu0 %2050
      %2052 = vrot.lane.b32.xlu0 %v1929, 16
      %v2053 = vpop.permute.xlu0 %2052
      %2054 = vrot.lane.b32.xlu0 %v1943, 16
      %v2055 = vpop.permute.xlu0 %2054
      %2056 = vrot.lane.b32.xlu0 %v1953, 16
      %v2057 = vpop.permute.xlu0 %2056
      %2058 = vrot.lane.b32.xlu0 %v1967, 16
      %v2059 = vpop.permute.xlu0 %2058
      %2060 = vrot.lane.b32.xlu0 %v1977, 16
      %v2061 = vpop.permute.xlu0 %2060
      %2062 = vrot.lane.b32.xlu0 %v1991, 16
      %v2063 = vpop.permute.xlu0 %2062
      %2064 = vrot.lane.b32.xlu0 %v2001, 16
      %v2065 = vpop.permute.xlu0 %2064
      %vm2098 = vcmask 158848
      %2099 = vst.msk [vmem:[#allocation2] sm:$0xf] %vm2098, %v2003
      %2100 = vst.msk [vmem:[#allocation2 + $0x4] sm:$0xf] %vm2098, %v2005
      %2101 = vst.msk [vmem:[#allocation2 + $0x8] sm:$0xf] %vm2098, %v2007
      %2102 = vst.msk [vmem:[#allocation2 + $0xc] sm:$0xf] %vm2098, %v2009
      %2103 = vst.msk [vmem:[#allocation2 + $0x10] sm:$0xf] %vm2098, %v2011
      %2104 = vst.msk [vmem:[#allocation2 + $0x14] sm:$0xf] %vm2098, %v2013
      %2105 = vst.msk [vmem:[#allocation2 + $0x18] sm:$0xf] %vm2098, %v2015
      %2106 = vst.msk [vmem:[#allocation2 + $0x1c] sm:$0xf] %vm2098, %v2017
      %2107 = vst.msk [vmem:[#allocation2 + $0x20] sm:$0xf] %vm2098, %v2019
      %2108 = vst.msk [vmem:[#allocation2 + $0x24] sm:$0xf] %vm2098, %v2021
      %2109 = vst.msk [vmem:[#allocation2 + $0x28] sm:$0xf] %vm2098, %v2023
      %2110 = vst.msk [vmem:[#allocation2 + $0x2c] sm:$0xf] %vm2098, %v2025
      %2111 = vst.msk [vmem:[#allocation2 + $0x30] sm:$0xf] %vm2098, %v2027
      %2112 = vst.msk [vmem:[#allocation2 + $0x34] sm:$0xf] %vm2098, %v2029
      %2113 = vst.msk [vmem:[#allocation2 + $0x38] sm:$0xf] %vm2098, %v2031
      %2114 = vst.msk [vmem:[#allocation2 + $0x3c] sm:$0xf] %vm2098, %v2033
      %2115 = vst.msk [vmem:[#allocation2 + $0x40] sm:$0xf] %vm2098, %v2035
      %2116 = vst.msk [vmem:[#allocation2 + $0x44] sm:$0xf] %vm2098, %v2037
      %2117 = vst.msk [vmem:[#allocation2 + $0x48] sm:$0xf] %vm2098, %v2039
      %2118 = vst.msk [vmem:[#allocation2 + $0x4c] sm:$0xf] %vm2098, %v2041
      %2119 = vst.msk [vmem:[#allocation2 + $0x50] sm:$0xf] %vm2098, %v2043
      %2120 = vst.msk [vmem:[#allocation2 + $0x54] sm:$0xf] %vm2098, %v2045
      %2121 = vst.msk [vmem:[#allocation2 + $0x58] sm:$0xf] %vm2098, %v2047
      %2122 = vst.msk [vmem:[#allocation2 + $0x5c] sm:$0xf] %vm2098, %v2049
      %2123 = vst.msk [vmem:[#allocation2 + $0x60] sm:$0xf] %vm2098, %v2051
      %2124 = vst.msk [vmem:[#allocation2 + $0x64] sm:$0xf] %vm2098, %v2053
      %2125 = vst.msk [vmem:[#allocation2 + $0x68] sm:$0xf] %vm2098, %v2055
      %2126 = vst.msk [vmem:[#allocation2 + $0x6c] sm:$0xf] %vm2098, %v2057
      %2127 = vst.msk [vmem:[#allocation2 + $0x70] sm:$0xf] %vm2098, %v2059
      %2128 = vst.msk [vmem:[#allocation2 + $0x74] sm:$0xf] %vm2098, %v2061
      %2129 = vst.msk [vmem:[#allocation2 + $0x78] sm:$0xf] %vm2098, %v2063
      %2130 = vst.msk [vmem:[#allocation2 + $0x7c] sm:$0xf] %vm2098, %v2065
      %v2131 = vld [vmem:[%s371] sm:$0xe]
      %v2132 = vld [vmem:[%s371 + $0x4] sm:$0xf]
      %v2133 = vld [vmem:[%s371 + $0x8] sm:$0x1]
      %v2134 = vld [vmem:[%s371 + $0xc] sm:$0xe]
      %v2135 = vld [vmem:[%s371 + $0x10] sm:$0xf]
      %v2136 = vld [vmem:[%s371 + $0x14] sm:$0x1]
      %v2137 = vld [vmem:[%s371 + $0x18] sm:$0xe]
      %v2138 = vld [vmem:[%s371 + $0x1c] sm:$0xf]
      %v2139 = vld [vmem:[%s371 + $0x20] sm:$0x1]
      %v2140 = vld [vmem:[%s371 + $0x24] sm:$0xe]
      %v2141 = vld [vmem:[%s371 + $0x28] sm:$0xf]
      %v2142 = vld [vmem:[%s371 + $0x2c] sm:$0x1]
      %v2143 = vld [vmem:[%s371 + $0x30] sm:$0xe]
      %v2144 = vld [vmem:[%s371 + $0x34] sm:$0xf]
      %v2145 = vld [vmem:[%s371 + $0x38] sm:$0x1]
      %v2146 = vld [vmem:[%s371 + $0x3c] sm:$0xe]
      %v2147 = vld [vmem:[%s371 + $0x40] sm:$0xf]
      %v2148 = vld [vmem:[%s371 + $0x44] sm:$0x1]
      %v2149 = vld [vmem:[%s371 + $0x48] sm:$0xe]
      %v2150 = vld [vmem:[%s371 + $0x4c] sm:$0xf]
      %v2151 = vld [vmem:[%s371 + $0x50] sm:$0x1]
      %v2152 = vld [vmem:[%s371 + $0x54] sm:$0xe]
      %v2153 = vld [vmem:[%s371 + $0x58] sm:$0xf]
      %v2154 = vld [vmem:[%s371 + $0x5c] sm:$0x1]
      %v2155 = vld [vmem:[%s371 + $0x60] sm:$0xe]
      %v2156 = vld [vmem:[%s371 + $0x64] sm:$0xf]
      %v2157 = vld [vmem:[%s371 + $0x68] sm:$0x1]
      %v2158 = vld [vmem:[%s371 + $0x6c] sm:$0xe]
      %v2159 = vld [vmem:[%s371 + $0x70] sm:$0xf]
      %v2160 = vld [vmem:[%s371 + $0x74] sm:$0x1]
      %v2161 = vld [vmem:[%s371 + $0x78] sm:$0xe]
      %v2162 = vld [vmem:[%s371 + $0x7c] sm:$0xf]
      %v2163 = vld [vmem:[%s371 + $0x80] sm:$0x1]
      %v2164 = vld [vmem:[%s371 + $0x84] sm:$0xe]
      %v2165 = vld [vmem:[%s371 + $0x88] sm:$0xf]
      %v2166 = vld [vmem:[%s371 + $0x8c] sm:$0x1]
      %v2167 = vld [vmem:[%s371 + $0x90] sm:$0xe]
      %v2168 = vld [vmem:[%s371 + $0x94] sm:$0xf]
      %v2169 = vld [vmem:[%s371 + $0x98] sm:$0x1]
      %v2170 = vld [vmem:[%s371 + $0x9c] sm:$0xe]
      %v2171 = vld [vmem:[%s371 + $0xa0] sm:$0xf]
      %v2172 = vld [vmem:[%s371 + $0xa4] sm:$0x1]
      %v2173 = vld [vmem:[%s371 + $0xa8] sm:$0xe]
      %v2174 = vld [vmem:[%s371 + $0xac] sm:$0xf]
      %v2175 = vld [vmem:[%s371 + $0xb0] sm:$0x1]
      %v2176 = vld [vmem:[%s371 + $0xb4] sm:$0xe]
      %v2177 = vld [vmem:[%s371 + $0xb8] sm:$0xf]
      %v2178 = vld [vmem:[%s371 + $0xbc] sm:$0x1]
      %v2227 = vrot.slane %v2131, 5
      %v2228 = vrot.slane %v2227, 4
      %v2229 = vrot.slane %v2132, 5
      %v2230 = vsel %vm1135, %v2228, %v2229
      %v2231 = vrot.slane %v2229, 4
      %v2232 = vrot.slane %v2133, 5
      %v2233 = vsel %vm1135, %v2231, %v2232
      %v2234 = vrot.slane %v2134, 5
      %v2235 = vrot.slane %v2234, 4
      %v2236 = vrot.slane %v2135, 5
      %v2237 = vsel %vm1135, %v2235, %v2236
      %v2238 = vrot.slane %v2236, 4
      %v2239 = vrot.slane %v2136, 5
      %v2240 = vsel %vm1135, %v2238, %v2239
      %v2241 = vrot.slane %v2137, 5
      %v2242 = vrot.slane %v2241, 4
      %v2243 = vrot.slane %v2138, 5
      %v2244 = vsel %vm1135, %v2242, %v2243
      %v2245 = vrot.slane %v2243, 4
      %v2246 = vrot.slane %v2139, 5
      %v2247 = vsel %vm1135, %v2245, %v2246
      %v2248 = vrot.slane %v2140, 5
      %v2249 = vrot.slane %v2248, 4
      %v2250 = vrot.slane %v2141, 5
      %v2251 = vsel %vm1135, %v2249, %v2250
      %v2252 = vrot.slane %v2250, 4
      %v2253 = vrot.slane %v2142, 5
      %v2254 = vsel %vm1135, %v2252, %v2253
      %v2255 = vrot.slane %v2143, 5
      %v2256 = vrot.slane %v2255, 4
      %v2257 = vrot.slane %v2144, 5
      %v2258 = vsel %vm1135, %v2256, %v2257
      %v2259 = vrot.slane %v2257, 4
      %v2260 = vrot.slane %v2145, 5
      %v2261 = vsel %vm1135, %v2259, %v2260
      %v2262 = vrot.slane %v2146, 5
      %v2263 = vrot.slane %v2262, 4
      %v2264 = vrot.slane %v2147, 5
      %v2265 = vsel %vm1135, %v2263, %v2264
      %v2266 = vrot.slane %v2264, 4
      %v2267 = vrot.slane %v2148, 5
      %v2268 = vsel %vm1135, %v2266, %v2267
      %v2269 = vrot.slane %v2149, 5
      %v2270 = vrot.slane %v2269, 4
      %v2271 = vrot.slane %v2150, 5
      %v2272 = vsel %vm1135, %v2270, %v2271
      %v2273 = vrot.slane %v2271, 4
      %v2274 = vrot.slane %v2151, 5
      %v2275 = vsel %vm1135, %v2273, %v2274
      %v2276 = vrot.slane %v2152, 5
      %v2277 = vrot.slane %v2276, 4
      %v2278 = vrot.slane %v2153, 5
      %v2279 = vsel %vm1135, %v2277, %v2278
      %v2280 = vrot.slane %v2278, 4
      %v2281 = vrot.slane %v2154, 5
      %v2282 = vsel %vm1135, %v2280, %v2281
      %v2283 = vrot.slane %v2155, 5
      %v2284 = vrot.slane %v2283, 4
      %v2285 = vrot.slane %v2156, 5
      %v2286 = vsel %vm1135, %v2284, %v2285
      %v2287 = vrot.slane %v2285, 4
      %v2288 = vrot.slane %v2157, 5
      %v2289 = vsel %vm1135, %v2287, %v2288
      %v2290 = vrot.slane %v2158, 5
      %v2291 = vrot.slane %v2290, 4
      %v2292 = vrot.slane %v2159, 5
      %v2293 = vsel %vm1135, %v2291, %v2292
      %v2294 = vrot.slane %v2292, 4
      %v2295 = vrot.slane %v2160, 5
      %v2296 = vsel %vm1135, %v2294, %v2295
      %v2297 = vrot.slane %v2161, 5
      %v2298 = vrot.slane %v2297, 4
      %v2299 = vrot.slane %v2162, 5
      %v2300 = vsel %vm1135, %v2298, %v2299
      %v2301 = vrot.slane %v2299, 4
      %v2302 = vrot.slane %v2163, 5
      %v2303 = vsel %vm1135, %v2301, %v2302
      %v2304 = vrot.slane %v2164, 5
      %v2305 = vrot.slane %v2304, 4
      %v2306 = vrot.slane %v2165, 5
      %v2307 = vsel %vm1135, %v2305, %v2306
      %v2308 = vrot.slane %v2306, 4
      %v2309 = vrot.slane %v2166, 5
      %v2310 = vsel %vm1135, %v2308, %v2309
      %v2311 = vrot.slane %v2167, 5
      %v2312 = vrot.slane %v2311, 4
      %v2313 = vrot.slane %v2168, 5
      %v2314 = vsel %vm1135, %v2312, %v2313
      %v2315 = vrot.slane %v2313, 4
      %v2316 = vrot.slane %v2169, 5
      %v2317 = vsel %vm1135, %v2315, %v2316
      %v2318 = vrot.slane %v2170, 5
      %v2319 = vrot.slane %v2318, 4
      %v2320 = vrot.slane %v2171, 5
      %v2321 = vsel %vm1135, %v2319, %v2320
      %v2322 = vrot.slane %v2320, 4
      %v2323 = vrot.slane %v2172, 5
      %v2324 = vsel %vm1135, %v2322, %v2323
      %v2325 = vrot.slane %v2173, 5
      %v2326 = vrot.slane %v2325, 4
      %v2327 = vrot.slane %v2174, 5
      %v2328 = vsel %vm1135, %v2326, %v2327
      %v2329 = vrot.slane %v2327, 4
      %v2330 = vrot.slane %v2175, 5
      %v2331 = vsel %vm1135, %v2329, %v2330
      %v2332 = vrot.slane %v2176, 5
      %v2333 = vrot.slane %v2332, 4
      %v2334 = vrot.slane %v2177, 5
      %v2335 = vsel %vm1135, %v2333, %v2334
      %v2336 = vrot.slane %v2334, 4
      %v2337 = vrot.slane %v2178, 5
      %v2338 = vsel %vm1135, %v2336, %v2337
      %2339 = vrot.lane.b32.xlu0 %v2230, 20
      %v2340 = vpop.permute.xlu0 %2339
      %2341 = vrot.lane.b32.xlu0 %v2233, 20
      %v2342 = vpop.permute.xlu0 %2341
      %2343 = vrot.lane.b32.xlu0 %v2237, 20
      %v2344 = vpop.permute.xlu0 %2343
      %2345 = vrot.lane.b32.xlu0 %v2240, 20
      %v2346 = vpop.permute.xlu0 %2345
      %2347 = vrot.lane.b32.xlu0 %v2244, 20
      %v2348 = vpop.permute.xlu0 %2347
      %2349 = vrot.lane.b32.xlu0 %v2247, 20
      %v2350 = vpop.permute.xlu0 %2349
      %2351 = vrot.lane.b32.xlu0 %v2251, 20
      %v2352 = vpop.permute.xlu0 %2351
      %2353 = vrot.lane.b32.xlu0 %v2254, 20
      %v2354 = vpop.permute.xlu0 %2353
      %2355 = vrot.lane.b32.xlu0 %v2258, 20
      %v2356 = vpop.permute.xlu0 %2355
      %2357 = vrot.lane.b32.xlu0 %v2261, 20
      %v2358 = vpop.permute.xlu0 %2357
      %2359 = vrot.lane.b32.xlu0 %v2265, 20
      %v2360 = vpop.permute.xlu0 %2359
      %2361 = vrot.lane.b32.xlu0 %v2268, 20
      %v2362 = vpop.permute.xlu0 %2361
      %2363 = vrot.lane.b32.xlu0 %v2272, 20
      %v2364 = vpop.permute.xlu0 %2363
      %2365 = vrot.lane.b32.xlu0 %v2275, 20
      %v2366 = vpop.permute.xlu0 %2365
      %2367 = vrot.lane.b32.xlu0 %v2279, 20
      %v2368 = vpop.permute.xlu0 %2367
      %2369 = vrot.lane.b32.xlu0 %v2282, 20
      %v2370 = vpop.permute.xlu0 %2369
      %2371 = vrot.lane.b32.xlu0 %v2286, 20
      %v2372 = vpop.permute.xlu0 %2371
      %2373 = vrot.lane.b32.xlu0 %v2289, 20
      %v2374 = vpop.permute.xlu0 %2373
      %2375 = vrot.lane.b32.xlu0 %v2293, 20
      %v2376 = vpop.permute.xlu0 %2375
      %2377 = vrot.lane.b32.xlu0 %v2296, 20
      %v2378 = vpop.permute.xlu0 %2377
      %2379 = vrot.lane.b32.xlu0 %v2300, 20
      %v2380 = vpop.permute.xlu0 %2379
      %2381 = vrot.lane.b32.xlu0 %v2303, 20
      %v2382 = vpop.permute.xlu0 %2381
      %2383 = vrot.lane.b32.xlu0 %v2307, 20
      %v2384 = vpop.permute.xlu0 %2383
      %2385 = vrot.lane.b32.xlu0 %v2310, 20
      %v2386 = vpop.permute.xlu0 %2385
      %2387 = vrot.lane.b32.xlu0 %v2314, 20
      %v2388 = vpop.permute.xlu0 %2387
      %2389 = vrot.lane.b32.xlu0 %v2317, 20
      %v2390 = vpop.permute.xlu0 %2389
      %2391 = vrot.lane.b32.xlu0 %v2321, 20
      %v2392 = vpop.permute.xlu0 %2391
      %2393 = vrot.lane.b32.xlu0 %v2324, 20
      %v2394 = vpop.permute.xlu0 %2393
      %2395 = vrot.lane.b32.xlu0 %v2328, 20
      %v2396 = vpop.permute.xlu0 %2395
      %2397 = vrot.lane.b32.xlu0 %v2331, 20
      %v2398 = vpop.permute.xlu0 %2397
      %2399 = vrot.lane.b32.xlu0 %v2335, 20
      %v2400 = vpop.permute.xlu0 %2399
      %2401 = vrot.lane.b32.xlu0 %v2338, 20
      %v2402 = vpop.permute.xlu0 %2401
      %vm2435 = vcmask 191648
      %2436 = vst.msk [vmem:[#allocation2] sm:$0xf] %vm2435, %v2340
      %2437 = vst.msk [vmem:[#allocation2 + $0x4] sm:$0xf] %vm2435, %v2342
      %2438 = vst.msk [vmem:[#allocation2 + $0x8] sm:$0xf] %vm2435, %v2344
      %2439 = vst.msk [vmem:[#allocation2 + $0xc] sm:$0xf] %vm2435, %v2346
      %2440 = vst.msk [vmem:[#allocation2 + $0x10] sm:$0xf] %vm2435, %v2348
      %2441 = vst.msk [vmem:[#allocation2 + $0x14] sm:$0xf] %vm2435, %v2350
      %2442 = vst.msk [vmem:[#allocation2 + $0x18] sm:$0xf] %vm2435, %v2352
      %2443 = vst.msk [vmem:[#allocation2 + $0x1c] sm:$0xf] %vm2435, %v2354
      %2444 = vst.msk [vmem:[#allocation2 + $0x20] sm:$0xf] %vm2435, %v2356
      %2445 = vst.msk [vmem:[#allocation2 + $0x24] sm:$0xf] %vm2435, %v2358
      %2446 = vst.msk [vmem:[#allocation2 + $0x28] sm:$0xf] %vm2435, %v2360
      %2447 = vst.msk [vmem:[#allocation2 + $0x2c] sm:$0xf] %vm2435, %v2362
      %2448 = vst.msk [vmem:[#allocation2 + $0x30] sm:$0xf] %vm2435, %v2364
      %2449 = vst.msk [vmem:[#allocation2 + $0x34] sm:$0xf] %vm2435, %v2366
      %2450 = vst.msk [vmem:[#allocation2 + $0x38] sm:$0xf] %vm2435, %v2368
      %2451 = vst.msk [vmem:[#allocation2 + $0x3c] sm:$0xf] %vm2435, %v2370
      %2452 = vst.msk [vmem:[#allocation2 + $0x40] sm:$0xf] %vm2435, %v2372
      %2453 = vst.msk [vmem:[#allocation2 + $0x44] sm:$0xf] %vm2435, %v2374
      %2454 = vst.msk [vmem:[#allocation2 + $0x48] sm:$0xf] %vm2435, %v2376
      %2455 = vst.msk [vmem:[#allocation2 + $0x4c] sm:$0xf] %vm2435, %v2378
      %2456 = vst.msk [vmem:[#allocation2 + $0x50] sm:$0xf] %vm2435, %v2380
      %2457 = vst.msk [vmem:[#allocation2 + $0x54] sm:$0xf] %vm2435, %v2382
      %2458 = vst.msk [vmem:[#allocation2 + $0x58] sm:$0xf] %vm2435, %v2384
      %2459 = vst.msk [vmem:[#allocation2 + $0x5c] sm:$0xf] %vm2435, %v2386
      %2460 = vst.msk [vmem:[#allocation2 + $0x60] sm:$0xf] %vm2435, %v2388
      %2461 = vst.msk [vmem:[#allocation2 + $0x64] sm:$0xf] %vm2435, %v2390
      %2462 = vst.msk [vmem:[#allocation2 + $0x68] sm:$0xf] %vm2435, %v2392
      %2463 = vst.msk [vmem:[#allocation2 + $0x6c] sm:$0xf] %vm2435, %v2394
      %2464 = vst.msk [vmem:[#allocation2 + $0x70] sm:$0xf] %vm2435, %v2396
      %2465 = vst.msk [vmem:[#allocation2 + $0x74] sm:$0xf] %vm2435, %v2398
      %2466 = vst.msk [vmem:[#allocation2 + $0x78] sm:$0xf] %vm2435, %v2400
      %2467 = vst.msk [vmem:[#allocation2 + $0x7c] sm:$0xf] %vm2435, %v2402
      %v2468 = vld [vmem:[%s382] sm:$0xf]
      %v2469 = vld [vmem:[%s382 + $0x4] sm:$0xf]
      %v2470 = vld [vmem:[%s382 + $0xc] sm:$0xf]
      %v2471 = vld [vmem:[%s382 + $0x10] sm:$0xf]
      %v2472 = vld [vmem:[%s382 + $0x18] sm:$0xf]
      %v2473 = vld [vmem:[%s382 + $0x1c] sm:$0xf]
      %v2474 = vld [vmem:[%s382 + $0x24] sm:$0xf]
      %v2475 = vld [vmem:[%s382 + $0x28] sm:$0xf]
      %v2476 = vld [vmem:[%s382 + $0x30] sm:$0xf]
      %v2477 = vld [vmem:[%s382 + $0x34] sm:$0xf]
      %v2478 = vld [vmem:[%s382 + $0x3c] sm:$0xf]
      %v2479 = vld [vmem:[%s382 + $0x40] sm:$0xf]
      %v2480 = vld [vmem:[%s382 + $0x48] sm:$0xf]
      %v2481 = vld [vmem:[%s382 + $0x4c] sm:$0xf]
      %v2482 = vld [vmem:[%s382 + $0x54] sm:$0xf]
      %v2483 = vld [vmem:[%s382 + $0x58] sm:$0xf]
      %v2484 = vld [vmem:[%s382 + $0x60] sm:$0xf]
      %v2485 = vld [vmem:[%s382 + $0x64] sm:$0xf]
      %v2486 = vld [vmem:[%s382 + $0x6c] sm:$0xf]
      %v2487 = vld [vmem:[%s382 + $0x70] sm:$0xf]
      %v2488 = vld [vmem:[%s382 + $0x78] sm:$0xf]
      %v2489 = vld [vmem:[%s382 + $0x7c] sm:$0xf]
      %v2490 = vld [vmem:[%s382 + $0x84] sm:$0xf]
      %v2491 = vld [vmem:[%s382 + $0x88] sm:$0xf]
      %v2492 = vld [vmem:[%s382 + $0x90] sm:$0xf]
      %v2493 = vld [vmem:[%s382 + $0x94] sm:$0xf]
      %v2494 = vld [vmem:[%s382 + $0x9c] sm:$0xf]
      %v2495 = vld [vmem:[%s382 + $0xa0] sm:$0xf]
      %v2496 = vld [vmem:[%s382 + $0xa8] sm:$0xf]
      %v2497 = vld [vmem:[%s382 + $0xac] sm:$0xf]
      %v2498 = vld [vmem:[%s382 + $0xb4] sm:$0xf]
      %v2499 = vld [vmem:[%s382 + $0xb8] sm:$0xf]
      %2532 = vrot.lane.b32.xlu0 %v2468, 24
      %v2533 = vpop.permute.xlu0 %2532
      %2534 = vrot.lane.b32.xlu0 %v2469, 24
      %v2535 = vpop.permute.xlu0 %2534
      %2536 = vrot.lane.b32.xlu0 %v2470, 24
      %v2537 = vpop.permute.xlu0 %2536
      %2538 = vrot.lane.b32.xlu0 %v2471, 24
      %v2539 = vpop.permute.xlu0 %2538
      %2540 = vrot.lane.b32.xlu0 %v2472, 24
      %v2541 = vpop.permute.xlu0 %2540
      %2542 = vrot.lane.b32.xlu0 %v2473, 24
      %v2543 = vpop.permute.xlu0 %2542
      %2544 = vrot.lane.b32.xlu0 %v2474, 24
      %v2545 = vpop.permute.xlu0 %2544
      %2546 = vrot.lane.b32.xlu0 %v2475, 24
      %v2547 = vpop.permute.xlu0 %2546
      %2548 = vrot.lane.b32.xlu0 %v2476, 24
      %v2549 = vpop.permute.xlu0 %2548
      %2550 = vrot.lane.b32.xlu0 %v2477, 24
      %v2551 = vpop.permute.xlu0 %2550
      %2552 = vrot.lane.b32.xlu0 %v2478, 24
      %v2553 = vpop.permute.xlu0 %2552
      %2554 = vrot.lane.b32.xlu0 %v2479, 24
      %v2555 = vpop.permute.xlu0 %2554
      %2556 = vrot.lane.b32.xlu0 %v2480, 24
      %v2557 = vpop.permute.xlu0 %2556
      %2558 = vrot.lane.b32.xlu0 %v2481, 24
      %v2559 = vpop.permute.xlu0 %2558
      %2560 = vrot.lane.b32.xlu0 %v2482, 24
      %v2561 = vpop.permute.xlu0 %2560
      %2562 = vrot.lane.b32.xlu0 %v2483, 24
      %v2563 = vpop.permute.xlu0 %2562
      %2564 = vrot.lane.b32.xlu0 %v2484, 24
      %v2565 = vpop.permute.xlu0 %2564
      %2566 = vrot.lane.b32.xlu0 %v2485, 24
      %v2567 = vpop.permute.xlu0 %2566
      %2568 = vrot.lane.b32.xlu0 %v2486, 24
      %v2569 = vpop.permute.xlu0 %2568
      %2570 = vrot.lane.b32.xlu0 %v2487, 24
      %v2571 = vpop.permute.xlu0 %2570
      %2572 = vrot.lane.b32.xlu0 %v2488, 24
      %v2573 = vpop.permute.xlu0 %2572
      %2574 = vrot.lane.b32.xlu0 %v2489, 24
      %v2575 = vpop.permute.xlu0 %2574
      %2576 = vrot.lane.b32.xlu0 %v2490, 24
      %v2577 = vpop.permute.xlu0 %2576
      %2578 = vrot.lane.b32.xlu0 %v2491, 24
      %v2579 = vpop.permute.xlu0 %2578
      %2580 = vrot.lane.b32.xlu0 %v2492, 24
      %v2581 = vpop.permute.xlu0 %2580
      %2582 = vrot.lane.b32.xlu0 %v2493, 24
      %v2583 = vpop.permute.xlu0 %2582
      %2584 = vrot.lane.b32.xlu0 %v2494, 24
      %v2585 = vpop.permute.xlu0 %2584
      %2586 = vrot.lane.b32.xlu0 %v2495, 24
      %v2587 = vpop.permute.xlu0 %2586
      %2588 = vrot.lane.b32.xlu0 %v2496, 24
      %v2589 = vpop.permute.xlu0 %2588
      %2590 = vrot.lane.b32.xlu0 %v2497, 24
      %v2591 = vpop.permute.xlu0 %2590
      %2592 = vrot.lane.b32.xlu0 %v2498, 24
      %v2593 = vpop.permute.xlu0 %2592
      %2594 = vrot.lane.b32.xlu0 %v2499, 24
      %v2595 = vpop.permute.xlu0 %2594
      %vm2628 = vcmask 224448
      %2629 = vst.msk [vmem:[#allocation2] sm:$0xf] %vm2628, %v2533
      %2630 = vst.msk [vmem:[#allocation2 + $0x4] sm:$0xf] %vm2628, %v2535
      %2631 = vst.msk [vmem:[#allocation2 + $0x8] sm:$0xf] %vm2628, %v2537
      %2632 = vst.msk [vmem:[#allocation2 + $0xc] sm:$0xf] %vm2628, %v2539
      %2633 = vst.msk [vmem:[#allocation2 + $0x10] sm:$0xf] %vm2628, %v2541
      %2634 = vst.msk [vmem:[#allocation2 + $0x14] sm:$0xf] %vm2628, %v2543
      %2635 = vst.msk [vmem:[#allocation2 + $0x18] sm:$0xf] %vm2628, %v2545
      %2636 = vst.msk [vmem:[#allocation2 + $0x1c] sm:$0xf] %vm2628, %v2547
      %2637 = vst.msk [vmem:[#allocation2 + $0x20] sm:$0xf] %vm2628, %v2549
      %2638 = vst.msk [vmem:[#allocation2 + $0x24] sm:$0xf] %vm2628, %v2551
      %2639 = vst.msk [vmem:[#allocation2 + $0x28] sm:$0xf] %vm2628, %v2553
      %2640 = vst.msk [vmem:[#allocation2 + $0x2c] sm:$0xf] %vm2628, %v2555
      %2641 = vst.msk [vmem:[#allocation2 + $0x30] sm:$0xf] %vm2628, %v2557
      %2642 = vst.msk [vmem:[#allocation2 + $0x34] sm:$0xf] %vm2628, %v2559
      %2643 = vst.msk [vmem:[#allocation2 + $0x38] sm:$0xf] %vm2628, %v2561
      %2644 = vst.msk [vmem:[#allocation2 + $0x3c] sm:$0xf] %vm2628, %v2563
      %2645 = vst.msk [vmem:[#allocation2 + $0x40] sm:$0xf] %vm2628, %v2565
      %2646 = vst.msk [vmem:[#allocation2 + $0x44] sm:$0xf] %vm2628, %v2567
      %2647 = vst.msk [vmem:[#allocation2 + $0x48] sm:$0xf] %vm2628, %v2569
      %2648 = vst.msk [vmem:[#allocation2 + $0x4c] sm:$0xf] %vm2628, %v2571
      %2649 = vst.msk [vmem:[#allocation2 + $0x50] sm:$0xf] %vm2628, %v2573
      %2650 = vst.msk [vmem:[#allocation2 + $0x54] sm:$0xf] %vm2628, %v2575
      %2651 = vst.msk [vmem:[#allocation2 + $0x58] sm:$0xf] %vm2628, %v2577
      %2652 = vst.msk [vmem:[#allocation2 + $0x5c] sm:$0xf] %vm2628, %v2579
      %2653 = vst.msk [vmem:[#allocation2 + $0x60] sm:$0xf] %vm2628, %v2581
      %2654 = vst.msk [vmem:[#allocation2 + $0x64] sm:$0xf] %vm2628, %v2583
      %2655 = vst.msk [vmem:[#allocation2 + $0x68] sm:$0xf] %vm2628, %v2585
      %2656 = vst.msk [vmem:[#allocation2 + $0x6c] sm:$0xf] %vm2628, %v2587
      %2657 = vst.msk [vmem:[#allocation2 + $0x70] sm:$0xf] %vm2628, %v2589
      %2658 = vst.msk [vmem:[#allocation2 + $0x74] sm:$0xf] %vm2628, %v2591
      %2659 = vst.msk [vmem:[#allocation2 + $0x78] sm:$0xf] %vm2628, %v2593
      %2660 = vst.msk [vmem:[#allocation2 + $0x7c] sm:$0xf] %vm2628, %v2595
      %v2661 = vld [vmem:[%s382] sm:$0xf]
      %v2662 = vld [vmem:[%s382 + $0x4] sm:$0xf]
      %v2663 = vld [vmem:[%s382 + $0x8] sm:$0x1]
      %v2664 = vld [vmem:[%s382 + $0xc] sm:$0xf]
      %v2665 = vld [vmem:[%s382 + $0x10] sm:$0xf]
      %v2666 = vld [vmem:[%s382 + $0x14] sm:$0x1]
      %v2667 = vld [vmem:[%s382 + $0x18] sm:$0xf]
      %v2668 = vld [vmem:[%s382 + $0x1c] sm:$0xf]
      %v2669 = vld [vmem:[%s382 + $0x20] sm:$0x1]
      %v2670 = vld [vmem:[%s382 + $0x24] sm:$0xf]
      %v2671 = vld [vmem:[%s382 + $0x28] sm:$0xf]
      %v2672 = vld [vmem:[%s382 + $0x2c] sm:$0x1]
      %v2673 = vld [vmem:[%s382 + $0x30] sm:$0xf]
      %v2674 = vld [vmem:[%s382 + $0x34] sm:$0xf]
      %v2675 = vld [vmem:[%s382 + $0x38] sm:$0x1]
      %v2676 = vld [vmem:[%s382 + $0x3c] sm:$0xf]
      %v2677 = vld [vmem:[%s382 + $0x40] sm:$0xf]
      %v2678 = vld [vmem:[%s382 + $0x44] sm:$0x1]
      %v2679 = vld [vmem:[%s382 + $0x48] sm:$0xf]
      %v2680 = vld [vmem:[%s382 + $0x4c] sm:$0xf]
      %v2681 = vld [vmem:[%s382 + $0x50] sm:$0x1]
      %v2682 = vld [vmem:[%s382 + $0x54] sm:$0xf]
      %v2683 = vld [vmem:[%s382 + $0x58] sm:$0xf]
      %v2684 = vld [vmem:[%s382 + $0x5c] sm:$0x1]
      %v2685 = vld [vmem:[%s382 + $0x60] sm:$0xf]
      %v2686 = vld [vmem:[%s382 + $0x64] sm:$0xf]
      %v2687 = vld [vmem:[%s382 + $0x68] sm:$0x1]
      %v2688 = vld [vmem:[%s382 + $0x6c] sm:$0xf]
      %v2689 = vld [vmem:[%s382 + $0x70] sm:$0xf]
      %v2690 = vld [vmem:[%s382 + $0x74] sm:$0x1]
      %v2691 = vld [vmem:[%s382 + $0x78] sm:$0xf]
      %v2692 = vld [vmem:[%s382 + $0x7c] sm:$0xf]
      %v2693 = vld [vmem:[%s382 + $0x80] sm:$0x1]
      %v2694 = vld [vmem:[%s382 + $0x84] sm:$0xf]
      %v2695 = vld [vmem:[%s382 + $0x88] sm:$0xf]
      %v2696 = vld [vmem:[%s382 + $0x8c] sm:$0x1]
      %v2697 = vld [vmem:[%s382 + $0x90] sm:$0xf]
      %v2698 = vld [vmem:[%s382 + $0x94] sm:$0xf]
      %v2699 = vld [vmem:[%s382 + $0x98] sm:$0x1]
      %v2700 = vld [vmem:[%s382 + $0x9c] sm:$0xf]
      %v2701 = vld [vmem:[%s382 + $0xa0] sm:$0xf]
      %v2702 = vld [vmem:[%s382 + $0xa4] sm:$0x1]
      %v2703 = vld [vmem:[%s382 + $0xa8] sm:$0xf]
      %v2704 = vld [vmem:[%s382 + $0xac] sm:$0xf]
      %v2705 = vld [vmem:[%s382 + $0xb0] sm:$0x1]
      %v2706 = vld [vmem:[%s382 + $0xb4] sm:$0xf]
      %v2707 = vld [vmem:[%s382 + $0xb8] sm:$0xf]
      %v2708 = vld [vmem:[%s382 + $0xbc] sm:$0x1]
      %v2710 = vshrl.u32 %v2661, 16
      %v2712 = vrot.slane %v2710, 4
      %v2713 = vshll.u32 %v2661, 16
      %v2715 = vrot.slane %v2713, 5
      %v2716 = vor.u32 %v2712, %v2715
      %v2717 = vrot.slane %v2716, 4
      %v2719 = vshll.u32 %v2662, 16
      %v2721 = vrot.slane %v2719, 5
      %v2722 = vsel %vm523, %v2717, %v2721
      %v2723 = vshrl.u32 %v2662, 16
      %v2725 = vrot.slane %v2723, 4
      %v2726 = vor.u32 %v2725, %v2721
      %v2727 = vrot.slane %v2726, 4
      %v2729 = vshll.u32 %v2663, 16
      %v2731 = vrot.slane %v2729, 5
      %v2732 = vsel %vm523, %v2727, %v2731
      %v2734 = vshrl.u32 %v2664, 16
      %v2736 = vrot.slane %v2734, 4
      %v2737 = vshll.u32 %v2664, 16
      %v2739 = vrot.slane %v2737, 5
      %v2740 = vor.u32 %v2736, %v2739
      %v2741 = vrot.slane %v2740, 4
      %v2743 = vshll.u32 %v2665, 16
      %v2745 = vrot.slane %v2743, 5
      %v2746 = vsel %vm523, %v2741, %v2745
      %v2747 = vshrl.u32 %v2665, 16
      %v2749 = vrot.slane %v2747, 4
      %v2750 = vor.u32 %v2749, %v2745
      %v2751 = vrot.slane %v2750, 4
      %v2753 = vshll.u32 %v2666, 16
      %v2755 = vrot.slane %v2753, 5
      %v2756 = vsel %vm523, %v2751, %v2755
      %v2758 = vshrl.u32 %v2667, 16
      %v2760 = vrot.slane %v2758, 4
      %v2761 = vshll.u32 %v2667, 16
      %v2763 = vrot.slane %v2761, 5
      %v2764 = vor.u32 %v2760, %v2763
      %v2765 = vrot.slane %v2764, 4
      %v2767 = vshll.u32 %v2668, 16
      %v2769 = vrot.slane %v2767, 5
      %v2770 = vsel %vm523, %v2765, %v2769
      %v2771 = vshrl.u32 %v2668, 16
      %v2773 = vrot.slane %v2771, 4
      %v2774 = vor.u32 %v2773, %v2769
      %v2775 = vrot.slane %v2774, 4
      %v2777 = vshll.u32 %v2669, 16
      %v2779 = vrot.slane %v2777, 5
      %v2780 = vsel %vm523, %v2775, %v2779
      %v2782 = vshrl.u32 %v2670, 16
      %v2784 = vrot.slane %v2782, 4
      %v2785 = vshll.u32 %v2670, 16
      %v2787 = vrot.slane %v2785, 5
      %v2788 = vor.u32 %v2784, %v2787
      %v2789 = vrot.slane %v2788, 4
      %v2791 = vshll.u32 %v2671, 16
      %v2793 = vrot.slane %v2791, 5
      %v2794 = vsel %vm523, %v2789, %v2793
      %v2795 = vshrl.u32 %v2671, 16
      %v2797 = vrot.slane %v2795, 4
      %v2798 = vor.u32 %v2797, %v2793
      %v2799 = vrot.slane %v2798, 4
      %v2801 = vshll.u32 %v2672, 16
      %v2803 = vrot.slane %v2801, 5
      %v2804 = vsel %vm523, %v2799, %v2803
      %v2806 = vshrl.u32 %v2673, 16
      %v2808 = vrot.slane %v2806, 4
      %v2809 = vshll.u32 %v2673, 16
      %v2811 = vrot.slane %v2809, 5
      %v2812 = vor.u32 %v2808, %v2811
      %v2813 = vrot.slane %v2812, 4
      %v2815 = vshll.u32 %v2674, 16
      %v2817 = vrot.slane %v2815, 5
      %v2818 = vsel %vm523, %v2813, %v2817
      %v2819 = vshrl.u32 %v2674, 16
      %v2821 = vrot.slane %v2819, 4
      %v2822 = vor.u32 %v2821, %v2817
      %v2823 = vrot.slane %v2822, 4
      %v2825 = vshll.u32 %v2675, 16
      %v2827 = vrot.slane %v2825, 5
      %v2828 = vsel %vm523, %v2823, %v2827
      %v2830 = vshrl.u32 %v2676, 16
      %v2832 = vrot.slane %v2830, 4
      %v2833 = vshll.u32 %v2676, 16
      %v2835 = vrot.slane %v2833, 5
      %v2836 = vor.u32 %v2832, %v2835
      %v2837 = vrot.slane %v2836, 4
      %v2839 = vshll.u32 %v2677, 16
      %v2841 = vrot.slane %v2839, 5
      %v2842 = vsel %vm523, %v2837, %v2841
      %v2843 = vshrl.u32 %v2677, 16
      %v2845 = vrot.slane %v2843, 4
      %v2846 = vor.u32 %v2845, %v2841
      %v2847 = vrot.slane %v2846, 4
      %v2849 = vshll.u32 %v2678, 16
      %v2851 = vrot.slane %v2849, 5
      %v2852 = vsel %vm523, %v2847, %v2851
      %v2854 = vshrl.u32 %v2679, 16
      %v2856 = vrot.slane %v2854, 4
      %v2857 = vshll.u32 %v2679, 16
      %v2859 = vrot.slane %v2857, 5
      %v2860 = vor.u32 %v2856, %v2859
      %v2861 = vrot.slane %v2860, 4
      %v2863 = vshll.u32 %v2680, 16
      %v2865 = vrot.slane %v2863, 5
      %v2866 = vsel %vm523, %v2861, %v2865
      %v2867 = vshrl.u32 %v2680, 16
      %v2869 = vrot.slane %v2867, 4
      %v2870 = vor.u32 %v2869, %v2865
      %v2871 = vrot.slane %v2870, 4
      %v2873 = vshll.u32 %v2681, 16
      %v2875 = vrot.slane %v2873, 5
      %v2876 = vsel %vm523, %v2871, %v2875
      %v2878 = vshrl.u32 %v2682, 16
      %v2880 = vrot.slane %v2878, 4
      %v2881 = vshll.u32 %v2682, 16
      %v2883 = vrot.slane %v2881, 5
      %v2884 = vor.u32 %v2880, %v2883
      %v2885 = vrot.slane %v2884, 4
      %v2887 = vshll.u32 %v2683, 16
      %v2889 = vrot.slane %v2887, 5
      %v2890 = vsel %vm523, %v2885, %v2889
      %v2891 = vshrl.u32 %v2683, 16
      %v2893 = vrot.slane %v2891, 4
      %v2894 = vor.u32 %v2893, %v2889
      %v2895 = vrot.slane %v2894, 4
      %v2897 = vshll.u32 %v2684, 16
      %v2899 = vrot.slane %v2897, 5
      %v2900 = vsel %vm523, %v2895, %v2899
      %v2902 = vshrl.u32 %v2685, 16
      %v2904 = vrot.slane %v2902, 4
      %v2905 = vshll.u32 %v2685, 16
      %v2907 = vrot.slane %v2905, 5
      %v2908 = vor.u32 %v2904, %v2907
      %v2909 = vrot.slane %v2908, 4
      %v2911 = vshll.u32 %v2686, 16
      %v2913 = vrot.slane %v2911, 5
      %v2914 = vsel %vm523, %v2909, %v2913
      %v2915 = vshrl.u32 %v2686, 16
      %v2917 = vrot.slane %v2915, 4
      %v2918 = vor.u32 %v2917, %v2913
      %v2919 = vrot.slane %v2918, 4
      %v2921 = vshll.u32 %v2687, 16
      %v2923 = vrot.slane %v2921, 5
      %v2924 = vsel %vm523, %v2919, %v2923
      %v2926 = vshrl.u32 %v2688, 16
      %v2928 = vrot.slane %v2926, 4
      %v2929 = vshll.u32 %v2688, 16
      %v2931 = vrot.slane %v2929, 5
      %v2932 = vor.u32 %v2928, %v2931
      %v2933 = vrot.slane %v2932, 4
      %v2935 = vshll.u32 %v2689, 16
      %v2937 = vrot.slane %v2935, 5
      %v2938 = vsel %vm523, %v2933, %v2937
      %v2939 = vshrl.u32 %v2689, 16
      %v2941 = vrot.slane %v2939, 4
      %v2942 = vor.u32 %v2941, %v2937
      %v2943 = vrot.slane %v2942, 4
      %v2945 = vshll.u32 %v2690, 16
      %v2947 = vrot.slane %v2945, 5
      %v2948 = vsel %vm523, %v2943, %v2947
      %v2950 = vshrl.u32 %v2691, 16
      %v2952 = vrot.slane %v2950, 4
      %v2953 = vshll.u32 %v2691, 16
      %v2955 = vrot.slane %v2953, 5
      %v2956 = vor.u32 %v2952, %v2955
      %v2957 = vrot.slane %v2956, 4
      %v2959 = vshll.u32 %v2692, 16
      %v2961 = vrot.slane %v2959, 5
      %v2962 = vsel %vm523, %v2957, %v2961
      %v2963 = vshrl.u32 %v2692, 16
      %v2965 = vrot.slane %v2963, 4
      %v2966 = vor.u32 %v2965, %v2961
      %v2967 = vrot.slane %v2966, 4
      %v2969 = vshll.u32 %v2693, 16
      %v2971 = vrot.slane %v2969, 5
      %v2972 = vsel %vm523, %v2967, %v2971
      %v2974 = vshrl.u32 %v2694, 16
      %v2976 = vrot.slane %v2974, 4
      %v2977 = vshll.u32 %v2694, 16
      %v2979 = vrot.slane %v2977, 5
      %v2980 = vor.u32 %v2976, %v2979
      %v2981 = vrot.slane %v2980, 4
      %v2983 = vshll.u32 %v2695, 16
      %v2985 = vrot.slane %v2983, 5
      %v2986 = vsel %vm523, %v2981, %v2985
      %v2987 = vshrl.u32 %v2695, 16
      %v2989 = vrot.slane %v2987, 4
      %v2990 = vor.u32 %v2989, %v2985
      %v2991 = vrot.slane %v2990, 4
      %v2993 = vshll.u32 %v2696, 16
      %v2995 = vrot.slane %v2993, 5
      %v2996 = vsel %vm523, %v2991, %v2995
      %v2998 = vshrl.u32 %v2697, 16
      %v3000 = vrot.slane %v2998, 4
      %v3001 = vshll.u32 %v2697, 16
      %v3003 = vrot.slane %v3001, 5
      %v3004 = vor.u32 %v3000, %v3003
      %v3005 = vrot.slane %v3004, 4
      %v3007 = vshll.u32 %v2698, 16
      %v3009 = vrot.slane %v3007, 5
      %v3010 = vsel %vm523, %v3005, %v3009
      %v3011 = vshrl.u32 %v2698, 16
      %v3013 = vrot.slane %v3011, 4
      %v3014 = vor.u32 %v3013, %v3009
      %v3015 = vrot.slane %v3014, 4
      %v3017 = vshll.u32 %v2699, 16
      %v3019 = vrot.slane %v3017, 5
      %v3020 = vsel %vm523, %v3015, %v3019
      %v3022 = vshrl.u32 %v2700, 16
      %v3024 = vrot.slane %v3022, 4
      %v3025 = vshll.u32 %v2700, 16
      %v3027 = vrot.slane %v3025, 5
      %v3028 = vor.u32 %v3024, %v3027
      %v3029 = vrot.slane %v3028, 4
      %v3031 = vshll.u32 %v2701, 16
      %v3033 = vrot.slane %v3031, 5
      %v3034 = vsel %vm523, %v3029, %v3033
      %v3035 = vshrl.u32 %v2701, 16
      %v3037 = vrot.slane %v3035, 4
      %v3038 = vor.u32 %v3037, %v3033
      %v3039 = vrot.slane %v3038, 4
      %v3041 = vshll.u32 %v2702, 16
      %v3043 = vrot.slane %v3041, 5
      %v3044 = vsel %vm523, %v3039, %v3043
      %v3046 = vshrl.u32 %v2703, 16
      %v3048 = vrot.slane %v3046, 4
      %v3049 = vshll.u32 %v2703, 16
      %v3051 = vrot.slane %v3049, 5
      %v3052 = vor.u32 %v3048, %v3051
      %v3053 = vrot.slane %v3052, 4
      %v3055 = vshll.u32 %v2704, 16
      %v3057 = vrot.slane %v3055, 5
      %v3058 = vsel %vm523, %v3053, %v3057
      %v3059 = vshrl.u32 %v2704, 16
      %v3061 = vrot.slane %v3059, 4
      %v3062 = vor.u32 %v3061, %v3057
      %v3063 = vrot.slane %v3062, 4
      %v3065 = vshll.u32 %v2705, 16
      %v3067 = vrot.slane %v3065, 5
      %v3068 = vsel %vm523, %v3063, %v3067
      %v3070 = vshrl.u32 %v2706, 16
      %v3072 = vrot.slane %v3070, 4
      %v3073 = vshll.u32 %v2706, 16
      %v3075 = vrot.slane %v3073, 5
      %v3076 = vor.u32 %v3072, %v3075
      %v3077 = vrot.slane %v3076, 4
      %v3079 = vshll.u32 %v2707, 16
      %v3081 = vrot.slane %v3079, 5
      %v3082 = vsel %vm523, %v3077, %v3081
      %v3083 = vshrl.u32 %v2707, 16
      %v3085 = vrot.slane %v3083, 4
      %v3086 = vor.u32 %v3085, %v3081
      %v3087 = vrot.slane %v3086, 4
      %v3089 = vshll.u32 %v2708, 16
      %v3091 = vrot.slane %v3089, 5
      %v3092 = vsel %vm523, %v3087, %v3091
      %3093 = vrot.lane.b32.xlu0 %v2722, 28
      %v3094 = vpop.permute.xlu0 %3093
      %3095 = vrot.lane.b32.xlu0 %v2732, 28
      %v3096 = vpop.permute.xlu0 %3095
      %3097 = vrot.lane.b32.xlu0 %v2746, 28
      %v3098 = vpop.permute.xlu0 %3097
      %3099 = vrot.lane.b32.xlu0 %v2756, 28
      %v3100 = vpop.permute.xlu0 %3099
      %3101 = vrot.lane.b32.xlu0 %v2770, 28
      %v3102 = vpop.permute.xlu0 %3101
      %3103 = vrot.lane.b32.xlu0 %v2780, 28
      %v3104 = vpop.permute.xlu0 %3103
      %3105 = vrot.lane.b32.xlu0 %v2794, 28
      %v3106 = vpop.permute.xlu0 %3105
      %3107 = vrot.lane.b32.xlu0 %v2804, 28
      %v3108 = vpop.permute.xlu0 %3107
      %3109 = vrot.lane.b32.xlu0 %v2818, 28
      %v3110 = vpop.permute.xlu0 %3109
      %3111 = vrot.lane.b32.xlu0 %v2828, 28
      %v3112 = vpop.permute.xlu0 %3111
      %3113 = vrot.lane.b32.xlu0 %v2842, 28
      %v3114 = vpop.permute.xlu0 %3113
      %3115 = vrot.lane.b32.xlu0 %v2852, 28
      %v3116 = vpop.permute.xlu0 %3115
      %3117 = vrot.lane.b32.xlu0 %v2866, 28
      %v3118 = vpop.permute.xlu0 %3117
      %3119 = vrot.lane.b32.xlu0 %v2876, 28
      %v3120 = vpop.permute.xlu0 %3119
      %3121 = vrot.lane.b32.xlu0 %v2890, 28
      %v3122 = vpop.permute.xlu0 %3121
      %3123 = vrot.lane.b32.xlu0 %v2900, 28
      %v3124 = vpop.permute.xlu0 %3123
      %3125 = vrot.lane.b32.xlu0 %v2914, 28
      %v3126 = vpop.permute.xlu0 %3125
      %3127 = vrot.lane.b32.xlu0 %v2924, 28
      %v3128 = vpop.permute.xlu0 %3127
      %3129 = vrot.lane.b32.xlu0 %v2938, 28
      %v3130 = vpop.permute.xlu0 %3129
      %3131 = vrot.lane.b32.xlu0 %v2948, 28
      %v3132 = vpop.permute.xlu0 %3131
      %3133 = vrot.lane.b32.xlu0 %v2962, 28
      %v3134 = vpop.permute.xlu0 %3133
      %3135 = vrot.lane.b32.xlu0 %v2972, 28
      %v3136 = vpop.permute.xlu0 %3135
      %3137 = vrot.lane.b32.xlu0 %v2986, 28
      %v3138 = vpop.permute.xlu0 %3137
      %3139 = vrot.lane.b32.xlu0 %v2996, 28
      %v3140 = vpop.permute.xlu0 %3139
      %3141 = vrot.lane.b32.xlu0 %v3010, 28
      %v3142 = vpop.permute.xlu0 %3141
      %3143 = vrot.lane.b32.xlu0 %v3020, 28
      %v3144 = vpop.permute.xlu0 %3143
      %3145 = vrot.lane.b32.xlu0 %v3034, 28
      %v3146 = vpop.permute.xlu0 %3145
      %3147 = vrot.lane.b32.xlu0 %v3044, 28
      %v3148 = vpop.permute.xlu0 %3147
      %3149 = vrot.lane.b32.xlu0 %v3058, 28
      %v3150 = vpop.permute.xlu0 %3149
      %3151 = vrot.lane.b32.xlu0 %v3068, 28
      %v3152 = vpop.permute.xlu0 %3151
      %3153 = vrot.lane.b32.xlu0 %v3082, 28
      %v3154 = vpop.permute.xlu0 %3153
      %3155 = vrot.lane.b32.xlu0 %v3092, 28
      %v3156 = vpop.permute.xlu0 %3155
      %vm3189 = vcmask 257248
      %3190 = vst.msk [vmem:[#allocation2] sm:$0xf] %vm3189, %v3094
      %3191 = vst.msk [vmem:[#allocation2 + $0x4] sm:$0xf] %vm3189, %v3096
      %3192 = vst.msk [vmem:[#allocation2 + $0x8] sm:$0xf] %vm3189, %v3098
      %3193 = vst.msk [vmem:[#allocation2 + $0xc] sm:$0xf] %vm3189, %v3100
      %3194 = vst.msk [vmem:[#allocation2 + $0x10] sm:$0xf] %vm3189, %v3102
      %3195 = vst.msk [vmem:[#allocation2 + $0x14] sm:$0xf] %vm3189, %v3104
      %3196 = vst.msk [vmem:[#allocation2 + $0x18] sm:$0xf] %vm3189, %v3106
      %3197 = vst.msk [vmem:[#allocation2 + $0x1c] sm:$0xf] %vm3189, %v3108
      %3198 = vst.msk [vmem:[#allocation2 + $0x20] sm:$0xf] %vm3189, %v3110
      %3199 = vst.msk [vmem:[#allocation2 + $0x24] sm:$0xf] %vm3189, %v3112
      %3200 = vst.msk [vmem:[#allocation2 + $0x28] sm:$0xf] %vm3189, %v3114
      %3201 = vst.msk [vmem:[#allocation2 + $0x2c] sm:$0xf] %vm3189, %v3116
      %3202 = vst.msk [vmem:[#allocation2 + $0x30] sm:$0xf] %vm3189, %v3118
      %3203 = vst.msk [vmem:[#allocation2 + $0x34] sm:$0xf] %vm3189, %v3120
      %3204 = vst.msk [vmem:[#allocation2 + $0x38] sm:$0xf] %vm3189, %v3122
      %3205 = vst.msk [vmem:[#allocation2 + $0x3c] sm:$0xf] %vm3189, %v3124
      %3206 = vst.msk [vmem:[#allocation2 + $0x40] sm:$0xf] %vm3189, %v3126
      %3207 = vst.msk [vmem:[#allocation2 + $0x44] sm:$0xf] %vm3189, %v3128
      %3208 = vst.msk [vmem:[#allocation2 + $0x48] sm:$0xf] %vm3189, %v3130
      %3209 = vst.msk [vmem:[#allocation2 + $0x4c] sm:$0xf] %vm3189, %v3132
      %3210 = vst.msk [vmem:[#allocation2 + $0x50] sm:$0xf] %vm3189, %v3134
      %3211 = vst.msk [vmem:[#allocation2 + $0x54] sm:$0xf] %vm3189, %v3136
      %3212 = vst.msk [vmem:[#allocation2 + $0x58] sm:$0xf] %vm3189, %v3138
      %3213 = vst.msk [vmem:[#allocation2 + $0x5c] sm:$0xf] %vm3189, %v3140
      %3214 = vst.msk [vmem:[#allocation2 + $0x60] sm:$0xf] %vm3189, %v3142
      %3215 = vst.msk [vmem:[#allocation2 + $0x64] sm:$0xf] %vm3189, %v3144
      %3216 = vst.msk [vmem:[#allocation2 + $0x68] sm:$0xf] %vm3189, %v3146
      %3217 = vst.msk [vmem:[#allocation2 + $0x6c] sm:$0xf] %vm3189, %v3148
      %3218 = vst.msk [vmem:[#allocation2 + $0x70] sm:$0xf] %vm3189, %v3150
      %3219 = vst.msk [vmem:[#allocation2 + $0x74] sm:$0xf] %vm3189, %v3152
      %3220 = vst.msk [vmem:[#allocation2 + $0x78] sm:$0xf] %vm3189, %v3154
      %3221 = vst.msk [vmem:[#allocation2 + $0x7c] sm:$0xf] %vm3189, %v3156
      %v3222 = vld [vmem:[%s382] sm:$0xe]
      %v3223 = vld [vmem:[%s382 + $0x4] sm:$0xf]
      %v3224 = vld [vmem:[%s382 + $0x8] sm:$0x1]
      %v3225 = vld [vmem:[%s382 + $0xc] sm:$0xe]
      %v3226 = vld [vmem:[%s382 + $0x10] sm:$0xf]
      %v3227 = vld [vmem:[%s382 + $0x14] sm:$0x1]
      %v3228 = vld [vmem:[%s382 + $0x18] sm:$0xe]
      %v3229 = vld [vmem:[%s382 + $0x1c] sm:$0xf]
      %v3230 = vld [vmem:[%s382 + $0x20] sm:$0x1]
      %v3231 = vld [vmem:[%s382 + $0x24] sm:$0xe]
      %v3232 = vld [vmem:[%s382 + $0x28] sm:$0xf]
      %v3233 = vld [vmem:[%s382 + $0x2c] sm:$0x1]
      %v3234 = vld [vmem:[%s382 + $0x30] sm:$0xe]
      %v3235 = vld [vmem:[%s382 + $0x34] sm:$0xf]
      %v3236 = vld [vmem:[%s382 + $0x38] sm:$0x1]
      %v3237 = vld [vmem:[%s382 + $0x3c] sm:$0xe]
      %v3238 = vld [vmem:[%s382 + $0x40] sm:$0xf]
      %v3239 = vld [vmem:[%s382 + $0x44] sm:$0x1]
      %v3240 = vld [vmem:[%s382 + $0x48] sm:$0xe]
      %v3241 = vld [vmem:[%s382 + $0x4c] sm:$0xf]
      %v3242 = vld [vmem:[%s382 + $0x50] sm:$0x1]
      %v3243 = vld [vmem:[%s382 + $0x54] sm:$0xe]
      %v3244 = vld [vmem:[%s382 + $0x58] sm:$0xf]
      %v3245 = vld [vmem:[%s382 + $0x5c] sm:$0x1]
      %v3246 = vld [vmem:[%s382 + $0x60] sm:$0xe]
      %v3247 = vld [vmem:[%s382 + $0x64] sm:$0xf]
      %v3248 = vld [vmem:[%s382 + $0x68] sm:$0x1]
      %v3249 = vld [vmem:[%s382 + $0x6c] sm:$0xe]
      %v3250 = vld [vmem:[%s382 + $0x70] sm:$0xf]
      %v3251 = vld [vmem:[%s382 + $0x74] sm:$0x1]
      %v3252 = vld [vmem:[%s382 + $0x78] sm:$0xe]
      %v3253 = vld [vmem:[%s382 + $0x7c] sm:$0xf]
      %v3254 = vld [vmem:[%s382 + $0x80] sm:$0x1]
      %v3255 = vld [vmem:[%s382 + $0x84] sm:$0xe]
      %v3256 = vld [vmem:[%s382 + $0x88] sm:$0xf]
      %v3257 = vld [vmem:[%s382 + $0x8c] sm:$0x1]
      %v3258 = vld [vmem:[%s382 + $0x90] sm:$0xe]
      %v3259 = vld [vmem:[%s382 + $0x94] sm:$0xf]
      %v3260 = vld [vmem:[%s382 + $0x98] sm:$0x1]
      %v3261 = vld [vmem:[%s382 + $0x9c] sm:$0xe]
      %v3262 = vld [vmem:[%s382 + $0xa0] sm:$0xf]
      %v3263 = vld [vmem:[%s382 + $0xa4] sm:$0x1]
      %v3264 = vld [vmem:[%s382 + $0xa8] sm:$0xe]
      %v3265 = vld [vmem:[%s382 + $0xac] sm:$0xf]
      %v3266 = vld [vmem:[%s382 + $0xb0] sm:$0x1]
      %v3267 = vld [vmem:[%s382 + $0xb4] sm:$0xe]
      %v3268 = vld [vmem:[%s382 + $0xb8] sm:$0xf]
      %v3269 = vld [vmem:[%s382 + $0xbc] sm:$0x1]
      %v3318 = vrot.slane %v3222, 5
      %v3319 = vrot.slane %v3318, 4
      %v3320 = vrot.slane %v3223, 5
      %v3321 = vsel %vm1135, %v3319, %v3320
      %v3322 = vrot.slane %v3320, 4
      %v3323 = vrot.slane %v3224, 5
      %v3324 = vsel %vm1135, %v3322, %v3323
      %v3325 = vrot.slane %v3225, 5
      %v3326 = vrot.slane %v3325, 4
      %v3327 = vrot.slane %v3226, 5
      %v3328 = vsel %vm1135, %v3326, %v3327
      %v3329 = vrot.slane %v3327, 4
      %v3330 = vrot.slane %v3227, 5
      %v3331 = vsel %vm1135, %v3329, %v3330
      %v3332 = vrot.slane %v3228, 5
      %v3333 = vrot.slane %v3332, 4
      %v3334 = vrot.slane %v3229, 5
      %v3335 = vsel %vm1135, %v3333, %v3334
      %v3336 = vrot.slane %v3334, 4
      %v3337 = vrot.slane %v3230, 5
      %v3338 = vsel %vm1135, %v3336, %v3337
      %v3339 = vrot.slane %v3231, 5
      %v3340 = vrot.slane %v3339, 4
      %v3341 = vrot.slane %v3232, 5
      %v3342 = vsel %vm1135, %v3340, %v3341
      %v3343 = vrot.slane %v3341, 4
      %v3344 = vrot.slane %v3233, 5
      %v3345 = vsel %vm1135, %v3343, %v3344
      %v3346 = vrot.slane %v3234, 5
      %v3347 = vrot.slane %v3346, 4
      %v3348 = vrot.slane %v3235, 5
      %v3349 = vsel %vm1135, %v3347, %v3348
      %v3350 = vrot.slane %v3348, 4
      %v3351 = vrot.slane %v3236, 5
      %v3352 = vsel %vm1135, %v3350, %v3351
      %v3353 = vrot.slane %v3237, 5
      %v3354 = vrot.slane %v3353, 4
      %v3355 = vrot.slane %v3238, 5
      %v3356 = vsel %vm1135, %v3354, %v3355
      %v3357 = vrot.slane %v3355, 4
      %v3358 = vrot.slane %v3239, 5
      %v3359 = vsel %vm1135, %v3357, %v3358
      %v3360 = vrot.slane %v3240, 5
      %v3361 = vrot.slane %v3360, 4
      %v3362 = vrot.slane %v3241, 5
      %v3363 = vsel %vm1135, %v3361, %v3362
      %v3364 = vrot.slane %v3362, 4
      %v3365 = vrot.slane %v3242, 5
      %v3366 = vsel %vm1135, %v3364, %v3365
      %v3367 = vrot.slane %v3243, 5
      %v3368 = vrot.slane %v3367, 4
      %v3369 = vrot.slane %v3244, 5
      %v3370 = vsel %vm1135, %v3368, %v3369
      %v3371 = vrot.slane %v3369, 4
      %v3372 = vrot.slane %v3245, 5
      %v3373 = vsel %vm1135, %v3371, %v3372
      %v3374 = vrot.slane %v3246, 5
      %v3375 = vrot.slane %v3374, 4
      %v3376 = vrot.slane %v3247, 5
      %v3377 = vsel %vm1135, %v3375, %v3376
      %v3378 = vrot.slane %v3376, 4
      %v3379 = vrot.slane %v3248, 5
      %v3380 = vsel %vm1135, %v3378, %v3379
      %v3381 = vrot.slane %v3249, 5
      %v3382 = vrot.slane %v3381, 4
      %v3383 = vrot.slane %v3250, 5
      %v3384 = vsel %vm1135, %v3382, %v3383
      %v3385 = vrot.slane %v3383, 4
      %v3386 = vrot.slane %v3251, 5
      %v3387 = vsel %vm1135, %v3385, %v3386
      %v3388 = vrot.slane %v3252, 5
      %v3389 = vrot.slane %v3388, 4
      %v3390 = vrot.slane %v3253, 5
      %v3391 = vsel %vm1135, %v3389, %v3390
      %v3392 = vrot.slane %v3390, 4
      %v3393 = vrot.slane %v3254, 5
      %v3394 = vsel %vm1135, %v3392, %v3393
      %v3395 = vrot.slane %v3255, 5
      %v3396 = vrot.slane %v3395, 4
      %v3397 = vrot.slane %v3256, 5
      %v3398 = vsel %vm1135, %v3396, %v3397
      %v3399 = vrot.slane %v3397, 4
      %v3400 = vrot.slane %v3257, 5
      %v3401 = vsel %vm1135, %v3399, %v3400
      %v3402 = vrot.slane %v3258, 5
      %v3403 = vrot.slane %v3402, 4
      %v3404 = vrot.slane %v3259, 5
      %v3405 = vsel %vm1135, %v3403, %v3404
      %v3406 = vrot.slane %v3404, 4
      %v3407 = vrot.slane %v3260, 5
      %v3408 = vsel %vm1135, %v3406, %v3407
      %v3409 = vrot.slane %v3261, 5
      %v3410 = vrot.slane %v3409, 4
      %v3411 = vrot.slane %v3262, 5
      %v3412 = vsel %vm1135, %v3410, %v3411
      %v3413 = vrot.slane %v3411, 4
      %v3414 = vrot.slane %v3263, 5
      %v3415 = vsel %vm1135, %v3413, %v3414
      %v3416 = vrot.slane %v3264, 5
      %v3417 = vrot.slane %v3416, 4
      %v3418 = vrot.slane %v3265, 5
      %v3419 = vsel %vm1135, %v3417, %v3418
      %v3420 = vrot.slane %v3418, 4
      %v3421 = vrot.slane %v3266, 5
      %v3422 = vsel %vm1135, %v3420, %v3421
      %v3423 = vrot.slane %v3267, 5
      %v3424 = vrot.slane %v3423, 4
      %v3425 = vrot.slane %v3268, 5
      %v3426 = vsel %vm1135, %v3424, %v3425
      %v3427 = vrot.slane %v3425, 4
      %v3428 = vrot.slane %v3269, 5
      %v3429 = vsel %vm1135, %v3427, %v3428
      %3430 = vrot.lane.b32.xlu0 %v3321, 32
      %v3431 = vpop.permute.xlu0 %3430
      %3432 = vrot.lane.b32.xlu0 %v3324, 32
      %v3433 = vpop.permute.xlu0 %3432
      %3434 = vrot.lane.b32.xlu0 %v3328, 32
      %v3435 = vpop.permute.xlu0 %3434
      %3436 = vrot.lane.b32.xlu0 %v3331, 32
      %v3437 = vpop.permute.xlu0 %3436
      %3438 = vrot.lane.b32.xlu0 %v3335, 32
      %v3439 = vpop.permute.xlu0 %3438
      %3440 = vrot.lane.b32.xlu0 %v3338, 32
      %v3441 = vpop.permute.xlu0 %3440
      %3442 = vrot.lane.b32.xlu0 %v3342, 32
      %v3443 = vpop.permute.xlu0 %3442
      %3444 = vrot.lane.b32.xlu0 %v3345, 32
      %v3445 = vpop.permute.xlu0 %3444
      %3446 = vrot.lane.b32.xlu0 %v3349, 32
      %v3447 = vpop.permute.xlu0 %3446
      %3448 = vrot.lane.b32.xlu0 %v3352, 32
      %v3449 = vpop.permute.xlu0 %3448
      %3450 = vrot.lane.b32.xlu0 %v3356, 32
      %v3451 = vpop.permute.xlu0 %3450
      %3452 = vrot.lane.b32.xlu0 %v3359, 32
      %v3453 = vpop.permute.xlu0 %3452
      %3454 = vrot.lane.b32.xlu0 %v3363, 32
      %v3455 = vpop.permute.xlu0 %3454
      %3456 = vrot.lane.b32.xlu0 %v3366, 32
      %v3457 = vpop.permute.xlu0 %3456
      %3458 = vrot.lane.b32.xlu0 %v3370, 32
      %v3459 = vpop.permute.xlu0 %3458
      %3460 = vrot.lane.b32.xlu0 %v3373, 32
      %v3461 = vpop.permute.xlu0 %3460
      %3462 = vrot.lane.b32.xlu0 %v3377, 32
      %v3463 = vpop.permute.xlu0 %3462
      %3464 = vrot.lane.b32.xlu0 %v3380, 32
      %v3465 = vpop.permute.xlu0 %3464
      %3466 = vrot.lane.b32.xlu0 %v3384, 32
      %v3467 = vpop.permute.xlu0 %3466
      %3468 = vrot.lane.b32.xlu0 %v3387, 32
      %v3469 = vpop.permute.xlu0 %3468
      %3470 = vrot.lane.b32.xlu0 %v3391, 32
      %v3471 = vpop.permute.xlu0 %3470
      %3472 = vrot.lane.b32.xlu0 %v3394, 32
      %v3473 = vpop.permute.xlu0 %3472
      %3474 = vrot.lane.b32.xlu0 %v3398, 32
      %v3475 = vpop.permute.xlu0 %3474
      %3476 = vrot.lane.b32.xlu0 %v3401, 32
      %v3477 = vpop.permute.xlu0 %3476
      %3478 = vrot.lane.b32.xlu0 %v3405, 32
      %v3479 = vpop.permute.xlu0 %3478
      %3480 = vrot.lane.b32.xlu0 %v3408, 32
      %v3481 = vpop.permute.xlu0 %3480
      %3482 = vrot.lane.b32.xlu0 %v3412, 32
      %v3483 = vpop.permute.xlu0 %3482
      %3484 = vrot.lane.b32.xlu0 %v3415, 32
      %v3485 = vpop.permute.xlu0 %3484
      %3486 = vrot.lane.b32.xlu0 %v3419, 32
      %v3487 = vpop.permute.xlu0 %3486
      %3488 = vrot.lane.b32.xlu0 %v3422, 32
      %v3489 = vpop.permute.xlu0 %3488
      %3490 = vrot.lane.b32.xlu0 %v3426, 32
      %v3491 = vpop.permute.xlu0 %3490
      %3492 = vrot.lane.b32.xlu0 %v3429, 32
      %v3493 = vpop.permute.xlu0 %3492
      %vm3526 = vcmask 290048
      %3527 = vst.msk [vmem:[#allocation2] sm:$0xf] %vm3526, %v3431
      %3528 = vst.msk [vmem:[#allocation2 + $0x4] sm:$0xf] %vm3526, %v3433
      %3529 = vst.msk [vmem:[#allocation2 + $0x8] sm:$0xf] %vm3526, %v3435
      %3530 = vst.msk [vmem:[#allocation2 + $0xc] sm:$0xf] %vm3526, %v3437
      %3531 = vst.msk [vmem:[#allocation2 + $0x10] sm:$0xf] %vm3526, %v3439
      %3532 = vst.msk [vmem:[#allocation2 + $0x14] sm:$0xf] %vm3526, %v3441
      %3533 = vst.msk [vmem:[#allocation2 + $0x18] sm:$0xf] %vm3526, %v3443
      %3534 = vst.msk [vmem:[#allocation2 + $0x1c] sm:$0xf] %vm3526, %v3445
      %3535 = vst.msk [vmem:[#allocation2 + $0x20] sm:$0xf] %vm3526, %v3447
      %3536 = vst.msk [vmem:[#allocation2 + $0x24] sm:$0xf] %vm3526, %v3449
      %3537 = vst.msk [vmem:[#allocation2 + $0x28] sm:$0xf] %vm3526, %v3451
      %3538 = vst.msk [vmem:[#allocation2 + $0x2c] sm:$0xf] %vm3526, %v3453
      %3539 = vst.msk [vmem:[#allocation2 + $0x30] sm:$0xf] %vm3526, %v3455
      %3540 = vst.msk [vmem:[#allocation2 + $0x34] sm:$0xf] %vm3526, %v3457
      %3541 = vst.msk [vmem:[#allocation2 + $0x38] sm:$0xf] %vm3526, %v3459
      %3542 = vst.msk [vmem:[#allocation2 + $0x3c] sm:$0xf] %vm3526, %v3461
      %3543 = vst.msk [vmem:[#allocation2 + $0x40] sm:$0xf] %vm3526, %v3463
      %3544 = vst.msk [vmem:[#allocation2 + $0x44] sm:$0xf] %vm3526, %v3465
      %3545 = vst.msk [vmem:[#allocation2 + $0x48] sm:$0xf] %vm3526, %v3467
      %3546 = vst.msk [vmem:[#allocation2 + $0x4c] sm:$0xf] %vm3526, %v3469
      %3547 = vst.msk [vmem:[#allocation2 + $0x50] sm:$0xf] %vm3526, %v3471
      %3548 = vst.msk [vmem:[#allocation2 + $0x54] sm:$0xf] %vm3526, %v3473
      %3549 = vst.msk [vmem:[#allocation2 + $0x58] sm:$0xf] %vm3526, %v3475
      %3550 = vst.msk [vmem:[#allocation2 + $0x5c] sm:$0xf] %vm3526, %v3477
      %3551 = vst.msk [vmem:[#allocation2 + $0x60] sm:$0xf] %vm3526, %v3479
      %3552 = vst.msk [vmem:[#allocation2 + $0x64] sm:$0xf] %vm3526, %v3481
      %3553 = vst.msk [vmem:[#allocation2 + $0x68] sm:$0xf] %vm3526, %v3483
      %3554 = vst.msk [vmem:[#allocation2 + $0x6c] sm:$0xf] %vm3526, %v3485
      %3555 = vst.msk [vmem:[#allocation2 + $0x70] sm:$0xf] %vm3526, %v3487
      %3556 = vst.msk [vmem:[#allocation2 + $0x74] sm:$0xf] %vm3526, %v3489
      %3557 = vst.msk [vmem:[#allocation2 + $0x78] sm:$0xf] %vm3526, %v3491
      %3558 = vst.msk [vmem:[#allocation2 + $0x7c] sm:$0xf] %vm3526, %v3493
      %v3559 = vld [vmem:[#allocation2] sm:$0xf]
      %v3560 = vld [vmem:[#allocation2 + $0x4] sm:$0xf]
      %v3561 = vld [vmem:[#allocation2 + $0x8] sm:$0xf]
      %v3562 = vld [vmem:[#allocation2 + $0xc] sm:$0xf]
      %v3563 = vld [vmem:[#allocation2 + $0x10] sm:$0xf]
      %v3564 = vld [vmem:[#allocation2 + $0x14] sm:$0xf]
      %v3565 = vld [vmem:[#allocation2 + $0x18] sm:$0xf]
      %v3566 = vld [vmem:[#allocation2 + $0x1c] sm:$0xf]
      %v3567 = vld [vmem:[#allocation2 + $0x20] sm:$0xf]
      %v3568 = vld [vmem:[#allocation2 + $0x24] sm:$0xf]
      %v3569 = vld [vmem:[#allocation2 + $0x28] sm:$0xf]
      %v3570 = vld [vmem:[#allocation2 + $0x2c] sm:$0xf]
      %v3571 = vld [vmem:[#allocation2 + $0x30] sm:$0xf]
      %v3572 = vld [vmem:[#allocation2 + $0x34] sm:$0xf]
      %v3573 = vld [vmem:[#allocation2 + $0x38] sm:$0xf]
      %v3574 = vld [vmem:[#allocation2 + $0x3c] sm:$0xf]
      %v3575 = vld [vmem:[#allocation2 + $0x40] sm:$0xf]
      %v3576 = vld [vmem:[#allocation2 + $0x44] sm:$0xf]
      %v3577 = vld [vmem:[#allocation2 + $0x48] sm:$0xf]
      %v3578 = vld [vmem:[#allocation2 + $0x4c] sm:$0xf]
      %v3579 = vld [vmem:[#allocation2 + $0x50] sm:$0xf]
      %v3580 = vld [vmem:[#allocation2 + $0x54] sm:$0xf]
      %v3581 = vld [vmem:[#allocation2 + $0x58] sm:$0xf]
      %v3582 = vld [vmem:[#allocation2 + $0x5c] sm:$0xf]
      %v3583 = vld [vmem:[#allocation2 + $0x60] sm:$0xf]
      %v3584 = vld [vmem:[#allocation2 + $0x64] sm:$0xf]
      %v3585 = vld [vmem:[#allocation2 + $0x68] sm:$0xf]
      %v3586 = vld [vmem:[#allocation2 + $0x6c] sm:$0xf]
      %v3587 = vld [vmem:[#allocation2 + $0x70] sm:$0xf]
      %v3588 = vld [vmem:[#allocation2 + $0x74] sm:$0xf]
      %v3589 = vld [vmem:[#allocation2 + $0x78] sm:$0xf]
      %v3590 = vld [vmem:[#allocation2 + $0x7c] sm:$0xf]
      %v3591 = vld [vmem:[%s3] sm:$0xf]
      %v3592 = vld [vmem:[%s3 + $0x4] sm:$0xf]
      %v3593 = vld [vmem:[%s3 + $0x8] sm:$0xf]
      %v3594 = vld [vmem:[%s3 + $0xc] sm:$0xf]
      %v3595 = vld [vmem:[%s3 + $0x10] sm:$0x3]
      %v3628 = vunpack.c.l.b16 %v3559
      %v3629 = vunpack.c.l.b16 %v3560
      %v3630 = vunpack.c.l.b16 %v3561
      %v3631 = vunpack.c.l.b16 %v3562
      %v3632 = vunpack.c.l.b16 %v3563
      %v3633 = vunpack.c.l.b16 %v3564
      %v3634 = vunpack.c.l.b16 %v3565
      %v3635 = vunpack.c.l.b16 %v3566
      %v3636 = vunpack.c.l.b16 %v3567
      %v3637 = vunpack.c.l.b16 %v3568
      %v3638 = vunpack.c.l.b16 %v3569
      %v3639 = vunpack.c.l.b16 %v3570
      %v3640 = vunpack.c.l.b16 %v3571
      %v3641 = vunpack.c.l.b16 %v3572
      %v3642 = vunpack.c.l.b16 %v3573
      %v3643 = vunpack.c.l.b16 %v3574
      %v3644 = vunpack.c.l.b16 %v3575
      %v3645 = vunpack.c.l.b16 %v3576
      %v3646 = vunpack.c.l.b16 %v3577
      %v3647 = vunpack.c.l.b16 %v3578
      %v3648 = vunpack.c.l.b16 %v3579
      %v3649 = vunpack.c.l.b16 %v3580
      %v3650 = vunpack.c.l.b16 %v3581
      %v3651 = vunpack.c.l.b16 %v3582
      %v3652 = vunpack.c.l.b16 %v3583
      %v3653 = vunpack.c.l.b16 %v3584
      %v3654 = vunpack.c.l.b16 %v3585
      %v3655 = vunpack.c.l.b16 %v3586
      %v3656 = vunpack.c.l.b16 %v3587
      %v3657 = vunpack.c.l.b16 %v3588
      %v3658 = vunpack.c.l.b16 %v3589
      %v3659 = vunpack.c.l.b16 %v3590
      %v3660 = vpack.c.b16 %v3629, %v3628
      %v3661 = vpack.c.b16 %v3631, %v3630
      %v3662 = vpack.c.b16 %v3633, %v3632
      %v3663 = vpack.c.b16 %v3635, %v3634
      %v3664 = vpack.c.b16 %v3637, %v3636
      %v3665 = vpack.c.b16 %v3639, %v3638
      %v3666 = vpack.c.b16 %v3641, %v3640
      %v3667 = vpack.c.b16 %v3643, %v3642
      %v3668 = vpack.c.b16 %v3645, %v3644
      %v3669 = vpack.c.b16 %v3647, %v3646
      %v3670 = vpack.c.b16 %v3649, %v3648
      %v3671 = vpack.c.b16 %v3651, %v3650
      %v3672 = vpack.c.b16 %v3653, %v3652
      %v3673 = vpack.c.b16 %v3655, %v3654
      %v3674 = vpack.c.b16 %v3657, %v3656
      %v3675 = vpack.c.b16 %v3659, %v3658
      %v3681 = vunpack.c.l.b16 %v3591
      %v3682 = vunpack.c.l.b16 %v3592
      %v3683 = vunpack.c.l.b16 %v3593
      %v3684 = vunpack.c.l.b16 %v3594
      %v3685 = vunpack.c.l.b16 %v3595
      %v3686 = vpack.c.b16 %v3682, %v3681
      %v3687 = vpack.c.b16 %v3684, %v3683
      %v3688 = vpack.c.b16 %v3685, %v3685
      %vm3691 = vcmask 293888
      %v3693 = vsel %vm3691, %v3660, 0
      %v3696 = vsel %vm3691, %v3661, 0
      %v3699 = vsel %vm3691, %v3662, 0
      %v3702 = vsel %vm3691, %v3663, 0
      %v3705 = vsel %vm3691, %v3664, 0
      %v3708 = vsel %vm3691, %v3665, 0
      %v3711 = vsel %vm3691, %v3666, 0
      %v3714 = vsel %vm3691, %v3667, 0
      %v3717 = vsel %vm3691, %v3668, 0
      %v3720 = vsel %vm3691, %v3669, 0
      %v3723 = vsel %vm3691, %v3670, 0
      %v3726 = vsel %vm3691, %v3671, 0
      %v3729 = vsel %vm3691, %v3672, 0
      %v3732 = vsel %vm3691, %v3673, 0
      %v3735 = vsel %vm3691, %v3674, 0
      %v3738 = vsel %vm3691, %v3675, 0
      %vm3740 = vcmask 1041408
      %v3742 = vsel %vm3740, %v3688, 0
      %3744 = vmatprep.subr.bf16.mxu0 0
      %3745 = vmatpush1.bf16.msra.mxu0 0
      %3746 = vmatprep.subr.bf16.mxu0 0
      %3747 = vmatpush1.bf16.msra.mxu0 0
      %3748 = vmatprep.subr.bf16.mxu0 0
      %3749 = vmatpush1.bf16.msra.mxu0 0
      %3750 = vmatprep.subr.bf16.mxu0 0
      %3751 = vmatpush1.bf16.msra.mxu0 0
      %3752 = vmatprep.subr.bf16.mxu0 0
      %3753 = vmatpush1.bf16.msra.mxu0 0
      %3754 = vmatprep.subr.bf16.mxu0 0
      %3755 = vmatpush1.bf16.msra.mxu0 %v3742
      %3756 = vmatprep.subr.bf16.mxu0 0
      %3757 = vmatpush1.bf16.msra.mxu0 %v3687
      %3758 = vmatprep.subr.bf16.mxu0 0
      %3759 = vmatpush1.bf16.msra.mxu0 %v3686
      %3760 = vmatprep.subr.bf16.mxu0 0
      %3761 = vmatpush2.bf16.msra.mxu0 0
      %3762 = vmatprep.subr.bf16.mxu0 0
      %3763 = vmatpush2.bf16.msra.mxu0 0
      %3764 = vmatprep.subr.bf16.mxu0 0
      %3765 = vmatpush2.bf16.msra.mxu0 0
      %3766 = vmatprep.subr.bf16.mxu0 0
      %3767 = vmatpush2.bf16.msra.mxu0 0
      %3768 = vmatprep.subr.bf16.mxu0 0
      %3769 = vmatpush2.bf16.msra.mxu0 0
      %3770 = vmatprep.subr.bf16.mxu0 0
      %3771 = vmatpush2.bf16.msra.mxu0 0
      %3772 = vmatprep.subr.bf16.mxu0 0
      %3773 = vmatpush2.bf16.msra.mxu0 0
      %3774 = vmatprep.subr.bf16.mxu0 0
      %3775 = vmatpush2.bf16.msra.mxu0 0
      %3776 = vmatprep.mubr.bf16.mxu0 0
      %3777 = vmatmul.mubr.bf16.gmra.mxu0 %v3693
      %v3778 = vpop.f32.mrf.mxu0
      %v3779 = vadd.f32 0.0, %v3778
      %v3780 = vpop.f32.mrf.mxu0
      %v3781 = vpop.f32.mrf.mxu0
      %v3782 = vadd.f32 0.0, %v3781
      %v3783 = vpop.f32.mrf.mxu0
      %3784 = vmatprep.mubr.bf16.mxu0 0
      %3785 = vmatmul.mubr.bf16.gmra.mxu0 %v3696
      %v3786 = vpop.f32.mrf.mxu0
      %v3787 = vadd.f32 0.0, %v3786
      %v3788 = vpop.f32.mrf.mxu0
      %v3789 = vpop.f32.mrf.mxu0
      %v3790 = vadd.f32 0.0, %v3789
      %v3791 = vpop.f32.mrf.mxu0
      %3792 = vmatprep.mubr.bf16.mxu0 0
      %3793 = vmatmul.mubr.bf16.gmra.mxu0 %v3699
      %v3794 = vpop.f32.mrf.mxu0
      %v3795 = vadd.f32 0.0, %v3794
      %v3796 = vpop.f32.mrf.mxu0
      %v3797 = vpop.f32.mrf.mxu0
      %v3798 = vadd.f32 0.0, %v3797
      %v3799 = vpop.f32.mrf.mxu0
      %3800 = vmatprep.mubr.bf16.mxu0 0
      %3801 = vmatmul.mubr.bf16.gmra.mxu0 %v3702
      %v3802 = vpop.f32.mrf.mxu0
      %v3803 = vadd.f32 0.0, %v3802
      %v3804 = vpop.f32.mrf.mxu0
      %v3805 = vpop.f32.mrf.mxu0
      %v3806 = vadd.f32 0.0, %v3805
      %v3807 = vpop.f32.mrf.mxu0
      %3808 = vmatprep.mubr.bf16.mxu0 0
      %3809 = vmatmul.mubr.bf16.gmra.mxu0 %v3705
      %v3810 = vpop.f32.mrf.mxu0
      %v3811 = vadd.f32 0.0, %v3810
      %v3812 = vpop.f32.mrf.mxu0
      %v3813 = vpop.f32.mrf.mxu0
      %v3814 = vadd.f32 0.0, %v3813
      %v3815 = vpop.f32.mrf.mxu0
      %3816 = vmatprep.mubr.bf16.mxu0 0
      %3817 = vmatmul.mubr.bf16.gmra.mxu0 %v3708
      %v3818 = vpop.f32.mrf.mxu0
      %v3819 = vadd.f32 0.0, %v3818
      %v3820 = vpop.f32.mrf.mxu0
      %v3821 = vpop.f32.mrf.mxu0
      %v3822 = vadd.f32 0.0, %v3821
      %v3823 = vpop.f32.mrf.mxu0
      %3824 = vmatprep.mubr.bf16.mxu0 0
      %3825 = vmatmul.mubr.bf16.gmra.mxu0 %v3711
      %v3826 = vpop.f32.mrf.mxu0
      %v3827 = vadd.f32 0.0, %v3826
      %v3828 = vpop.f32.mrf.mxu0
      %v3829 = vpop.f32.mrf.mxu0
      %v3830 = vadd.f32 0.0, %v3829
      %v3831 = vpop.f32.mrf.mxu0
      %3832 = vmatprep.mubr.bf16.mxu0 0
      %3833 = vmatmul.mubr.bf16.gmra.mxu0 %v3714
      %v3834 = vpop.f32.mrf.mxu0
      %v3835 = vadd.f32 0.0, %v3834
      %v3836 = vpop.f32.mrf.mxu0
      %v3837 = vpop.f32.mrf.mxu0
      %v3838 = vadd.f32 0.0, %v3837
      %v3839 = vpop.f32.mrf.mxu0
      %3840 = vmatprep.mubr.bf16.mxu0 0
      %3841 = vmatmul.mubr.bf16.gmra.mxu0 %v3717
      %v3842 = vpop.f32.mrf.mxu0
      %v3843 = vadd.f32 0.0, %v3842
      %v3844 = vpop.f32.mrf.mxu0
      %v3845 = vpop.f32.mrf.mxu0
      %v3846 = vadd.f32 0.0, %v3845
      %v3847 = vpop.f32.mrf.mxu0
      %3848 = vmatprep.mubr.bf16.mxu0 0
      %3849 = vmatmul.mubr.bf16.gmra.mxu0 %v3720
      %v3850 = vpop.f32.mrf.mxu0
      %v3851 = vadd.f32 0.0, %v3850
      %v3852 = vpop.f32.mrf.mxu0
      %v3853 = vpop.f32.mrf.mxu0
      %v3854 = vadd.f32 0.0, %v3853
      %v3855 = vpop.f32.mrf.mxu0
      %3856 = vmatprep.mubr.bf16.mxu0 0
      %3857 = vmatmul.mubr.bf16.gmra.mxu0 %v3723
      %v3858 = vpop.f32.mrf.mxu0
      %v3859 = vadd.f32 0.0, %v3858
      %v3860 = vpop.f32.mrf.mxu0
      %v3861 = vpop.f32.mrf.mxu0
      %v3862 = vadd.f32 0.0, %v3861
      %v3863 = vpop.f32.mrf.mxu0
      %3864 = vmatprep.mubr.bf16.mxu0 0
      %3865 = vmatmul.mubr.bf16.gmra.mxu0 %v3726
      %v3866 = vpop.f32.mrf.mxu0
      %v3867 = vadd.f32 0.0, %v3866
      %v3868 = vpop.f32.mrf.mxu0
      %v3869 = vpop.f32.mrf.mxu0
      %v3870 = vadd.f32 0.0, %v3869
      %v3871 = vpop.f32.mrf.mxu0
      %3872 = vmatprep.mubr.bf16.mxu0 0
      %3873 = vmatmul.mubr.bf16.gmra.mxu0 %v3729
      %v3874 = vpop.f32.mrf.mxu0
      %v3875 = vadd.f32 0.0, %v3874
      %v3876 = vpop.f32.mrf.mxu0
      %v3877 = vpop.f32.mrf.mxu0
      %v3878 = vadd.f32 0.0, %v3877
      %v3879 = vpop.f32.mrf.mxu0
      %3880 = vmatprep.mubr.bf16.mxu0 0
      %3881 = vmatmul.mubr.bf16.gmra.mxu0 %v3732
      %v3882 = vpop.f32.mrf.mxu0
      %v3883 = vadd.f32 0.0, %v3882
      %v3884 = vpop.f32.mrf.mxu0
      %v3885 = vpop.f32.mrf.mxu0
      %v3886 = vadd.f32 0.0, %v3885
      %v3887 = vpop.f32.mrf.mxu0
      %3888 = vmatprep.mubr.bf16.mxu0 0
      %3889 = vmatmul.mubr.bf16.gmra.mxu0 %v3735
      %v3890 = vpop.f32.mrf.mxu0
      %v3891 = vadd.f32 0.0, %v3890
      %v3892 = vpop.f32.mrf.mxu0
      %v3893 = vpop.f32.mrf.mxu0
      %v3894 = vadd.f32 0.0, %v3893
      %v3895 = vpop.f32.mrf.mxu0
      %3896 = vmatprep.mubr.bf16.mxu0 0
      %3897 = vmatmul.mubr.bf16.gmra.mxu0 %v3738
      %v3898 = vpop.f32.mrf.mxu0
      %v3899 = vadd.f32 0.0, %v3898
      %v3900 = vpop.f32.mrf.mxu0
      %v3901 = vpop.f32.mrf.mxu0
      %v3902 = vadd.f32 0.0, %v3901
      %v3903 = vpop.f32.mrf.mxu0
      %3904 = vdwg.mxu0
      %v3905 = vpack.c.bf16 %v3782, %v3779
      %v3906 = vpack.c.bf16 %v3790, %v3787
      %v3907 = vpack.c.bf16 %v3798, %v3795
      %v3908 = vpack.c.bf16 %v3806, %v3803
      %v3909 = vpack.c.bf16 %v3814, %v3811
      %v3910 = vpack.c.bf16 %v3822, %v3819
      %v3911 = vpack.c.bf16 %v3830, %v3827
      %v3912 = vpack.c.bf16 %v3838, %v3835
      %v3913 = vpack.c.bf16 %v3846, %v3843
      %v3914 = vpack.c.bf16 %v3854, %v3851
      %v3915 = vpack.c.bf16 %v3862, %v3859
      %v3916 = vpack.c.bf16 %v3870, %v3867
      %v3917 = vpack.c.bf16 %v3878, %v3875
      %v3918 = vpack.c.bf16 %v3886, %v3883
      %v3919 = vpack.c.bf16 %v3894, %v3891
      %v3920 = vpack.c.bf16 %v3902, %v3899
      %v3937 = vunpack.c.l.b16 %v3905
      %v3938 = vunpack.c.h.b16 %v3905
      %v3939 = vunpack.c.l.b16 %v3906
      %v3940 = vunpack.c.h.b16 %v3906
      %v3941 = vunpack.c.l.b16 %v3907
      %v3942 = vunpack.c.h.b16 %v3907
      %v3943 = vunpack.c.l.b16 %v3908
      %v3944 = vunpack.c.h.b16 %v3908
      %v3945 = vunpack.c.l.b16 %v3909
      %v3946 = vunpack.c.h.b16 %v3909
      %v3947 = vunpack.c.l.b16 %v3910
      %v3948 = vunpack.c.h.b16 %v3910
      %v3949 = vunpack.c.l.b16 %v3911
      %v3950 = vunpack.c.h.b16 %v3911
      %v3951 = vunpack.c.l.b16 %v3912
      %v3952 = vunpack.c.h.b16 %v3912
      %v3953 = vunpack.c.l.b16 %v3913
      %v3954 = vunpack.c.h.b16 %v3913
      %v3955 = vunpack.c.l.b16 %v3914
      %v3956 = vunpack.c.h.b16 %v3914
      %v3957 = vunpack.c.l.b16 %v3915
      %v3958 = vunpack.c.h.b16 %v3915
      %v3959 = vunpack.c.l.b16 %v3916
      %v3960 = vunpack.c.h.b16 %v3916
      %v3961 = vunpack.c.l.b16 %v3917
      %v3962 = vunpack.c.h.b16 %v3917
      %v3963 = vunpack.c.l.b16 %v3918
      %v3964 = vunpack.c.h.b16 %v3918
      %v3965 = vunpack.c.l.b16 %v3919
      %v3966 = vunpack.c.h.b16 %v3919
      %v3967 = vunpack.c.l.b16 %v3920
      %v3968 = vunpack.c.h.b16 %v3920
      %v3969 = vpack.c.b16 %v3937, %v3937
      %v3970 = vpack.c.b16 %v3938, %v3938
      %v3971 = vpack.c.b16 %v3939, %v3939
      %v3972 = vpack.c.b16 %v3940, %v3940
      %v3973 = vpack.c.b16 %v3941, %v3941
      %v3974 = vpack.c.b16 %v3942, %v3942
      %v3975 = vpack.c.b16 %v3943, %v3943
      %v3976 = vpack.c.b16 %v3944, %v3944
      %v3977 = vpack.c.b16 %v3945, %v3945
      %v3978 = vpack.c.b16 %v3946, %v3946
      %v3979 = vpack.c.b16 %v3947, %v3947
      %v3980 = vpack.c.b16 %v3948, %v3948
      %v3981 = vpack.c.b16 %v3949, %v3949
      %v3982 = vpack.c.b16 %v3950, %v3950
      %v3983 = vpack.c.b16 %v3951, %v3951
      %v3984 = vpack.c.b16 %v3952, %v3952
      %v3985 = vpack.c.b16 %v3953, %v3953
      %v3986 = vpack.c.b16 %v3954, %v3954
      %v3987 = vpack.c.b16 %v3955, %v3955
      %v3988 = vpack.c.b16 %v3956, %v3956
      %v3989 = vpack.c.b16 %v3957, %v3957
      %v3990 = vpack.c.b16 %v3958, %v3958
      %v3991 = vpack.c.b16 %v3959, %v3959
      %v3992 = vpack.c.b16 %v3960, %v3960
      %v3993 = vpack.c.b16 %v3961, %v3961
      %v3994 = vpack.c.b16 %v3962, %v3962
      %v3995 = vpack.c.b16 %v3963, %v3963
      %v3996 = vpack.c.b16 %v3964, %v3964
      %v3997 = vpack.c.b16 %v3965, %v3965
      %v3998 = vpack.c.b16 %v3966, %v3966
      %v3999 = vpack.c.b16 %v3967, %v3967
      %v4000 = vpack.c.b16 %v3968, %v3968
      %4033 = vst [vmem:[%s393] sm:$0xf] %v3969
      %4034 = vst [vmem:[%s393 + $0x4] sm:$0xf] %v3970
      %4035 = vst [vmem:[%s393 + $0x8] sm:$0xf] %v3971
      %4036 = vst [vmem:[%s393 + $0xc] sm:$0xf] %v3972
      %4037 = vst [vmem:[%s393 + $0x10] sm:$0xf] %v3973
      %4038 = vst [vmem:[%s393 + $0x14] sm:$0xf] %v3974
      %4039 = vst [vmem:[%s393 + $0x18] sm:$0xf] %v3975
      %4040 = vst [vmem:[%s393 + $0x1c] sm:$0xf] %v3976
      %4041 = vst [vmem:[%s393 + $0x20] sm:$0xf] %v3977
      %4042 = vst [vmem:[%s393 + $0x24] sm:$0xf] %v3978
      %4043 = vst [vmem:[%s393 + $0x28] sm:$0xf] %v3979
      %4044 = vst [vmem:[%s393 + $0x2c] sm:$0xf] %v3980
      %4045 = vst [vmem:[%s393 + $0x30] sm:$0xf] %v3981
      %4046 = vst [vmem:[%s393 + $0x34] sm:$0xf] %v3982
      %4047 = vst [vmem:[%s393 + $0x38] sm:$0xf] %v3983
      %4048 = vst [vmem:[%s393 + $0x3c] sm:$0xf] %v3984
      %4049 = vst [vmem:[%s393 + $0x40] sm:$0xf] %v3985
      %4050 = vst [vmem:[%s393 + $0x44] sm:$0xf] %v3986
      %4051 = vst [vmem:[%s393 + $0x48] sm:$0xf] %v3987
      %4052 = vst [vmem:[%s393 + $0x4c] sm:$0xf] %v3988
      %4053 = vst [vmem:[%s393 + $0x50] sm:$0xf] %v3989
      %4054 = vst [vmem:[%s393 + $0x54] sm:$0xf] %v3990
      %4055 = vst [vmem:[%s393 + $0x58] sm:$0xf] %v3991
      %4056 = vst [vmem:[%s393 + $0x5c] sm:$0xf] %v3992
      %4057 = vst [vmem:[%s393 + $0x60] sm:$0xf] %v3993
      %4058 = vst [vmem:[%s393 + $0x64] sm:$0xf] %v3994
      %4059 = vst [vmem:[%s393 + $0x68] sm:$0xf] %v3995
      %4060 = vst [vmem:[%s393 + $0x6c] sm:$0xf] %v3996
      %4061 = vst [vmem:[%s393 + $0x70] sm:$0xf] %v3997
      %4062 = vst [vmem:[%s393 + $0x74] sm:$0xf] %v3998
      %4063 = vst [vmem:[%s393 + $0x78] sm:$0xf] %v3999
      %4064 = vst [vmem:[%s393 + $0x7c] sm:$0xf] %v4000
      %v4065 = vadd.f32 %v3779, %v3782
      %v4066 = vadd.f32 %v4065, %v3787
      %v4067 = vadd.f32 %v4066, %v3790
      %v4068 = vadd.f32 %v4067, %v3795
      %v4069 = vadd.f32 %v4068, %v3798
      %v4070 = vadd.f32 %v4069, %v3803
      %v4071 = vadd.f32 %v4070, %v3806
      %v4072 = vadd.f32 %v4071, %v3811
      %v4073 = vadd.f32 %v4072, %v3814
      %v4074 = vadd.f32 %v4073, %v3819
      %v4075 = vadd.f32 %v4074, %v3822
      %v4076 = vadd.f32 %v4075, %v3827
      %v4077 = vadd.f32 %v4076, %v3830
      %v4078 = vadd.f32 %v4077, %v3835
      %v4079 = vadd.f32 %v4078, %v3838
      %v4080 = vadd.f32 %v4079, %v3843
      %v4081 = vadd.f32 %v4080, %v3846
      %v4082 = vadd.f32 %v4081, %v3851
      %v4083 = vadd.f32 %v4082, %v3854
      %v4084 = vadd.f32 %v4083, %v3859
      %v4085 = vadd.f32 %v4084, %v3862
      %v4086 = vadd.f32 %v4085, %v3867
      %v4087 = vadd.f32 %v4086, %v3870
      %v4088 = vadd.f32 %v4087, %v3875
      %v4089 = vadd.f32 %v4088, %v3878
      %v4090 = vadd.f32 %v4089, %v3883
      %v4091 = vadd.f32 %v4090, %v3886
      %v4092 = vadd.f32 %v4091, %v3891
      %v4093 = vadd.f32 %v4092, %v3894
      %v4094 = vadd.f32 %v4093, %v3899
      %v4095 = vadd.f32 %v4094, %v3902
      %v4096 = vrot.slane %v4095, 4
      %v4097 = vadd.f32 %v4095, %v4096
      %v4098 = vrot.slane %v4097, 2
      %v4099 = vadd.f32 %v4097, %v4098
      %v4100 = vrot.slane %v4099, 1
      %v4101 = vadd.f32 %v4099, %v4100
      %4102 = vst [vmem:[%s400] sm:$0x1] %v4101
      %v4103 = vmul.f32 %v3779, %v3779
      %v4104 = vmul.f32 %v3782, %v3782
      %v4105 = vmul.f32 %v3787, %v3787
      %v4106 = vmul.f32 %v3790, %v3790
      %v4107 = vmul.f32 %v3795, %v3795
      %v4108 = vmul.f32 %v3798, %v3798
      %v4109 = vmul.f32 %v3803, %v3803
      %v4110 = vmul.f32 %v3806, %v3806
      %v4111 = vmul.f32 %v3811, %v3811
      %v4112 = vmul.f32 %v3814, %v3814
      %v4113 = vmul.f32 %v3819, %v3819
      %v4114 = vmul.f32 %v3822, %v3822
      %v4115 = vmul.f32 %v3827, %v3827
      %v4116 = vmul.f32 %v3830, %v3830
      %v4117 = vmul.f32 %v3835, %v3835
      %v4118 = vmul.f32 %v3838, %v3838
      %v4119 = vmul.f32 %v3843, %v3843
      %v4120 = vmul.f32 %v3846, %v3846
      %v4121 = vmul.f32 %v3851, %v3851
      %v4122 = vmul.f32 %v3854, %v3854
      %v4123 = vmul.f32 %v3859, %v3859
      %v4124 = vmul.f32 %v3862, %v3862
      %v4125 = vmul.f32 %v3867, %v3867
      %v4126 = vmul.f32 %v3870, %v3870
      %v4127 = vmul.f32 %v3875, %v3875
      %v4128 = vmul.f32 %v3878, %v3878
      %v4129 = vmul.f32 %v3883, %v3883
      %v4130 = vmul.f32 %v3886, %v3886
      %v4131 = vmul.f32 %v3891, %v3891
      %v4132 = vmul.f32 %v3894, %v3894
      %v4133 = vmul.f32 %v3899, %v3899
      %v4134 = vmul.f32 %v3902, %v3902
      %v4135 = vadd.f32 %v4103, %v4104
      %v4136 = vadd.f32 %v4135, %v4105
      %v4137 = vadd.f32 %v4136, %v4106
      %v4138 = vadd.f32 %v4137, %v4107
      %v4139 = vadd.f32 %v4138, %v4108
      %v4140 = vadd.f32 %v4139, %v4109
      %v4141 = vadd.f32 %v4140, %v4110
      %v4142 = vadd.f32 %v4141, %v4111
      %v4143 = vadd.f32 %v4142, %v4112
      %v4144 = vadd.f32 %v4143, %v4113
      %v4145 = vadd.f32 %v4144, %v4114
      %v4146 = vadd.f32 %v4145, %v4115
      %v4147 = vadd.f32 %v4146, %v4116
      %v4148 = vadd.f32 %v4147, %v4117
      %v4149 = vadd.f32 %v4148, %v4118
      %v4150 = vadd.f32 %v4149, %v4119
      %v4151 = vadd.f32 %v4150, %v4120
      %v4152 = vadd.f32 %v4151, %v4121
      %v4153 = vadd.f32 %v4152, %v4122
      %v4154 = vadd.f32 %v4153, %v4123
      %v4155 = vadd.f32 %v4154, %v4124
      %v4156 = vadd.f32 %v4155, %v4125
      %v4157 = vadd.f32 %v4156, %v4126
      %v4158 = vadd.f32 %v4157, %v4127
      %v4159 = vadd.f32 %v4158, %v4128
      %v4160 = vadd.f32 %v4159, %v4129
      %v4161 = vadd.f32 %v4160, %v4130
      %v4162 = vadd.f32 %v4161, %v4131
      %v4163 = vadd.f32 %v4162, %v4132
      %v4164 = vadd.f32 %v4163, %v4133
      %v4165 = vadd.f32 %v4164, %v4134
      %v4166 = vrot.slane %v4165, 4
      %v4167 = vadd.f32 %v4165, %v4166
      %v4168 = vrot.slane %v4167, 2
      %v4169 = vadd.f32 %v4167, %v4168
      %v4170 = vrot.slane %v4169, 1
      %v4171 = vadd.f32 %v4169, %v4170
      %4172 = vst [vmem:[%s406] sm:$0x1] %v4171
      %s4173 = smul.u32 16, %s23
      %p4174 = scmp.lt.s32.totalorder %s22, 1
      %s4175 = scalar_select %p4174, %s22, 1
      %p4176 = scmp.lt.s32.totalorder %s4173, 15
      %s4177 = scalar_select %p4176, %s4173, 15
      %s4178 = smul.addr %s4177, 2
      %s4179 = smul.addr %s4175, 32
      %s4180 = sadd.s32 %s4178, %s4179
      %s4181 = smul.addr %s4180, 4
      %s4182 = scalar_lea.vmem %s4, %s4181
      %p4183 = scmp.lt.s32.totalorder %s22, 1
      %s4184 = scalar_select %p4183, %s22, 1
      %p4185 = scmp.lt.s32.totalorder %s23, 0
      %s4186 = scalar_select %p4185, %s23, 0
      %s4187 = sadd.s32 %s4186, %s4184
      %s4188 = scalar_lea.vmem %s5, %s4187
      %p4189 = scmp.lt.s32.totalorder %s22, 1
      %s4190 = scalar_select %p4189, %s22, 1
      %p4191 = scmp.lt.s32.totalorder %s23, 0
      %s4192 = scalar_select %p4191, %s23, 0
      %s4193 = sadd.s32 %s4192, %s4190
      %s4194 = scalar_lea.vmem %s6, %s4193
      // Predicated region
      $region37: #{basic_conv_forward.2} parent=35 // pred_check
        %p4195 = pneg %p155
      $region38: #{basic_conv_forward.2} parent=35 // pred_check_branch
        %4197 = sbr.rel (%p4195) target = $region40
      $region39: #{basic_conv_forward.2} parent=35 // pred_region
        %s4198 = smul.u32 16, %s23
      $region40: #{basic_conv_forward.2} parent=35 // pred_fallthru
        _
      // Predicated region
      $region41: #{basic_conv_forward.2} parent=35 // pred_check
        %p4199 = pneg %p183
      $region42: #{basic_conv_forward.2} parent=35 // pred_check_branch
        %4201 = sbr.rel (%p4199) target = $region44
      $region43: #{basic_conv_forward.2} parent=35 // pred_region
        _
      $region44: #{basic_conv_forward.2} parent=35 // pred_fallthru
        _
      // Predicated region
      $region45: #{basic_conv_forward.2} parent=35 // pred_check
        %p4202 = pneg %p211
      $region46: #{basic_conv_forward.2} parent=35 // pred_check_branch
        %4204 = sbr.rel (%p4202) target = $region48
      $region47: #{basic_conv_forward.2} parent=35 // pred_region
        _
      $region48: #{basic_conv_forward.2} parent=35 // pred_fallthru
        _
    $region36: #{basic_conv_forward.2} parent=5 // pred_fallthru
      _
    %p4205 = scmp.le.s32.totalorder 2, %s13
    // Predicated region
    $region49: #{basic_conv_forward.2} parent=5 // pred_check
      %p4206 = pneg %p4205
    $region50: #{basic_conv_forward.2} parent=5 // pred_check_branch
      %4208 = sbr.rel (%p4206) target = $region52
    $region51: #{basic_conv_forward.2} parent=5 // pred_region
      %s4209 = ssub.s32 %s13, 2
      // Predicated region
      $region53: #{basic_conv_forward.2} parent=51 // pred_check
        %p4210 = pneg %p161
      $region54: #{basic_conv_forward.2} parent=51 // pred_check_branch
        %4212 = sbr.rel (%p4210) target = $region56
      $region55: #{basic_conv_forward.2} parent=51 // pred_region
        %s4213 = smul.u32 16, %s25
        %p4214 = scmp.lt.s32.totalorder %s24, 1
        %s4215 = scalar_select %p4214, %s24, 1
        %p4216 = scmp.lt.s32.totalorder %s4213, 15
        %s4217 = scalar_select %p4216, %s4213, 15
        %s4218 = smul.addr %s4217, 2
        %s4219 = smul.addr %s4215, 32
        %s4220 = sadd.s32 %s4218, %s4219
        %s4221 = smul.addr %s4220, 4
        %s4222 = scalar_lea.vmem %s4, %s4221
      $region56: #{basic_conv_forward.2} parent=51 // pred_fallthru
        _
      // Predicated region
      $region57: #{basic_conv_forward.2} parent=51 // pred_check
        %p4223 = pneg %p189
      $region58: #{basic_conv_forward.2} parent=51 // pred_check_branch
        %4225 = sbr.rel (%p4223) target = $region60
      $region59: #{basic_conv_forward.2} parent=51 // pred_region
        %p4226 = scmp.lt.s32.totalorder %s24, 1
        %s4227 = scalar_select %p4226, %s24, 1
        %p4228 = scmp.lt.s32.totalorder %s25, 0
        %s4229 = scalar_select %p4228, %s25, 0
        %s4230 = sadd.s32 %s4229, %s4227
        %s4231 = scalar_lea.vmem %s5, %s4230
      $region60: #{basic_conv_forward.2} parent=51 // pred_fallthru
        _
      // Predicated region
      $region61: #{basic_conv_forward.2} parent=51 // pred_check
        %p4232 = pneg %p217
      $region62: #{basic_conv_forward.2} parent=51 // pred_check_branch
        %4234 = sbr.rel (%p4232) target = $region64
      $region63: #{basic_conv_forward.2} parent=51 // pred_region
        %p4235 = scmp.lt.s32.totalorder %s24, 1
        %s4236 = scalar_select %p4235, %s24, 1
        %p4237 = scmp.lt.s32.totalorder %s25, 0
        %s4238 = scalar_select %p4237, %s25, 0
        %s4239 = sadd.s32 %s4238, %s4236
        %s4240 = scalar_lea.vmem %s6, %s4239
      $region64: #{basic_conv_forward.2} parent=51 // pred_fallthru
        _
    $region52: #{basic_conv_forward.2} parent=5 // pred_fallthru
      _
  $region6: #{basic_conv_forward.2} parent=0 // loop_footer
    %s17 = sadd.s32 1, %s13
  $region7: #{basic_conv_forward.2} parent=0 // loop_footer_branch
    %12 = sbr.rel target = $region3
  $region8: #{basic_conv_forward.2} parent=0 // loop_exit
    _

</llo_original>
